<compile_context>
chip_gen: v7x
topology: tpu7x:2x2x1
jax: 0.10.0
libtpu: 0.0.40
codegen_flags: <defaults>
</compile_context>

<pallas_src>
import functools
import math

import jax
import jax.numpy as jnp
from jax.experimental import pallas as pl
from jax.experimental.pallas import tpu as pltpu


def arcface_kernel(emb_ref, w_ref, tgt_ref, out_ref, m_ref, l_ref, t_ref, *,
                   num_classes, num_class_tiles, class_padded, margin, scale):
    j = pl.program_id(1)
    tm = emb_ref.shape[0]
    tn = w_ref.shape[0]
    NEG_INF = -1e30
    A = scale * math.cos(margin)          # scale * cos(margin)
    B = scale * math.sin(margin)          # scale * sin(margin)
    nA, nB = -A, -B

    # --- per-batch-tile init of the online-softmax accumulators ---
    @pl.when(j == 0)
    def _init():
        m_ref[...] = jnp.full_like(m_ref, NEG_INF)
        l_ref[...] = jnp.zeros_like(l_ref)
        t_ref[...] = jnp.zeros_like(t_ref)

    # --- cosine = emb_n @ w_n.T : bf16 operands, f32 MXU accumulation ---
    cosine = jax.lax.dot_general(
        emb_ref[...], w_ref[...],
        dimension_numbers=(((1,), (1,)), ((), ())),
        preferred_element_type=jnp.float32)                     # (tm, tn) f32

    # --- slim full-tile epilogue (trig identities, scale folded in) ---
    c = jnp.clip(cosine, -1.0 + 1e-07, 1.0 - 1e-07)
    s = jnp.sqrt(1.0 - c * c)                                   # sin(theta), EUP
    neg = c * (nA * s + nB * c)                                 # -scale*c*sin(th+m)

    lane = jax.lax.broadcasted_iota(jnp.int32, (tm, tn), 1)     # constant per tile
    tgt_local = tgt_ref[...] - j * tn                           # (tm, 1) int32
    is_tgt = lane == tgt_local                                  # (tm, tn) bool

    # Target-column correction at (tm, 1) width (masked row-reduce -> XLU).
    c_t = jnp.sum(jnp.where(is_tgt, c, 0.0), axis=1, keepdims=True)
    s_t = jnp.sqrt(jnp.maximum(1.0 - c_t * c_t, 0.0))
    tgt_logit = A * c_t - B * s_t + c_t * (nA * s_t + nB * c_t)  # (tm, 1)
    logits = jnp.where(is_tgt, tgt_logit, neg)                   # (tm, tn)

    # Accumulate the target logit once (only the tile holding the target row).
    row_has = (tgt_local >= 0) & (tgt_local < tn)                # (tm, 1) bool
    t_ref[...] = t_ref[...] + jnp.where(row_has, tgt_logit, 0.0)

    # --- online softmax accumulation over class tiles ---
    def accumulate(lg):
        tile_max = jnp.max(lg, axis=1, keepdims=True)
        m_new = jnp.maximum(m_ref[...], tile_max)
        alpha = jnp.exp(m_ref[...] - m_new)
        l_ref[...] = alpha * l_ref[...] + jnp.sum(
            jnp.exp(lg - m_new), axis=1, keepdims=True)
        m_ref[...] = m_new

    if class_padded:
        def masked(lg):   # padded class columns only exist in the last tile
            return jnp.where(lane < (num_classes - j * tn), lg, NEG_INF)

        if num_class_tiles > 1:
            @pl.when(j == num_class_tiles - 1)
            def _():
                accumulate(masked(logits))

            @pl.when(j < num_class_tiles - 1)
            def _():
                accumulate(logits)
        else:
            accumulate(masked(logits))
    else:
        accumulate(logits)

    # --- finalize: per-sample CE = logsumexp - target_logit ---
    @pl.when(j == num_class_tiles - 1)
    def _finalize():
        out_ref[...] = m_ref[...] + jnp.log(l_ref[...]) - t_ref[...]


def arcface_loss(embeddings, weights, targets, margin=0.5, scale=64.0, *,
                 tile_m=256, tile_n=None):
    n, e = embeddings.shape
    c = weights.shape[0]

    c_pad = pl.cdiv(c, 128) * 128
    if tile_n is None:
        tile_n = min(512, c_pad)          # class grid collapses to 1 when it fits
    c_pad = pl.cdiv(c_pad, tile_n) * tile_n
    n_pad = pl.cdiv(n, tile_m) * tile_m
    n_bt = n_pad // tile_m
    n_ct = c_pad // tile_n

    # One-time f32 normalization in the wrapper (fused with the padding pass),
    # then bf16 for both MXU operand streams. Padded rows are zeros.
    emb32 = embeddings.astype(jnp.float32)
    emb_n = emb32 / jnp.maximum(
        jnp.linalg.norm(emb32, axis=1, keepdims=True), 1e-12)
    emb = jnp.zeros((n_pad, e), jnp.bfloat16).at[:n].set(
        emb_n.astype(jnp.bfloat16))

    w32 = weights.astype(jnp.float32)
    w_n = w32 / jnp.maximum(jnp.linalg.norm(w32, axis=1, keepdims=True), 1e-12)
    w = jnp.zeros((c_pad, e), jnp.bfloat16).at[:c].set(w_n.astype(jnp.bfloat16))

    tgt = jnp.zeros((n_pad, 1), jnp.int32).at[:n, 0].set(
        targets.astype(jnp.int32))

    kernel = functools.partial(
        arcface_kernel, num_classes=c, num_class_tiles=n_ct,
        class_padded=(c_pad != c), margin=float(margin), scale=float(scale))

    per_row = pl.pallas_call(
        kernel,
        out_shape=jax.ShapeDtypeStruct((n_pad, 1), jnp.float32),
        grid_spec=pltpu.PrefetchScalarGridSpec(
            num_scalar_prefetch=0,
            grid=(n_bt, n_ct),
            in_specs=[
                pl.BlockSpec((tile_m, e), lambda i, j: (i, 0)),   # emb     bf16
                pl.BlockSpec((tile_n, e), lambda i, j: (j, 0)),   # weights bf16
                pl.BlockSpec((tile_m, 1), lambda i, j: (i, 0)),   # targets i32
            ],
            out_specs=pl.BlockSpec((tile_m, 1), lambda i, j: (i, 0)),
            scratch_shapes=[
                pltpu.VMEM((tile_m, 1), jnp.float32),   # running row max
                pltpu.VMEM((tile_m, 1), jnp.float32),   # running exp-sum
                pltpu.VMEM((tile_m, 1), jnp.float32),   # target logit
            ],
        ),
        compiler_params=pltpu.CompilerParams(
            dimension_semantics=("parallel", "arbitrary"),
        ),
        cost_estimate=pl.CostEstimate(
            flops=2 * n_pad * c_pad * e,
            transcendentals=2 * n_pad * c_pad,
            bytes_accessed=(n_pad * e * 2 + n_bt * c_pad * e * 2
                            + n_pad * 4 + n_pad * 4),
        ),
    )(emb, w, tgt)

    # Mean over the real (unpadded) samples; padded rows are sliced away.
    return jnp.sum(per_row[:n, 0]) / n


def arcface_loss_ref(embeddings, weights, targets, margin=0.5, scale=64.0):
    """Pure-JAX f32 reference mirroring the PyTorch module (uses arccos)."""
    eps = 1e-12
    emb_n = embeddings / jnp.maximum(
        jnp.linalg.norm(embeddings, axis=1, keepdims=True), eps)
    w_n = weights / jnp.maximum(
        jnp.linalg.norm(weights, axis=1, keepdims=True), eps)
    cosine = emb_n @ w_n.T
    theta = jnp.arccos(jnp.clip(cosine, -1.0 + 1e-07, 1.0 - 1e-07))
    cos_m = jnp.cos(theta + margin)
    sin_m = jnp.sin(theta + margin)
    one_hot = jax.nn.one_hot(targets, weights.shape[0], dtype=jnp.float32)
    logits = scale * (one_hot * cos_m - cosine * sin_m)
    log_probs = jax.nn.log_softmax(logits, axis=1)
    return -jnp.mean(jnp.sum(one_hot * log_probs, axis=1))


if __name__ == "__main__":
    key = jax.random.PRNGKey(0)

    # --- shapes from the module: emb_size=64, num_classes=5, 1000 samples ---
    N, E, C = 1000, 64, 5
    k_feat, k_w, k_tgt, k_rest = jax.random.split(key, 4)
    features = jax.random.normal(k_feat, (N, E), dtype=jnp.float32)
    bound = math.sqrt(6.0 / (C + E))                    # xavier_uniform_
    weights = jax.random.uniform(k_w, (C, E), jnp.float32, -bound, bound)
    targets = jax.random.randint(k_tgt, (N,), 0, C, dtype=jnp.int32)

    loss = jax.block_until_ready(
        arcface_loss(features, weights, targets, margin=0.5, scale=64.0))
    ref = arcface_loss_ref(features, weights, targets, margin=0.5, scale=64.0)
    assert jnp.allclose(loss, ref, rtol=1e-2, atol=1e-2), (loss, ref)

    # --- case 2: class padding inside a single class tile + batch padding ---
    N2, E2, C2 = 200, 64, 300
    ka, kb, kc = jax.random.split(k_rest, 3)
    f2 = jax.random.normal(ka, (N2, E2), dtype=jnp.float32)
    w2 = jax.random.normal(kb, (C2, E2), dtype=jnp.float32) * 0.1
    t2 = jax.random.randint(kc, (N2,), 0, C2, dtype=jnp.int32)
    loss2 = jax.block_until_ready(arcface_loss(f2, w2, t2))
    ref2 = arcface_loss_ref(f2, w2, t2)
    assert jnp.allclose(loss2, ref2, rtol=1e-2, atol=1e-2), (loss2, ref2)

    # --- case 3: force multiple batch AND class tiles to exercise the online
    # softmax reduction and the last-tile-only padded-class mask ---
    loss3 = jax.block_until_ready(
        arcface_loss(f2, w2, t2, tile_m=128, tile_n=128))
    assert jnp.allclose(loss3, ref2, rtol=1e-2, atol=1e-2), (loss3, ref2)

    print("KERNEL_OK")
</pallas_src>

<mosaic_0001>
module attributes {stable_mosaic.version = 11 : i64} {
  func.func @arcface_kernel(%arg0: i32, %arg1: i32, %arg2: memref<256x64xbf16, #tpu.memory_space<vmem>>, %arg3: memref<128x64xbf16, #tpu.memory_space<vmem>>, %arg4: memref<256x1xi32, #tpu.memory_space<vmem>>, %arg5: memref<256x1xf32, #tpu.memory_space<vmem>>, %arg6: memref<256x1xf32, #tpu.memory_space<vmem>>, %arg7: memref<256x1xf32, #tpu.memory_space<vmem>>, %arg8: memref<256x1xf32, #tpu.memory_space<vmem>>) attributes {dimension_semantics = [#tpu.dimension_semantics<parallel>, #tpu.dimension_semantics<arbitrary>], iteration_bounds = array<i64: 4, 1>, scalar_prefetch = 0 : i64, scratch_operands = 3 : i64, tpu.core_type = #tpu.core_type<tc>, window_params = [{transform_indices = @transform_0, window_bounds = array<i64: 256, 64>}, {transform_indices = @transform_1, window_bounds = array<i64: 128, 64>}, {transform_indices = @transform_2, window_bounds = array<i64: 256, 1>}, {transform_indices = @transform_3, window_bounds = array<i64: 256, 1>}]} {
    %c0_i32 = arith.constant 0 : i32
    %0 = arith.cmpi eq, %arg1, %c0_i32 : i32
    %1 = arith.extui %0 : i1 to i32
    %c0_i32_0 = arith.constant 0 : i32
    %2 = arith.cmpi ne, %1, %c0_i32_0 : i32
    scf.if %2 {
      %cst_42 = arith.constant -1.000000e+30 : f32
      %88 = vector.broadcast %cst_42 : f32 to vector<256x1xf32>
      %c0_43 = arith.constant 0 : index
      %c0_44 = arith.constant 0 : index
      %89 = vector.load %arg6[%c0_43, %c0_44] : memref<256x1xf32, #tpu.memory_space<vmem>>, vector<256x1xf32>
      tpu.vector_store %arg6[%c0_43, %c0_44], %88 {strides = array<i32>} : memref<256x1xf32, #tpu.memory_space<vmem>>, vector<256x1xf32>,
      %cst_45 = arith.constant 0.000000e+00 : f32
      %90 = vector.broadcast %cst_45 : f32 to vector<256x1xf32>
      %c0_46 = arith.constant 0 : index
      %c0_47 = arith.constant 0 : index
      %91 = vector.load %arg7[%c0_46, %c0_47] : memref<256x1xf32, #tpu.memory_space<vmem>>, vector<256x1xf32>
      tpu.vector_store %arg7[%c0_46, %c0_47], %90 {strides = array<i32>} : memref<256x1xf32, #tpu.memory_space<vmem>>, vector<256x1xf32>,
      %cst_48 = arith.constant 0.000000e+00 : f32
      %92 = vector.broadcast %cst_48 : f32 to vector<256x1xf32>
      %c0_49 = arith.constant 0 : index
      %c0_50 = arith.constant 0 : index
      %93 = vector.load %arg8[%c0_49, %c0_50] : memref<256x1xf32, #tpu.memory_space<vmem>>, vector<256x1xf32>
      tpu.vector_store %arg8[%c0_49, %c0_50], %92 {strides = array<i32>} : memref<256x1xf32, #tpu.memory_space<vmem>>, vector<256x1xf32>,
    } else {
    }
    %c0 = arith.constant 0 : index
    %c0_1 = arith.constant 0 : index
    %3 = vector.load %arg2[%c0, %c0_1] : memref<256x64xbf16, #tpu.memory_space<vmem>>, vector<256x64xbf16>
    %c0_2 = arith.constant 0 : index
    %c0_3 = arith.constant 0 : index
    %4 = vector.load %arg3[%c0_2, %c0_3] : memref<128x64xbf16, #tpu.memory_space<vmem>>, vector<128x64xbf16>
    %cst = arith.constant dense<0.000000e+00> : vector<256x128xf32>
    %5 = tpu.matmul %3, %4, %cst {dimension_numbers = #tpu.dot_dimension_numbers<[1], [1], [0], [0], [0, 0, 1, 0], [], []>} : vector<256x64xbf16>, vector<128x64xbf16>, vector<256x128xf32> -> vector<256x128xf32>
    %cst_4 = arith.constant -0.99999988 : f32
    %cst_5 = arith.constant 0.99999988 : f32
    %6 = vector.broadcast %cst_4 : f32 to vector<256x128xf32>
    %7 = arith.maximumf %6, %5 : vector<256x128xf32>
    %8 = vector.broadcast %cst_5 : f32 to vector<256x128xf32>
    %9 = arith.minimumf %8, %7 : vector<256x128xf32>
    %10 = arith.mulf %9, %9 : vector<256x128xf32>
    %cst_6 = arith.constant 1.000000e+00 : f32
    %11 = vector.broadcast %cst_6 : f32 to vector<256x128xf32>
    %12 = arith.subf %11, %10 : vector<256x128xf32>
    %13 = math.sqrt %12 : vector<256x128xf32>
    %cst_7 = arith.constant -56.1652832 : f32
    %14 = vector.broadcast %cst_7 : f32 to vector<256x128xf32>
    %15 = arith.mulf %14, %13 : vector<256x128xf32>
    %cst_8 = arith.constant -30.6832352 : f32
    %16 = vector.broadcast %cst_8 : f32 to vector<256x128xf32>
    %17 = arith.mulf %16, %9 : vector<256x128xf32>
    %18 = arith.addf %15, %17 : vector<256x128xf32>
    %19 = arith.mulf %9, %18 : vector<256x128xf32>
    %20 = tpu.iota {dimensions = array<i32: 1>} : vector<256x128xi32>
    %c0_9 = arith.constant 0 : index
    %c0_10 = arith.constant 0 : index
    %21 = vector.load %arg4[%c0_9, %c0_10] : memref<256x1xi32, #tpu.memory_space<vmem>>, vector<256x1xi32>
    %c128_i32 = arith.constant 128 : i32
    %22 = arith.muli %arg1, %c128_i32 : i32
    %23 = vector.broadcast %22 : i32 to vector<256x1xi32>
    %24 = arith.subi %21, %23 : vector<256x1xi32>
    %25 = vector.broadcast %24 : vector<256x1xi32> to vector<256x128xi32>
    %26 = arith.cmpi eq, %20, %25 : vector<256x128xi32>
    %cst_11 = arith.constant 0.000000e+00 : f32
    %27 = vector.broadcast %cst_11 : f32 to vector<256x128xf32>
    %28 = arith.select %26, %9, %27 : vector<256x128xi1>, vector<256x128xf32>
    %cst_12 = arith.constant dense<0.000000e+00> : vector<256xf32>
    %29 = vector.multi_reduction <add>, %28, %cst_12 [1] : vector<256x128xf32> to vector<256xf32>
    %30 = vector.shape_cast %29 : vector<256xf32> to vector<256x1xf32>
    %31 = arith.mulf %30, %30 : vector<256x1xf32>
    %cst_13 = arith.constant 1.000000e+00 : f32
    %32 = vector.broadcast %cst_13 : f32 to vector<256x1xf32>
    %33 = arith.subf %32, %31 : vector<256x1xf32>
    %cst_14 = arith.constant 0.000000e+00 : f32
    %34 = vector.broadcast %cst_14 : f32 to vector<256x1xf32>
    %35 = arith.maximumf %33, %34 : vector<256x1xf32>
    %36 = math.sqrt %35 : vector<256x1xf32>
    %cst_15 = arith.constant 56.1652832 : f32
    %37 = vector.broadcast %cst_15 : f32 to vector<256x1xf32>
    %38 = arith.mulf %37, %30 : vector<256x1xf32>
    %cst_16 = arith.constant 30.6832352 : f32
    %39 = vector.broadcast %cst_16 : f32 to vector<256x1xf32>
    %40 = arith.mulf %39, %36 : vector<256x1xf32>
    %41 = arith.subf %38, %40 : vector<256x1xf32>
    %cst_17 = arith.constant -56.1652832 : f32
    %42 = vector.broadcast %cst_17 : f32 to vector<256x1xf32>
    %43 = arith.mulf %42, %36 : vector<256x1xf32>
    %cst_18 = arith.constant -30.6832352 : f32
    %44 = vector.broadcast %cst_18 : f32 to vector<256x1xf32>
    %45 = arith.mulf %44, %30 : vector<256x1xf32>
    %46 = arith.addf %43, %45 : vector<256x1xf32>
    %47 = arith.mulf %30, %46 : vector<256x1xf32>
    %48 = arith.addf %41, %47 : vector<256x1xf32>
    %49 = vector.shape_cast %48 : vector<256x1xf32> to vector<256x1xf32>
    %50 = vector.broadcast %49 : vector<256x1xf32> to vector<256x128xf32>
    %51 = arith.select %26, %50, %19 : vector<256x128xi1>, vector<256x128xf32>
    %c0_i32_19 = arith.constant 0 : i32
    %52 = vector.broadcast %c0_i32_19 : i32 to vector<256x1xi32>
    %53 = arith.cmpi sge, %24, %52 : vector<256x1xi32>
    %c128_i32_20 = arith.constant 128 : i32
    %54 = vector.broadcast %c128_i32_20 : i32 to vector<256x1xi32>
    %55 = arith.cmpi slt, %24, %54 : vector<256x1xi32>
    %56 = arith.andi %53, %55 : vector<256x1xi1>
    %c0_21 = arith.constant 0 : index
    %c0_22 = arith.constant 0 : index
    %57 = vector.load %arg8[%c0_21, %c0_22] : memref<256x1xf32, #tpu.memory_space<vmem>>, vector<256x1xf32>
    %cst_23 = arith.constant 0.000000e+00 : f32
    %58 = vector.broadcast %cst_23 : f32 to vector<256x1xf32>
    %59 = arith.select %56, %48, %58 : vector<256x1xi1>, vector<256x1xf32>
    %60 = arith.addf %57, %59 : vector<256x1xf32>
    %c0_24 = arith.constant 0 : index
    %c0_25 = arith.constant 0 : index
    %61 = vector.load %arg8[%c0_24, %c0_25] : memref<256x1xf32, #tpu.memory_space<vmem>>, vector<256x1xf32>
    tpu.vector_store %arg8[%c0_24, %c0_25], %60 {strides = array<i32>} : memref<256x1xf32, #tpu.memory_space<vmem>>, vector<256x1xf32>,
    %c128_i32_26 = arith.constant 128 : i32
    %62 = arith.muli %arg1, %c128_i32_26 : i32
    %c5_i32 = arith.constant 5 : i32
    %63 = arith.subi %c5_i32, %62 : i32
    %64 = vector.broadcast %63 : i32 to vector<256x128xi32>
    %65 = arith.cmpi slt, %20, %64 : vector<256x128xi32>
    %cst_27 = arith.constant -1.000000e+30 : f32
    %66 = vector.broadcast %cst_27 : f32 to vector<256x128xf32>
    %67 = arith.select %65, %51, %66 : vector<256x128xi1>, vector<256x128xf32>
    %cst_28 = arith.constant dense<0xFF800000> : vector<256xf32>
    %68 = vector.multi_reduction <maximumf>, %67, %cst_28 [1] : vector<256x128xf32> to vector<256xf32>
    %69 = vector.shape_cast %68 : vector<256xf32> to vector<256x1xf32>
    %c0_29 = arith.constant 0 : index
    %c0_30 = arith.constant 0 : index
    %70 = vector.load %arg6[%c0_29, %c0_30] : memref<256x1xf32, #tpu.memory_space<vmem>>, vector<256x1xf32>
    %71 = arith.maximumf %70, %69 : vector<256x1xf32>
    %c0_31 = arith.constant 0 : index
    %c0_32 = arith.constant 0 : index
    %72 = vector.load %arg6[%c0_31, %c0_32] : memref<256x1xf32, #tpu.memory_space<vmem>>, vector<256x1xf32>
    %73 = arith.subf %72, %71 : vector<256x1xf32>
    %74 = math.exp %73 : vector<256x1xf32>
    %c0_33 = arith.constant 0 : index
    %c0_34 = arith.constant 0 : index
    %75 = vector.load %arg7[%c0_33, %c0_34] : memref<256x1xf32, #tpu.memory_space<vmem>>, vector<256x1xf32>
    %76 = arith.mulf %74, %75 : vector<256x1xf32>
    %77 = vector.broadcast %71 : vector<256x1xf32> to vector<256x128xf32>
    %78 = arith.subf %67, %77 : vector<256x128xf32>
    %79 = math.exp %78 : vector<256x128xf32>
    %cst_35 = arith.constant dense<0.000000e+00> : vector<256xf32>
    %80 = vector.multi_reduction <add>, %79, %cst_35 [1] : vector<256x128xf32> to vector<256xf32>
    %81 = vector.shape_cast %80 : vector<256xf32> to vector<256x1xf32>
    %82 = arith.addf %76, %81 : vector<256x1xf32>
    %c0_36 = arith.constant 0 : index
    %c0_37 = arith.constant 0 : index
    %83 = vector.load %arg7[%c0_36, %c0_37] : memref<256x1xf32, #tpu.memory_space<vmem>>, vector<256x1xf32>
    tpu.vector_store %arg7[%c0_36, %c0_37], %82 {strides = array<i32>} : memref<256x1xf32, #tpu.memory_space<vmem>>, vector<256x1xf32>,
    %c0_38 = arith.constant 0 : index
    %c0_39 = arith.constant 0 : index
    %84 = vector.load %arg6[%c0_38, %c0_39] : memref<256x1xf32, #tpu.memory_space<vmem>>, vector<256x1xf32>
    tpu.vector_store %arg6[%c0_38, %c0_39], %71 {strides = array<i32>} : memref<256x1xf32, #tpu.memory_space<vmem>>, vector<256x1xf32>,
    %c0_i32_40 = arith.constant 0 : i32
    %85 = arith.cmpi eq, %arg1, %c0_i32_40 : i32
    %86 = arith.extui %85 : i1 to i32
    %c0_i32_41 = arith.constant 0 : i32
    %87 = arith.cmpi ne, %86, %c0_i32_41 : i32
    scf.if %87 {
      %c0_42 = arith.constant 0 : index
      %c0_43 = arith.constant 0 : index
      %88 = vector.load %arg6[%c0_42, %c0_43] : memref<256x1xf32, #tpu.memory_space<vmem>>, vector<256x1xf32>
      %c0_44 = arith.constant 0 : index
      %c0_45 = arith.constant 0 : index
      %89 = vector.load %arg7[%c0_44, %c0_45] : memref<256x1xf32, #tpu.memory_space<vmem>>, vector<256x1xf32>
      %90 = math.log %89 : vector<256x1xf32>
      %91 = arith.addf %88, %90 : vector<256x1xf32>
      %c0_46 = arith.constant 0 : index
      %c0_47 = arith.constant 0 : index
      %92 = vector.load %arg8[%c0_46, %c0_47] : memref<256x1xf32, #tpu.memory_space<vmem>>, vector<256x1xf32>
      %93 = arith.subf %91, %92 : vector<256x1xf32>
      %c0_48 = arith.constant 0 : index
      %c0_49 = arith.constant 0 : index
      %94 = vector.load %arg5[%c0_48, %c0_49] : memref<256x1xf32, #tpu.memory_space<vmem>>, vector<256x1xf32>
      tpu.vector_store %arg5[%c0_48, %c0_49], %93 {strides = array<i32>} : memref<256x1xf32, #tpu.memory_space<vmem>>, vector<256x1xf32>,
    } else {
    }
    return
  }
  func.func @transform_0(%arg0: i32, %arg1: i32) -> (i32, i32) {
    %c0_i32 = arith.constant 0 : i32
    %c0_i32_0 = arith.constant 0 : i32
    return %arg0, %c0_i32 : i32, i32
  }
  func.func @transform_1(%arg0: i32, %arg1: i32) -> (i32, i32) {
    %c0_i32 = arith.constant 0 : i32
    %c0_i32_0 = arith.constant 0 : i32
    return %arg1, %c0_i32 : i32, i32
  }
  func.func @transform_2(%arg0: i32, %arg1: i32) -> (i32, i32) {
    %c0_i32 = arith.constant 0 : i32
    %c0_i32_0 = arith.constant 0 : i32
    return %arg0, %c0_i32 : i32, i32
  }
  func.func @transform_3(%arg0: i32, %arg1: i32) -> (i32, i32) {
    %c0_i32 = arith.constant 0 : i32
    %c0_i32_0 = arith.constant 0 : i32
    return %arg0, %c0_i32 : i32, i32
  }
}

</mosaic_0001>

<llo_original>
// kernel: tpu_custom_call.1
$region0: #{tpu_custom_call.1}
  #allocation0 [shape = 'u32[]', space=smem, size = 0x4, offset = 0x4, fixed_abs, tag = 'smem constant byte address 0x4 - core index']
  #allocation1 [shape = 'u32[144,128]{1,0:T(1,128)}', space=vmem, size = 0x12000, scoped, tag = 'internal scratch']
  #allocation2 [shape = 'f32[256,1]{1,0:T(8,128)}', space=vmem, size = 0x20000, scoped, tag = 'scratch operand']
  #allocation3 [shape = 'f32[256,1]{1,0:T(8,128)}', space=vmem, size = 0x20000, scoped, tag = 'scratch operand']
  #allocation4 [shape = 'f32[256,1]{1,0:T(8,128)}', space=vmem, size = 0x20000, scoped, tag = 'scratch operand']
  %s0 = inlined_call_operand.vmem [shape: bf16[1024,64], index: 0, kind: input, shape index: {}]
  %s1 = inlined_call_operand.vmem [shape: bf16[128,64], index: 1, kind: input, shape index: {}]
  %s2 = inlined_call_operand.vmem [shape: s32[1024,1], index: 2, kind: input, shape index: {}]
  %s3 = inlined_call_operand.vmem [shape: f32[1024,1], index: 3, kind: output, shape index: {}]
  %s4 = sld [smem:[#allocation0]]
  $region53: #{tpu_custom_call.1} parent=0
    _
  %s6 = ssub.s32 1, %s4
  %s7 = scalar_select 0, %s6, %s4
  loop: start=0, step=1, limit=6
  $region2: #{tpu_custom_call.1} parent=0 // loop_pre_header
    _
  $region3: #{tpu_custom_call.1} parent=0 // loop_header
    %s9 = sphi 0, %s13
    %p10 = scmp.ge.s32.totalorder %s9, 6
    %s16 = sphi 0, %s28
    %s17 = sphi 0, %s24
    %s18 = sphi 0, %s16
    %s19 = sphi 0, %s17
    %s20 = sphi 0, %s18
    %s21 = sphi 0, %s19
    %s31 = sphi 0, %s33
    %s34 = sphi 0, %s31
    %s35 = sphi 0, %s34
    %s51 = sphi 0, %s35
    %s57 = sphi 0, %s59
    %s60 = sphi 0, %s57
    %s61 = sphi 0, %s60
    %s77 = sphi 0, %s61
    %s83 = sphi 0, %s85
    %s86 = sphi 0, %s83
    %s87 = sphi 0, %s86
    %s103 = sphi 0, %s87
    %s109 = sphi 0, %s111
    %s112 = sphi 0, %s109
    %s113 = sphi 0, %s112
    %s129 = sphi 0, %s113
  $region4: #{tpu_custom_call.1} parent=0 // loop_header_branch
    %12 = sbr.rel (%p10) target = $region8
  $region5: #{tpu_custom_call.1} parent=0 // loop_body
    %s14 = ssub.s32 %s9, 1
    %s15 = ssub.s32 %s9, 2
    %s22 = sadd.s32 1, %s17
    %p23 = scmp.ge.s32.totalorder %s22, 1
    %s24 = scalar_select %p23, 0, %s22
    %s25 = sadd.s32 1, %s16
    %s26 = scalar_select %p23, %s25, %s16
    %p27 = scmp.ge.s32.totalorder %s26, 4
    %s28 = scalar_select %p27, 0, %s26
    %s29 = ssub.s32 %s16, %s28
    %p30 = scmp.eq.s32.totalorder %s29, 0
    %s32 = sadd.s32 %s31, 1
    %s33 = scalar_select %p30, %s31, %s32
    %p36 = pneg %p30
    %p37 = scmp.eq.s32.totalorder %s9, 3
    %p38 = por %p36, %p37
    %p39 = scmp.ne.s32.totalorder %s31, %s34
    %p40 = scmp.eq.s32.totalorder %s9, 0
    %p41 = por %p39, %p40
    %p42 = scmp.ne.s32.totalorder %s31, %s34
    %p43 = scmp.eq.s32.totalorder %s14, 3
    %p44 = por %p42, %p43
    %p45 = scmp.ne.s32.totalorder %s34, %s35
    %p46 = scmp.eq.s32.totalorder %s14, 0
    %p47 = por %p45, %p46
    %p48 = scmp.ne.s32.totalorder %s34, %s35
    %p49 = scmp.eq.s32.totalorder %s15, 3
    %p50 = por %p48, %p49
    %p52 = scmp.ne.s32.totalorder %s35, %s51
    %p53 = scmp.eq.s32.totalorder %s15, 0
    %p54 = por %p52, %p53
    %s55 = ssub.s32 %s17, %s24
    %p56 = scmp.eq.s32.totalorder %s55, 0
    %s58 = sadd.s32 %s57, 1
    %s59 = scalar_select %p56, %s57, %s58
    %p62 = pneg %p56
    %p63 = scmp.eq.s32.totalorder %s9, 3
    %p64 = por %p62, %p63
    %p65 = scmp.ne.s32.totalorder %s57, %s60
    %p66 = scmp.eq.s32.totalorder %s9, 0
    %p67 = por %p65, %p66
    %p68 = scmp.ne.s32.totalorder %s57, %s60
    %p69 = scmp.eq.s32.totalorder %s14, 3
    %p70 = por %p68, %p69
    %p71 = scmp.ne.s32.totalorder %s60, %s61
    %p72 = scmp.eq.s32.totalorder %s14, 0
    %p73 = por %p71, %p72
    %p74 = scmp.ne.s32.totalorder %s60, %s61
    %p75 = scmp.eq.s32.totalorder %s15, 3
    %p76 = por %p74, %p75
    %p78 = scmp.ne.s32.totalorder %s61, %s77
    %p79 = scmp.eq.s32.totalorder %s15, 0
    %p80 = por %p78, %p79
    %s81 = ssub.s32 %s16, %s28
    %p82 = scmp.eq.s32.totalorder %s81, 0
    %s84 = sadd.s32 %s83, 1
    %s85 = scalar_select %p82, %s83, %s84
    %p88 = pneg %p82
    %p89 = scmp.eq.s32.totalorder %s9, 3
    %p90 = por %p88, %p89
    %p91 = scmp.ne.s32.totalorder %s83, %s86
    %p92 = scmp.eq.s32.totalorder %s9, 0
    %p93 = por %p91, %p92
    %p94 = scmp.ne.s32.totalorder %s83, %s86
    %p95 = scmp.eq.s32.totalorder %s14, 3
    %p96 = por %p94, %p95
    %p97 = scmp.ne.s32.totalorder %s86, %s87
    %p98 = scmp.eq.s32.totalorder %s14, 0
    %p99 = por %p97, %p98
    %p100 = scmp.ne.s32.totalorder %s86, %s87
    %p101 = scmp.eq.s32.totalorder %s15, 3
    %p102 = por %p100, %p101
    %p104 = scmp.ne.s32.totalorder %s87, %s103
    %p105 = scmp.eq.s32.totalorder %s15, 0
    %p106 = por %p104, %p105
    %s107 = ssub.s32 %s16, %s28
    %p108 = scmp.eq.s32.totalorder %s107, 0
    %s110 = sadd.s32 %s109, 1
    %s111 = scalar_select %p108, %s109, %s110
    %p114 = pneg %p108
    %p115 = scmp.eq.s32.totalorder %s9, 3
    %p116 = por %p114, %p115
    %p117 = scmp.ne.s32.totalorder %s109, %s112
    %p118 = scmp.eq.s32.totalorder %s9, 0
    %p119 = por %p117, %p118
    %p120 = scmp.ne.s32.totalorder %s109, %s112
    %p121 = scmp.eq.s32.totalorder %s14, 3
    %p122 = por %p120, %p121
    %p123 = scmp.ne.s32.totalorder %s112, %s113
    %p124 = scmp.eq.s32.totalorder %s14, 0
    %p125 = por %p123, %p124
    %p126 = scmp.ne.s32.totalorder %s112, %s113
    %p127 = scmp.eq.s32.totalorder %s15, 3
    %p128 = por %p126, %p127
    %p130 = scmp.ne.s32.totalorder %s113, %s129
    %p131 = scmp.eq.s32.totalorder %s15, 0
    %p132 = por %p130, %p131
    %p133 = scmp.le.s32.totalorder 1, %s9
    %p134 = scmp.lt.s32.totalorder %s9, 5
    %p135 = pnand %p133, %p134
    %p136 = pneg %p135
    // Predicated region
    $region9: #{tpu_custom_call.1} parent=5 // pred_check
      _
    $region10: #{tpu_custom_call.1} parent=5 // pred_check_branch
      %138 = sbr.rel (%p135) target = $region12
    $region11: #{tpu_custom_call.1} parent=5 // pred_region
      %s139 = ssub.s32 %s9, 1
      // Predicated region
      $region13: #{tpu_custom_call.1} parent=11 // pred_check
        %p140 = pneg %p73
      $region14: #{tpu_custom_call.1} parent=11 // pred_check_branch
        %142 = sbr.rel (%p140) target = $region16
      $region15: #{tpu_custom_call.1} parent=11 // pred_region
        %s143 = smul.u32 16, %s19
        %p144 = scmp.lt.s32.totalorder %s143, 15
        %s145 = scalar_select %p144, %s143, 15
        %s146 = smul.addr %s145, 4
        %s147 = scalar_lea.vmem %s1, %s146
        %s148 = smul.u32 16, %s19
      $region16: #{tpu_custom_call.1} parent=11 // pred_fallthru
        _
    $region12: #{tpu_custom_call.1} parent=5 // pred_fallthru
      _
    %p149 = scmp.lt.s32.totalorder %s9, 4
    // Predicated region
    $region17: #{tpu_custom_call.1} parent=5 // pred_check
      %p150 = pneg %p149
    $region18: #{tpu_custom_call.1} parent=5 // pred_check_branch
      %152 = sbr.rel (%p150) target = $region20
    $region19: #{tpu_custom_call.1} parent=5 // pred_region
      // Predicated region
      $region21: #{tpu_custom_call.1} parent=19 // pred_check
        %p153 = pneg %p41
      $region22: #{tpu_custom_call.1} parent=19 // pred_check_branch
        %155 = sbr.rel (%p153) target = $region24
      $region23: #{tpu_custom_call.1} parent=19 // pred_region
        %s156 = smul.u32 32, %s16
        %p157 = scmp.lt.s32.totalorder %s156, 127
        %s158 = scalar_select %p157, %s156, 127
        %s159 = smul.addr %s158, 4
        %s160 = scalar_lea.vmem %s0, %s159
        %s161 = smul.u32 32, %s16
      $region24: #{tpu_custom_call.1} parent=19 // pred_fallthru
        _
      // Predicated region
      $region25: #{tpu_custom_call.1} parent=19 // pred_check
        %p162 = pneg %p93
      $region26: #{tpu_custom_call.1} parent=19 // pred_check_branch
        %164 = sbr.rel (%p162) target = $region28
      $region27: #{tpu_custom_call.1} parent=19 // pred_region
        %s165 = smul.u32 32, %s16
        %p166 = scmp.lt.s32.totalorder %s165, 127
        %s167 = scalar_select %p166, %s165, 127
        %s168 = smul.addr %s167, 8
        %s169 = scalar_lea.vmem %s2, %s168
        %s170 = smul.u32 32, %s16
      $region28: #{tpu_custom_call.1} parent=19 // pred_fallthru
        _
    $region20: #{tpu_custom_call.1} parent=5 // pred_fallthru
      _
    %p171 = scmp.le.s32.totalorder 1, %s9
    %p172 = scmp.lt.s32.totalorder %s9, 5
    %p173 = pnand %p171, %p172
    %p174 = pneg %p173
    // Predicated region
    $region29: #{tpu_custom_call.1} parent=5 // pred_check
      _
    $region30: #{tpu_custom_call.1} parent=5 // pred_check_branch
      %176 = sbr.rel (%p173) target = $region32
    $region31: #{tpu_custom_call.1} parent=5 // pred_region
      %s177 = ssub.s32 %s9, 1
      %s178 = smul.u32 32, %s18
      %p179 = scmp.lt.s32.totalorder %s178, 127
      %s180 = scalar_select %p179, %s178, 127
      %s181 = smul.addr %s180, 4
      %s182 = scalar_lea.vmem %s0, %s181
      %p183 = pneg %p47
      %p184 = pneg %p44
      %s185 = smul.u32 16, %s19
      %p186 = scmp.lt.s32.totalorder %s185, 15
      %s187 = scalar_select %p186, %s185, 15
      %s188 = smul.addr %s187, 4
      %s189 = scalar_lea.vmem %s1, %s188
      %p190 = pneg %p73
      %p191 = pneg %p70
      %s192 = smul.u32 32, %s18
      %p193 = scmp.lt.s32.totalorder %s192, 127
      %s194 = scalar_select %p193, %s192, 127
      %s195 = smul.addr %s194, 8
      %s196 = scalar_lea.vmem %s2, %s195
      %p197 = pneg %p99
      %p198 = pneg %p96
      %p199 = pneg %p125
      %p200 = pneg %p122
      %s201 = smul.u32 32, %s18
      %p202 = scmp.lt.s32.totalorder %s201, 127
      %s203 = scalar_select %p202, %s201, 127
      %s204 = smul.addr %s203, 8
      %s205 = scalar_lea.vmem %s3, %s204
      %s206 = smul.u32 32, %s18
      %p207 = scmp.lt.s32.totalorder %s206, 127
      %s208 = scalar_select %p207, %s206, 127
      %s209 = smul.addr %s208, 4
      %s210 = scalar_lea.vmem %s0, %s209
      %s211 = smul.u32 32, %s18
      %s212 = smul.u32 16, %s19
      %p213 = scmp.lt.s32.totalorder %s212, 15
      %s214 = scalar_select %p213, %s212, 15
      %s215 = smul.addr %s214, 4
      %s216 = scalar_lea.vmem %s1, %s215
      %s217 = smul.u32 16, %s19
      %s218 = smul.u32 32, %s18
      %p219 = scmp.lt.s32.totalorder %s218, 127
      %s220 = scalar_select %p219, %s218, 127
      %s221 = smul.addr %s220, 8
      %s222 = scalar_lea.vmem %s2, %s221
      %s223 = smul.u32 32, %s18
      %s224 = smul.u32 32, %s18
      %p225 = scmp.lt.s32.totalorder %s224, 127
      %s226 = scalar_select %p225, %s224, 127
      %s227 = smul.addr %s226, 8
      %s228 = scalar_lea.vmem %s3, %s227
      %s229 = smul.u32 32, %s18
      %p231 = scmp.eq.s32.totalorder %s19, 0
      // Predicated region
      $region33: #{tpu_custom_call.1} parent=31 // pred_check
        %p232 = pneg %p231
      $region34: #{tpu_custom_call.1} parent=31 // pred_check_branch
        %234 = sbr.rel (%p232) target = $region36
      $region35: #{tpu_custom_call.1} parent=31 // pred_region
        %vm235 = vcmask 7168
        %236 = vst.msk [vmem:[#allocation2] sm:$0xff] %vm235, -1e+30
        %237 = vst.msk [vmem:[#allocation2 + $0x8] sm:$0xff] %vm235, -1e+30
        %238 = vst.msk [vmem:[#allocation2 + $0x10] sm:$0xff] %vm235, -1e+30
        %239 = vst.msk [vmem:[#allocation2 + $0x18] sm:$0xff] %vm235, -1e+30
        %240 = vst.msk [vmem:[#allocation2 + $0x20] sm:$0xff] %vm235, -1e+30
        %241 = vst.msk [vmem:[#allocation2 + $0x28] sm:$0xff] %vm235, -1e+30
        %242 = vst.msk [vmem:[#allocation2 + $0x30] sm:$0xff] %vm235, -1e+30
        %243 = vst.msk [vmem:[#allocation2 + $0x38] sm:$0xff] %vm235, -1e+30
        %244 = vst.msk [vmem:[#allocation2 + $0x40] sm:$0xff] %vm235, -1e+30
        %245 = vst.msk [vmem:[#allocation2 + $0x48] sm:$0xff] %vm235, -1e+30
        %246 = vst.msk [vmem:[#allocation2 + $0x50] sm:$0xff] %vm235, -1e+30
        %247 = vst.msk [vmem:[#allocation2 + $0x58] sm:$0xff] %vm235, -1e+30
        %248 = vst.msk [vmem:[#allocation2 + $0x60] sm:$0xff] %vm235, -1e+30
        %249 = vst.msk [vmem:[#allocation2 + $0x68] sm:$0xff] %vm235, -1e+30
        %250 = vst.msk [vmem:[#allocation2 + $0x70] sm:$0xff] %vm235, -1e+30
        %251 = vst.msk [vmem:[#allocation2 + $0x78] sm:$0xff] %vm235, -1e+30
        %252 = vst.msk [vmem:[#allocation2 + $0x80] sm:$0xff] %vm235, -1e+30
        %253 = vst.msk [vmem:[#allocation2 + $0x88] sm:$0xff] %vm235, -1e+30
        %254 = vst.msk [vmem:[#allocation2 + $0x90] sm:$0xff] %vm235, -1e+30
        %255 = vst.msk [vmem:[#allocation2 + $0x98] sm:$0xff] %vm235, -1e+30
        %256 = vst.msk [vmem:[#allocation2 + $0xa0] sm:$0xff] %vm235, -1e+30
        %257 = vst.msk [vmem:[#allocation2 + $0xa8] sm:$0xff] %vm235, -1e+30
        %258 = vst.msk [vmem:[#allocation2 + $0xb0] sm:$0xff] %vm235, -1e+30
        %259 = vst.msk [vmem:[#allocation2 + $0xb8] sm:$0xff] %vm235, -1e+30
        %260 = vst.msk [vmem:[#allocation2 + $0xc0] sm:$0xff] %vm235, -1e+30
        %261 = vst.msk [vmem:[#allocation2 + $0xc8] sm:$0xff] %vm235, -1e+30
        %262 = vst.msk [vmem:[#allocation2 + $0xd0] sm:$0xff] %vm235, -1e+30
        %263 = vst.msk [vmem:[#allocation2 + $0xd8] sm:$0xff] %vm235, -1e+30
        %264 = vst.msk [vmem:[#allocation2 + $0xe0] sm:$0xff] %vm235, -1e+30
        %265 = vst.msk [vmem:[#allocation2 + $0xe8] sm:$0xff] %vm235, -1e+30
        %266 = vst.msk [vmem:[#allocation2 + $0xf0] sm:$0xff] %vm235, -1e+30
        %267 = vst.msk [vmem:[#allocation2 + $0xf8] sm:$0xff] %vm235, -1e+30
        %268 = vst.msk [vmem:[#allocation3] sm:$0xff] %vm235, 0.0
        %269 = vst.msk [vmem:[#allocation3 + $0x8] sm:$0xff] %vm235, 0.0
        %270 = vst.msk [vmem:[#allocation3 + $0x10] sm:$0xff] %vm235, 0.0
        %271 = vst.msk [vmem:[#allocation3 + $0x18] sm:$0xff] %vm235, 0.0
        %272 = vst.msk [vmem:[#allocation3 + $0x20] sm:$0xff] %vm235, 0.0
        %273 = vst.msk [vmem:[#allocation3 + $0x28] sm:$0xff] %vm235, 0.0
        %274 = vst.msk [vmem:[#allocation3 + $0x30] sm:$0xff] %vm235, 0.0
        %275 = vst.msk [vmem:[#allocation3 + $0x38] sm:$0xff] %vm235, 0.0
        %276 = vst.msk [vmem:[#allocation3 + $0x40] sm:$0xff] %vm235, 0.0
        %277 = vst.msk [vmem:[#allocation3 + $0x48] sm:$0xff] %vm235, 0.0
        %278 = vst.msk [vmem:[#allocation3 + $0x50] sm:$0xff] %vm235, 0.0
        %279 = vst.msk [vmem:[#allocation3 + $0x58] sm:$0xff] %vm235, 0.0
        %280 = vst.msk [vmem:[#allocation3 + $0x60] sm:$0xff] %vm235, 0.0
        %281 = vst.msk [vmem:[#allocation3 + $0x68] sm:$0xff] %vm235, 0.0
        %282 = vst.msk [vmem:[#allocation3 + $0x70] sm:$0xff] %vm235, 0.0
        %283 = vst.msk [vmem:[#allocation3 + $0x78] sm:$0xff] %vm235, 0.0
        %284 = vst.msk [vmem:[#allocation3 + $0x80] sm:$0xff] %vm235, 0.0
        %285 = vst.msk [vmem:[#allocation3 + $0x88] sm:$0xff] %vm235, 0.0
        %286 = vst.msk [vmem:[#allocation3 + $0x90] sm:$0xff] %vm235, 0.0
        %287 = vst.msk [vmem:[#allocation3 + $0x98] sm:$0xff] %vm235, 0.0
        %288 = vst.msk [vmem:[#allocation3 + $0xa0] sm:$0xff] %vm235, 0.0
        %289 = vst.msk [vmem:[#allocation3 + $0xa8] sm:$0xff] %vm235, 0.0
        %290 = vst.msk [vmem:[#allocation3 + $0xb0] sm:$0xff] %vm235, 0.0
        %291 = vst.msk [vmem:[#allocation3 + $0xb8] sm:$0xff] %vm235, 0.0
        %292 = vst.msk [vmem:[#allocation3 + $0xc0] sm:$0xff] %vm235, 0.0
        %293 = vst.msk [vmem:[#allocation3 + $0xc8] sm:$0xff] %vm235, 0.0
        %294 = vst.msk [vmem:[#allocation3 + $0xd0] sm:$0xff] %vm235, 0.0
        %295 = vst.msk [vmem:[#allocation3 + $0xd8] sm:$0xff] %vm235, 0.0
        %296 = vst.msk [vmem:[#allocation3 + $0xe0] sm:$0xff] %vm235, 0.0
        %297 = vst.msk [vmem:[#allocation3 + $0xe8] sm:$0xff] %vm235, 0.0
        %298 = vst.msk [vmem:[#allocation3 + $0xf0] sm:$0xff] %vm235, 0.0
        %299 = vst.msk [vmem:[#allocation3 + $0xf8] sm:$0xff] %vm235, 0.0
        %300 = vst.msk [vmem:[#allocation4] sm:$0xff] %vm235, 0.0
        %301 = vst.msk [vmem:[#allocation4 + $0x8] sm:$0xff] %vm235, 0.0
        %302 = vst.msk [vmem:[#allocation4 + $0x10] sm:$0xff] %vm235, 0.0
        %303 = vst.msk [vmem:[#allocation4 + $0x18] sm:$0xff] %vm235, 0.0
        %304 = vst.msk [vmem:[#allocation4 + $0x20] sm:$0xff] %vm235, 0.0
        %305 = vst.msk [vmem:[#allocation4 + $0x28] sm:$0xff] %vm235, 0.0
        %306 = vst.msk [vmem:[#allocation4 + $0x30] sm:$0xff] %vm235, 0.0
        %307 = vst.msk [vmem:[#allocation4 + $0x38] sm:$0xff] %vm235, 0.0
        %308 = vst.msk [vmem:[#allocation4 + $0x40] sm:$0xff] %vm235, 0.0
        %309 = vst.msk [vmem:[#allocation4 + $0x48] sm:$0xff] %vm235, 0.0
        %310 = vst.msk [vmem:[#allocation4 + $0x50] sm:$0xff] %vm235, 0.0
        %311 = vst.msk [vmem:[#allocation4 + $0x58] sm:$0xff] %vm235, 0.0
        %312 = vst.msk [vmem:[#allocation4 + $0x60] sm:$0xff] %vm235, 0.0
        %313 = vst.msk [vmem:[#allocation4 + $0x68] sm:$0xff] %vm235, 0.0
        %314 = vst.msk [vmem:[#allocation4 + $0x70] sm:$0xff] %vm235, 0.0
        %315 = vst.msk [vmem:[#allocation4 + $0x78] sm:$0xff] %vm235, 0.0
        %316 = vst.msk [vmem:[#allocation4 + $0x80] sm:$0xff] %vm235, 0.0
        %317 = vst.msk [vmem:[#allocation4 + $0x88] sm:$0xff] %vm235, 0.0
        %318 = vst.msk [vmem:[#allocation4 + $0x90] sm:$0xff] %vm235, 0.0
        %319 = vst.msk [vmem:[#allocation4 + $0x98] sm:$0xff] %vm235, 0.0
        %320 = vst.msk [vmem:[#allocation4 + $0xa0] sm:$0xff] %vm235, 0.0
        %321 = vst.msk [vmem:[#allocation4 + $0xa8] sm:$0xff] %vm235, 0.0
        %322 = vst.msk [vmem:[#allocation4 + $0xb0] sm:$0xff] %vm235, 0.0
        %323 = vst.msk [vmem:[#allocation4 + $0xb8] sm:$0xff] %vm235, 0.0
        %324 = vst.msk [vmem:[#allocation4 + $0xc0] sm:$0xff] %vm235, 0.0
        %325 = vst.msk [vmem:[#allocation4 + $0xc8] sm:$0xff] %vm235, 0.0
        %326 = vst.msk [vmem:[#allocation4 + $0xd0] sm:$0xff] %vm235, 0.0
        %327 = vst.msk [vmem:[#allocation4 + $0xd8] sm:$0xff] %vm235, 0.0
        %328 = vst.msk [vmem:[#allocation4 + $0xe0] sm:$0xff] %vm235, 0.0
        %329 = vst.msk [vmem:[#allocation4 + $0xe8] sm:$0xff] %vm235, 0.0
        %330 = vst.msk [vmem:[#allocation4 + $0xf0] sm:$0xff] %vm235, 0.0
        %331 = vst.msk [vmem:[#allocation4 + $0xf8] sm:$0xff] %vm235, 0.0
      $region36: #{tpu_custom_call.1} parent=31 // pred_fallthru
        _
      %v332 = vld [vmem:[%s210] sm:$0xf]
      %v333 = vld [vmem:[%s210 + $0x4] sm:$0xf]
      %v334 = vld [vmem:[%s210 + $0x8] sm:$0xf]
      %v335 = vld [vmem:[%s210 + $0xc] sm:$0xf]
      %v336 = vld [vmem:[%s210 + $0x10] sm:$0xf]
      %v337 = vld [vmem:[%s210 + $0x14] sm:$0xf]
      %v338 = vld [vmem:[%s210 + $0x18] sm:$0xf]
      %v339 = vld [vmem:[%s210 + $0x1c] sm:$0xf]
      %v340 = vld [vmem:[%s210 + $0x20] sm:$0xf]
      %v341 = vld [vmem:[%s210 + $0x24] sm:$0xf]
      %v342 = vld [vmem:[%s210 + $0x28] sm:$0xf]
      %v343 = vld [vmem:[%s210 + $0x2c] sm:$0xf]
      %v344 = vld [vmem:[%s210 + $0x30] sm:$0xf]
      %v345 = vld [vmem:[%s210 + $0x34] sm:$0xf]
      %v346 = vld [vmem:[%s210 + $0x38] sm:$0xf]
      %v347 = vld [vmem:[%s210 + $0x3c] sm:$0xf]
      %v348 = vld [vmem:[%s210 + $0x40] sm:$0xf]
      %v349 = vld [vmem:[%s210 + $0x44] sm:$0xf]
      %v350 = vld [vmem:[%s210 + $0x48] sm:$0xf]
      %v351 = vld [vmem:[%s210 + $0x4c] sm:$0xf]
      %v352 = vld [vmem:[%s210 + $0x50] sm:$0xf]
      %v353 = vld [vmem:[%s210 + $0x54] sm:$0xf]
      %v354 = vld [vmem:[%s210 + $0x58] sm:$0xf]
      %v355 = vld [vmem:[%s210 + $0x5c] sm:$0xf]
      %v356 = vld [vmem:[%s210 + $0x60] sm:$0xf]
      %v357 = vld [vmem:[%s210 + $0x64] sm:$0xf]
      %v358 = vld [vmem:[%s210 + $0x68] sm:$0xf]
      %v359 = vld [vmem:[%s210 + $0x6c] sm:$0xf]
      %v360 = vld [vmem:[%s210 + $0x70] sm:$0xf]
      %v361 = vld [vmem:[%s210 + $0x74] sm:$0xf]
      %v362 = vld [vmem:[%s210 + $0x78] sm:$0xf]
      %v363 = vld [vmem:[%s210 + $0x7c] sm:$0xf]
      %v364 = vld [vmem:[%s216] sm:$0xf]
      %v365 = vld [vmem:[%s216 + $0x4] sm:$0xf]
      %v366 = vld [vmem:[%s216 + $0x8] sm:$0xf]
      %v367 = vld [vmem:[%s216 + $0xc] sm:$0xf]
      %v368 = vld [vmem:[%s216 + $0x10] sm:$0xf]
      %v369 = vld [vmem:[%s216 + $0x14] sm:$0xf]
      %v370 = vld [vmem:[%s216 + $0x18] sm:$0xf]
      %v371 = vld [vmem:[%s216 + $0x1c] sm:$0xf]
      %v372 = vld [vmem:[%s216 + $0x20] sm:$0xf]
      %v373 = vld [vmem:[%s216 + $0x24] sm:$0xf]
      %v374 = vld [vmem:[%s216 + $0x28] sm:$0xf]
      %v375 = vld [vmem:[%s216 + $0x2c] sm:$0xf]
      %v376 = vld [vmem:[%s216 + $0x30] sm:$0xf]
      %v377 = vld [vmem:[%s216 + $0x34] sm:$0xf]
      %v378 = vld [vmem:[%s216 + $0x38] sm:$0xf]
      %v379 = vld [vmem:[%s216 + $0x3c] sm:$0xf]
      %v412 = vunpack.c.l.b16 %v332
      %v413 = vunpack.c.l.b16 %v333
      %v414 = vunpack.c.l.b16 %v334
      %v415 = vunpack.c.l.b16 %v335
      %v416 = vunpack.c.l.b16 %v336
      %v417 = vunpack.c.l.b16 %v337
      %v418 = vunpack.c.l.b16 %v338
      %v419 = vunpack.c.l.b16 %v339
      %v420 = vunpack.c.l.b16 %v340
      %v421 = vunpack.c.l.b16 %v341
      %v422 = vunpack.c.l.b16 %v342
      %v423 = vunpack.c.l.b16 %v343
      %v424 = vunpack.c.l.b16 %v344
      %v425 = vunpack.c.l.b16 %v345
      %v426 = vunpack.c.l.b16 %v346
      %v427 = vunpack.c.l.b16 %v347
      %v428 = vunpack.c.l.b16 %v348
      %v429 = vunpack.c.l.b16 %v349
      %v430 = vunpack.c.l.b16 %v350
      %v431 = vunpack.c.l.b16 %v351
      %v432 = vunpack.c.l.b16 %v352
      %v433 = vunpack.c.l.b16 %v353
      %v434 = vunpack.c.l.b16 %v354
      %v435 = vunpack.c.l.b16 %v355
      %v436 = vunpack.c.l.b16 %v356
      %v437 = vunpack.c.l.b16 %v357
      %v438 = vunpack.c.l.b16 %v358
      %v439 = vunpack.c.l.b16 %v359
      %v440 = vunpack.c.l.b16 %v360
      %v441 = vunpack.c.l.b16 %v361
      %v442 = vunpack.c.l.b16 %v362
      %v443 = vunpack.c.l.b16 %v363
      %v444 = vpack.c.b16 %v413, %v412
      %v445 = vpack.c.b16 %v415, %v414
      %v446 = vpack.c.b16 %v417, %v416
      %v447 = vpack.c.b16 %v419, %v418
      %v448 = vpack.c.b16 %v421, %v420
      %v449 = vpack.c.b16 %v423, %v422
      %v450 = vpack.c.b16 %v425, %v424
      %v451 = vpack.c.b16 %v427, %v426
      %v452 = vpack.c.b16 %v429, %v428
      %v453 = vpack.c.b16 %v431, %v430
      %v454 = vpack.c.b16 %v433, %v432
      %v455 = vpack.c.b16 %v435, %v434
      %v456 = vpack.c.b16 %v437, %v436
      %v457 = vpack.c.b16 %v439, %v438
      %v458 = vpack.c.b16 %v441, %v440
      %v459 = vpack.c.b16 %v443, %v442
      %v476 = vunpack.c.l.b16 %v364
      %v477 = vunpack.c.l.b16 %v365
      %v478 = vunpack.c.l.b16 %v366
      %v479 = vunpack.c.l.b16 %v367
      %v480 = vunpack.c.l.b16 %v368
      %v481 = vunpack.c.l.b16 %v369
      %v482 = vunpack.c.l.b16 %v370
      %v483 = vunpack.c.l.b16 %v371
      %v484 = vunpack.c.l.b16 %v372
      %v485 = vunpack.c.l.b16 %v373
      %v486 = vunpack.c.l.b16 %v374
      %v487 = vunpack.c.l.b16 %v375
      %v488 = vunpack.c.l.b16 %v376
      %v489 = vunpack.c.l.b16 %v377
      %v490 = vunpack.c.l.b16 %v378
      %v491 = vunpack.c.l.b16 %v379
      %v492 = vpack.c.b16 %v477, %v476
      %v493 = vpack.c.b16 %v479, %v478
      %v494 = vpack.c.b16 %v481, %v480
      %v495 = vpack.c.b16 %v483, %v482
      %v496 = vpack.c.b16 %v485, %v484
      %v497 = vpack.c.b16 %v487, %v486
      %v498 = vpack.c.b16 %v489, %v488
      %v499 = vpack.c.b16 %v491, %v490
      %vm500 = vcmask 523264
      %v502 = vsel %vm500, %v444, 0
      %v505 = vsel %vm500, %v445, 0
      %v508 = vsel %vm500, %v446, 0
      %v511 = vsel %vm500, %v447, 0
      %v514 = vsel %vm500, %v448, 0
      %v517 = vsel %vm500, %v449, 0
      %v520 = vsel %vm500, %v450, 0
      %v523 = vsel %vm500, %v451, 0
      %v526 = vsel %vm500, %v452, 0
      %v529 = vsel %vm500, %v453, 0
      %v532 = vsel %vm500, %v454, 0
      %v535 = vsel %vm500, %v455, 0
      %v538 = vsel %vm500, %v456, 0
      %v541 = vsel %vm500, %v457, 0
      %v544 = vsel %vm500, %v458, 0
      %v547 = vsel %vm500, %v459, 0
      %v550 = vsel %vm500, %v492, 0
      %v553 = vsel %vm500, %v493, 0
      %v556 = vsel %vm500, %v494, 0
      %v559 = vsel %vm500, %v495, 0
      %v562 = vsel %vm500, %v496, 0
      %v565 = vsel %vm500, %v497, 0
      %v568 = vsel %vm500, %v498, 0
      %v571 = vsel %vm500, %v499, 0
      %573 = vmatprep.subr.bf16.mxu0 0
      %574 = vmatpush1.bf16.xpose.msra.mxu0 %v550
      %575 = vmatprep.subr.bf16.mxu0 0
      %576 = vmatpush1.bf16.xpose.msra.mxu0 %v553
      %577 = vmatprep.subr.bf16.mxu0 0
      %578 = vmatpush1.bf16.xpose.msra.mxu0 %v556
      %579 = vmatprep.subr.bf16.mxu0 0
      %580 = vmatpush1.bf16.xpose.msra.mxu0 %v559
      %581 = vmatprep.subr.bf16.mxu0 0
      %582 = vmatpush1.bf16.xpose.msra.mxu0 %v562
      %583 = vmatprep.subr.bf16.mxu0 0
      %584 = vmatpush1.bf16.xpose.msra.mxu0 %v565
      %585 = vmatprep.subr.bf16.mxu0 0
      %586 = vmatpush1.bf16.xpose.msra.mxu0 %v568
      %587 = vmatprep.subr.bf16.mxu0 0
      %588 = vmatpush1.bf16.xpose.msra.mxu0 %v571
      %589 = vmatprep.subr.bf16.mxu0 0
      %590 = vmatpush1.bf16.xpose.msra.mxu0 0
      %591 = vmatprep.subr.bf16.mxu0 0
      %592 = vmatpush1.bf16.xpose.msra.mxu0 0
      %593 = vmatprep.subr.bf16.mxu0 0
      %594 = vmatpush1.bf16.xpose.msra.mxu0 0
      %595 = vmatprep.subr.bf16.mxu0 0
      %596 = vmatpush1.bf16.xpose.msra.mxu0 0
      %597 = vmatprep.subr.bf16.mxu0 0
      %598 = vmatpush1.bf16.xpose.msra.mxu0 0
      %599 = vmatprep.subr.bf16.mxu0 0
      %600 = vmatpush1.bf16.xpose.msra.mxu0 0
      %601 = vmatprep.subr.bf16.mxu0 0
      %602 = vmatpush1.bf16.xpose.msra.mxu0 0
      %603 = vmatprep.subr.bf16.mxu0 0
      %604 = vmatpush1.bf16.xpose.msra.mxu0 0
      %605 = vmatprep.mubr.bf16.mxu0 0
      %606 = vmatmul.mubr.bf16.gmra.mrb[0].mxu0 %v502
      %v607 = vpop.f32.mrb[0].mxu0
      %v608 = vadd.f32 0.0, %v607
      %v609 = vpop.f32.mrb[0].mxu0
      %v610 = vpop.f32.mrb[0].mxu0
      %v611 = vadd.f32 0.0, %v610
      %v612 = vpop.f32.mrb[0].mxu0
      %613 = vmatprep.mubr.bf16.mxu0 0
      %614 = vmatmul.mubr.bf16.gmra.mrb[0].mxu0 %v505
      %v615 = vpop.f32.mrb[0].mxu0
      %v616 = vadd.f32 0.0, %v615
      %v617 = vpop.f32.mrb[0].mxu0
      %v618 = vpop.f32.mrb[0].mxu0
      %v619 = vadd.f32 0.0, %v618
      %v620 = vpop.f32.mrb[0].mxu0
      %621 = vmatprep.mubr.bf16.mxu0 0
      %622 = vmatmul.mubr.bf16.gmra.mrb[0].mxu0 %v508
      %v623 = vpop.f32.mrb[0].mxu0
      %v624 = vadd.f32 0.0, %v623
      %v625 = vpop.f32.mrb[0].mxu0
      %v626 = vpop.f32.mrb[0].mxu0
      %v627 = vadd.f32 0.0, %v626
      %v628 = vpop.f32.mrb[0].mxu0
      %629 = vmatprep.mubr.bf16.mxu0 0
      %630 = vmatmul.mubr.bf16.gmra.mrb[0].mxu0 %v511
      %v631 = vpop.f32.mrb[0].mxu0
      %v632 = vadd.f32 0.0, %v631
      %v633 = vpop.f32.mrb[0].mxu0
      %v634 = vpop.f32.mrb[0].mxu0
      %v635 = vadd.f32 0.0, %v634
      %v636 = vpop.f32.mrb[0].mxu0
      %637 = vmatprep.mubr.bf16.mxu0 0
      %638 = vmatmul.mubr.bf16.gmra.mrb[0].mxu0 %v514
      %v639 = vpop.f32.mrb[0].mxu0
      %v640 = vadd.f32 0.0, %v639
      %v641 = vpop.f32.mrb[0].mxu0
      %v642 = vpop.f32.mrb[0].mxu0
      %v643 = vadd.f32 0.0, %v642
      %v644 = vpop.f32.mrb[0].mxu0
      %645 = vmatprep.mubr.bf16.mxu0 0
      %646 = vmatmul.mubr.bf16.gmra.mrb[0].mxu0 %v517
      %v647 = vpop.f32.mrb[0].mxu0
      %v648 = vadd.f32 0.0, %v647
      %v649 = vpop.f32.mrb[0].mxu0
      %v650 = vpop.f32.mrb[0].mxu0
      %v651 = vadd.f32 0.0, %v650
      %v652 = vpop.f32.mrb[0].mxu0
      %653 = vmatprep.mubr.bf16.mxu0 0
      %654 = vmatmul.mubr.bf16.gmra.mrb[0].mxu0 %v520
      %v655 = vpop.f32.mrb[0].mxu0
      %v656 = vadd.f32 0.0, %v655
      %v657 = vpop.f32.mrb[0].mxu0
      %v658 = vpop.f32.mrb[0].mxu0
      %v659 = vadd.f32 0.0, %v658
      %v660 = vpop.f32.mrb[0].mxu0
      %661 = vmatprep.mubr.bf16.mxu0 0
      %662 = vmatmul.mubr.bf16.gmra.mrb[0].mxu0 %v523
      %v663 = vpop.f32.mrb[0].mxu0
      %v664 = vadd.f32 0.0, %v663
      %v665 = vpop.f32.mrb[0].mxu0
      %v666 = vpop.f32.mrb[0].mxu0
      %v667 = vadd.f32 0.0, %v666
      %v668 = vpop.f32.mrb[0].mxu0
      %669 = vmatprep.mubr.bf16.mxu0 0
      %670 = vmatmul.mubr.bf16.gmra.mrb[0].mxu0 %v526
      %v671 = vpop.f32.mrb[0].mxu0
      %v672 = vadd.f32 0.0, %v671
      %v673 = vpop.f32.mrb[0].mxu0
      %v674 = vpop.f32.mrb[0].mxu0
      %v675 = vadd.f32 0.0, %v674
      %v676 = vpop.f32.mrb[0].mxu0
      %677 = vmatprep.mubr.bf16.mxu0 0
      %678 = vmatmul.mubr.bf16.gmra.mrb[0].mxu0 %v529
      %v679 = vpop.f32.mrb[0].mxu0
      %v680 = vadd.f32 0.0, %v679
      %v681 = vpop.f32.mrb[0].mxu0
      %v682 = vpop.f32.mrb[0].mxu0
      %v683 = vadd.f32 0.0, %v682
      %v684 = vpop.f32.mrb[0].mxu0
      %685 = vmatprep.mubr.bf16.mxu0 0
      %686 = vmatmul.mubr.bf16.gmra.mrb[0].mxu0 %v532
      %v687 = vpop.f32.mrb[0].mxu0
      %v688 = vadd.f32 0.0, %v687
      %v689 = vpop.f32.mrb[0].mxu0
      %v690 = vpop.f32.mrb[0].mxu0
      %v691 = vadd.f32 0.0, %v690
      %v692 = vpop.f32.mrb[0].mxu0
      %693 = vmatprep.mubr.bf16.mxu0 0
      %694 = vmatmul.mubr.bf16.gmra.mrb[0].mxu0 %v535
      %v695 = vpop.f32.mrb[0].mxu0
      %v696 = vadd.f32 0.0, %v695
      %v697 = vpop.f32.mrb[0].mxu0
      %v698 = vpop.f32.mrb[0].mxu0
      %v699 = vadd.f32 0.0, %v698
      %v700 = vpop.f32.mrb[0].mxu0
      %701 = vmatprep.mubr.bf16.mxu0 0
      %702 = vmatmul.mubr.bf16.gmra.mrb[0].mxu0 %v538
      %v703 = vpop.f32.mrb[0].mxu0
      %v704 = vadd.f32 0.0, %v703
      %v705 = vpop.f32.mrb[0].mxu0
      %v706 = vpop.f32.mrb[0].mxu0
      %v707 = vadd.f32 0.0, %v706
      %v708 = vpop.f32.mrb[0].mxu0
      %709 = vmatprep.mubr.bf16.mxu0 0
      %710 = vmatmul.mubr.bf16.gmra.mrb[0].mxu0 %v541
      %v711 = vpop.f32.mrb[0].mxu0
      %v712 = vadd.f32 0.0, %v711
      %v713 = vpop.f32.mrb[0].mxu0
      %v714 = vpop.f32.mrb[0].mxu0
      %v715 = vadd.f32 0.0, %v714
      %v716 = vpop.f32.mrb[0].mxu0
      %717 = vmatprep.mubr.bf16.mxu0 0
      %718 = vmatmul.mubr.bf16.gmra.mrb[0].mxu0 %v544
      %v719 = vpop.f32.mrb[0].mxu0
      %v720 = vadd.f32 0.0, %v719
      %v721 = vpop.f32.mrb[0].mxu0
      %v722 = vpop.f32.mrb[0].mxu0
      %v723 = vadd.f32 0.0, %v722
      %v724 = vpop.f32.mrb[0].mxu0
      %725 = vmatprep.mubr.bf16.mxu0 0
      %726 = vmatmul.mubr.bf16.gmra.mrb[0].mxu0 %v547
      %v727 = vpop.f32.mrb[0].mxu0
      %v728 = vadd.f32 0.0, %v727
      %v729 = vpop.f32.mrb[0].mxu0
      %v730 = vpop.f32.mrb[0].mxu0
      %v731 = vadd.f32 0.0, %v730
      %v732 = vpop.f32.mrb[0].mxu0
      %733 = vdwg.mxu0
      %v734 = vmax.f32 %v608, -0.9999999
      %v735 = vmax.f32 %v611, -0.9999999
      %v736 = vmax.f32 %v616, -0.9999999
      %v737 = vmax.f32 %v619, -0.9999999
      %v738 = vmax.f32 %v624, -0.9999999
      %v739 = vmax.f32 %v627, -0.9999999
      %v740 = vmax.f32 %v632, -0.9999999
      %v741 = vmax.f32 %v635, -0.9999999
      %v742 = vmax.f32 %v640, -0.9999999
      %v743 = vmax.f32 %v643, -0.9999999
      %v744 = vmax.f32 %v648, -0.9999999
      %v745 = vmax.f32 %v651, -0.9999999
      %v746 = vmax.f32 %v656, -0.9999999
      %v747 = vmax.f32 %v659, -0.9999999
      %v748 = vmax.f32 %v664, -0.9999999
      %v749 = vmax.f32 %v667, -0.9999999
      %v750 = vmax.f32 %v672, -0.9999999
      %v751 = vmax.f32 %v675, -0.9999999
      %v752 = vmax.f32 %v680, -0.9999999
      %v753 = vmax.f32 %v683, -0.9999999
      %v754 = vmax.f32 %v688, -0.9999999
      %v755 = vmax.f32 %v691, -0.9999999
      %v756 = vmax.f32 %v696, -0.9999999
      %v757 = vmax.f32 %v699, -0.9999999
      %v758 = vmax.f32 %v704, -0.9999999
      %v759 = vmax.f32 %v707, -0.9999999
      %v760 = vmax.f32 %v712, -0.9999999
      %v761 = vmax.f32 %v715, -0.9999999
      %v762 = vmax.f32 %v720, -0.9999999
      %v763 = vmax.f32 %v723, -0.9999999
      %v764 = vmax.f32 %v728, -0.9999999
      %v765 = vmax.f32 %v731, -0.9999999
      %v766 = vmin.f32 %v734, 0.9999999
      %v767 = vmin.f32 %v735, 0.9999999
      %v768 = vmin.f32 %v736, 0.9999999
      %v769 = vmin.f32 %v737, 0.9999999
      %v770 = vmin.f32 %v738, 0.9999999
      %v771 = vmin.f32 %v739, 0.9999999
      %v772 = vmin.f32 %v740, 0.9999999
      %v773 = vmin.f32 %v741, 0.9999999
      %v774 = vmin.f32 %v742, 0.9999999
      %v775 = vmin.f32 %v743, 0.9999999
      %v776 = vmin.f32 %v744, 0.9999999
      %v777 = vmin.f32 %v745, 0.9999999
      %v778 = vmin.f32 %v746, 0.9999999
      %v779 = vmin.f32 %v747, 0.9999999
      %v780 = vmin.f32 %v748, 0.9999999
      %v781 = vmin.f32 %v749, 0.9999999
      %v782 = vmin.f32 %v750, 0.9999999
      %v783 = vmin.f32 %v751, 0.9999999
      %v784 = vmin.f32 %v752, 0.9999999
      %v785 = vmin.f32 %v753, 0.9999999
      %v786 = vmin.f32 %v754, 0.9999999
      %v787 = vmin.f32 %v755, 0.9999999
      %v788 = vmin.f32 %v756, 0.9999999
      %v789 = vmin.f32 %v757, 0.9999999
      %v790 = vmin.f32 %v758, 0.9999999
      %v791 = vmin.f32 %v759, 0.9999999
      %v792 = vmin.f32 %v760, 0.9999999
      %v793 = vmin.f32 %v761, 0.9999999
      %v794 = vmin.f32 %v762, 0.9999999
      %v795 = vmin.f32 %v763, 0.9999999
      %v796 = vmin.f32 %v764, 0.9999999
      %v797 = vmin.f32 %v765, 0.9999999
      %v798 = vmul.f32 %v766, %v766
      %v799 = vmul.f32 %v767, %v767
      %v800 = vmul.f32 %v768, %v768
      %v801 = vmul.f32 %v769, %v769
      %v802 = vmul.f32 %v770, %v770
      %v803 = vmul.f32 %v771, %v771
      %v804 = vmul.f32 %v772, %v772
      %v805 = vmul.f32 %v773, %v773
      %v806 = vmul.f32 %v774, %v774
      %v807 = vmul.f32 %v775, %v775
      %v808 = vmul.f32 %v776, %v776
      %v809 = vmul.f32 %v777, %v777
      %v810 = vmul.f32 %v778, %v778
      %v811 = vmul.f32 %v779, %v779
      %v812 = vmul.f32 %v780, %v780
      %v813 = vmul.f32 %v781, %v781
      %v814 = vmul.f32 %v782, %v782
      %v815 = vmul.f32 %v783, %v783
      %v816 = vmul.f32 %v784, %v784
      %v817 = vmul.f32 %v785, %v785
      %v818 = vmul.f32 %v786, %v786
      %v819 = vmul.f32 %v787, %v787
      %v820 = vmul.f32 %v788, %v788
      %v821 = vmul.f32 %v789, %v789
      %v822 = vmul.f32 %v790, %v790
      %v823 = vmul.f32 %v791, %v791
      %v824 = vmul.f32 %v792, %v792
      %v825 = vmul.f32 %v793, %v793
      %v826 = vmul.f32 %v794, %v794
      %v827 = vmul.f32 %v795, %v795
      %v828 = vmul.f32 %v796, %v796
      %v829 = vmul.f32 %v797, %v797
      %v830 = vsub.f32 1.0, %v798
      %v831 = vsub.f32 1.0, %v799
      %v832 = vsub.f32 1.0, %v800
      %v833 = vsub.f32 1.0, %v801
      %v834 = vsub.f32 1.0, %v802
      %v835 = vsub.f32 1.0, %v803
      %v836 = vsub.f32 1.0, %v804
      %v837 = vsub.f32 1.0, %v805
      %v838 = vsub.f32 1.0, %v806
      %v839 = vsub.f32 1.0, %v807
      %v840 = vsub.f32 1.0, %v808
      %v841 = vsub.f32 1.0, %v809
      %v842 = vsub.f32 1.0, %v810
      %v843 = vsub.f32 1.0, %v811
      %v844 = vsub.f32 1.0, %v812
      %v845 = vsub.f32 1.0, %v813
      %v846 = vsub.f32 1.0, %v814
      %v847 = vsub.f32 1.0, %v815
      %v848 = vsub.f32 1.0, %v816
      %v849 = vsub.f32 1.0, %v817
      %v850 = vsub.f32 1.0, %v818
      %v851 = vsub.f32 1.0, %v819
      %v852 = vsub.f32 1.0, %v820
      %v853 = vsub.f32 1.0, %v821
      %v854 = vsub.f32 1.0, %v822
      %v855 = vsub.f32 1.0, %v823
      %v856 = vsub.f32 1.0, %v824
      %v857 = vsub.f32 1.0, %v825
      %v858 = vsub.f32 1.0, %v826
      %v859 = vsub.f32 1.0, %v827
      %v860 = vsub.f32 1.0, %v828
      %v861 = vsub.f32 1.0, %v829
      %v862 = vrsqrt.pop %v830
      %v863 = vmul.f32 %v830, %v862
      %vm864 = vcmp.eq.f32.partialorder %v830, inf
      %v865 = vsel %vm864, %v830, %v863
      %vm866 = vcmp.eq.f32.partialorder %v830, 0.0
      %v867 = vand.u32 %v830, 2147483648
      %v868 = vsel %vm866, %v867, %v865
      %v869 = vrsqrt.pop %v831
      %v870 = vmul.f32 %v831, %v869
      %vm871 = vcmp.eq.f32.partialorder %v831, inf
      %v872 = vsel %vm871, %v831, %v870
      %vm873 = vcmp.eq.f32.partialorder %v831, 0.0
      %v874 = vand.u32 %v831, 2147483648
      %v875 = vsel %vm873, %v874, %v872
      %v876 = vrsqrt.pop %v832
      %v877 = vmul.f32 %v832, %v876
      %vm878 = vcmp.eq.f32.partialorder %v832, inf
      %v879 = vsel %vm878, %v832, %v877
      %vm880 = vcmp.eq.f32.partialorder %v832, 0.0
      %v881 = vand.u32 %v832, 2147483648
      %v882 = vsel %vm880, %v881, %v879
      %v883 = vrsqrt.pop %v833
      %v884 = vmul.f32 %v833, %v883
      %vm885 = vcmp.eq.f32.partialorder %v833, inf
      %v886 = vsel %vm885, %v833, %v884
      %vm887 = vcmp.eq.f32.partialorder %v833, 0.0
      %v888 = vand.u32 %v833, 2147483648
      %v889 = vsel %vm887, %v888, %v886
      %v890 = vrsqrt.pop %v834
      %v891 = vmul.f32 %v834, %v890
      %vm892 = vcmp.eq.f32.partialorder %v834, inf
      %v893 = vsel %vm892, %v834, %v891
      %vm894 = vcmp.eq.f32.partialorder %v834, 0.0
      %v895 = vand.u32 %v834, 2147483648
      %v896 = vsel %vm894, %v895, %v893
      %v897 = vrsqrt.pop %v835
      %v898 = vmul.f32 %v835, %v897
      %vm899 = vcmp.eq.f32.partialorder %v835, inf
      %v900 = vsel %vm899, %v835, %v898
      %vm901 = vcmp.eq.f32.partialorder %v835, 0.0
      %v902 = vand.u32 %v835, 2147483648
      %v903 = vsel %vm901, %v902, %v900
      %v904 = vrsqrt.pop %v836
      %v905 = vmul.f32 %v836, %v904
      %vm906 = vcmp.eq.f32.partialorder %v836, inf
      %v907 = vsel %vm906, %v836, %v905
      %vm908 = vcmp.eq.f32.partialorder %v836, 0.0
      %v909 = vand.u32 %v836, 2147483648
      %v910 = vsel %vm908, %v909, %v907
      %v911 = vrsqrt.pop %v837
      %v912 = vmul.f32 %v837, %v911
      %vm913 = vcmp.eq.f32.partialorder %v837, inf
      %v914 = vsel %vm913, %v837, %v912
      %vm915 = vcmp.eq.f32.partialorder %v837, 0.0
      %v916 = vand.u32 %v837, 2147483648
      %v917 = vsel %vm915, %v916, %v914
      %v918 = vrsqrt.pop %v838
      %v919 = vmul.f32 %v838, %v918
      %vm920 = vcmp.eq.f32.partialorder %v838, inf
      %v921 = vsel %vm920, %v838, %v919
      %vm922 = vcmp.eq.f32.partialorder %v838, 0.0
      %v923 = vand.u32 %v838, 2147483648
      %v924 = vsel %vm922, %v923, %v921
      %v925 = vrsqrt.pop %v839
      %v926 = vmul.f32 %v839, %v925
      %vm927 = vcmp.eq.f32.partialorder %v839, inf
      %v928 = vsel %vm927, %v839, %v926
      %vm929 = vcmp.eq.f32.partialorder %v839, 0.0
      %v930 = vand.u32 %v839, 2147483648
      %v931 = vsel %vm929, %v930, %v928
      %v932 = vrsqrt.pop %v840
      %v933 = vmul.f32 %v840, %v932
      %vm934 = vcmp.eq.f32.partialorder %v840, inf
      %v935 = vsel %vm934, %v840, %v933
      %vm936 = vcmp.eq.f32.partialorder %v840, 0.0
      %v937 = vand.u32 %v840, 2147483648
      %v938 = vsel %vm936, %v937, %v935
      %v939 = vrsqrt.pop %v841
      %v940 = vmul.f32 %v841, %v939
      %vm941 = vcmp.eq.f32.partialorder %v841, inf
      %v942 = vsel %vm941, %v841, %v940
      %vm943 = vcmp.eq.f32.partialorder %v841, 0.0
      %v944 = vand.u32 %v841, 2147483648
      %v945 = vsel %vm943, %v944, %v942
      %v946 = vrsqrt.pop %v842
      %v947 = vmul.f32 %v842, %v946
      %vm948 = vcmp.eq.f32.partialorder %v842, inf
      %v949 = vsel %vm948, %v842, %v947
      %vm950 = vcmp.eq.f32.partialorder %v842, 0.0
      %v951 = vand.u32 %v842, 2147483648
      %v952 = vsel %vm950, %v951, %v949
      %v953 = vrsqrt.pop %v843
      %v954 = vmul.f32 %v843, %v953
      %vm955 = vcmp.eq.f32.partialorder %v843, inf
      %v956 = vsel %vm955, %v843, %v954
      %vm957 = vcmp.eq.f32.partialorder %v843, 0.0
      %v958 = vand.u32 %v843, 2147483648
      %v959 = vsel %vm957, %v958, %v956
      %v960 = vrsqrt.pop %v844
      %v961 = vmul.f32 %v844, %v960
      %vm962 = vcmp.eq.f32.partialorder %v844, inf
      %v963 = vsel %vm962, %v844, %v961
      %vm964 = vcmp.eq.f32.partialorder %v844, 0.0
      %v965 = vand.u32 %v844, 2147483648
      %v966 = vsel %vm964, %v965, %v963
      %v967 = vrsqrt.pop %v845
      %v968 = vmul.f32 %v845, %v967
      %vm969 = vcmp.eq.f32.partialorder %v845, inf
      %v970 = vsel %vm969, %v845, %v968
      %vm971 = vcmp.eq.f32.partialorder %v845, 0.0
      %v972 = vand.u32 %v845, 2147483648
      %v973 = vsel %vm971, %v972, %v970
      %v974 = vrsqrt.pop %v846
      %v975 = vmul.f32 %v846, %v974
      %vm976 = vcmp.eq.f32.partialorder %v846, inf
      %v977 = vsel %vm976, %v846, %v975
      %vm978 = vcmp.eq.f32.partialorder %v846, 0.0
      %v979 = vand.u32 %v846, 2147483648
      %v980 = vsel %vm978, %v979, %v977
      %v981 = vrsqrt.pop %v847
      %v982 = vmul.f32 %v847, %v981
      %vm983 = vcmp.eq.f32.partialorder %v847, inf
      %v984 = vsel %vm983, %v847, %v982
      %vm985 = vcmp.eq.f32.partialorder %v847, 0.0
      %v986 = vand.u32 %v847, 2147483648
      %v987 = vsel %vm985, %v986, %v984
      %v988 = vrsqrt.pop %v848
      %v989 = vmul.f32 %v848, %v988
      %vm990 = vcmp.eq.f32.partialorder %v848, inf
      %v991 = vsel %vm990, %v848, %v989
      %vm992 = vcmp.eq.f32.partialorder %v848, 0.0
      %v993 = vand.u32 %v848, 2147483648
      %v994 = vsel %vm992, %v993, %v991
      %v995 = vrsqrt.pop %v849
      %v996 = vmul.f32 %v849, %v995
      %vm997 = vcmp.eq.f32.partialorder %v849, inf
      %v998 = vsel %vm997, %v849, %v996
      %vm999 = vcmp.eq.f32.partialorder %v849, 0.0
      %v1000 = vand.u32 %v849, 2147483648
      %v1001 = vsel %vm999, %v1000, %v998
      %v1002 = vrsqrt.pop %v850
      %v1003 = vmul.f32 %v850, %v1002
      %vm1004 = vcmp.eq.f32.partialorder %v850, inf
      %v1005 = vsel %vm1004, %v850, %v1003
      %vm1006 = vcmp.eq.f32.partialorder %v850, 0.0
      %v1007 = vand.u32 %v850, 2147483648
      %v1008 = vsel %vm1006, %v1007, %v1005
      %v1009 = vrsqrt.pop %v851
      %v1010 = vmul.f32 %v851, %v1009
      %vm1011 = vcmp.eq.f32.partialorder %v851, inf
      %v1012 = vsel %vm1011, %v851, %v1010
      %vm1013 = vcmp.eq.f32.partialorder %v851, 0.0
      %v1014 = vand.u32 %v851, 2147483648
      %v1015 = vsel %vm1013, %v1014, %v1012
      %v1016 = vrsqrt.pop %v852
      %v1017 = vmul.f32 %v852, %v1016
      %vm1018 = vcmp.eq.f32.partialorder %v852, inf
      %v1019 = vsel %vm1018, %v852, %v1017
      %vm1020 = vcmp.eq.f32.partialorder %v852, 0.0
      %v1021 = vand.u32 %v852, 2147483648
      %v1022 = vsel %vm1020, %v1021, %v1019
      %v1023 = vrsqrt.pop %v853
      %v1024 = vmul.f32 %v853, %v1023
      %vm1025 = vcmp.eq.f32.partialorder %v853, inf
      %v1026 = vsel %vm1025, %v853, %v1024
      %vm1027 = vcmp.eq.f32.partialorder %v853, 0.0
      %v1028 = vand.u32 %v853, 2147483648
      %v1029 = vsel %vm1027, %v1028, %v1026
      %v1030 = vrsqrt.pop %v854
      %v1031 = vmul.f32 %v854, %v1030
      %vm1032 = vcmp.eq.f32.partialorder %v854, inf
      %v1033 = vsel %vm1032, %v854, %v1031
      %vm1034 = vcmp.eq.f32.partialorder %v854, 0.0
      %v1035 = vand.u32 %v854, 2147483648
      %v1036 = vsel %vm1034, %v1035, %v1033
      %v1037 = vrsqrt.pop %v855
      %v1038 = vmul.f32 %v855, %v1037
      %vm1039 = vcmp.eq.f32.partialorder %v855, inf
      %v1040 = vsel %vm1039, %v855, %v1038
      %vm1041 = vcmp.eq.f32.partialorder %v855, 0.0
      %v1042 = vand.u32 %v855, 2147483648
      %v1043 = vsel %vm1041, %v1042, %v1040
      %v1044 = vrsqrt.pop %v856
      %v1045 = vmul.f32 %v856, %v1044
      %vm1046 = vcmp.eq.f32.partialorder %v856, inf
      %v1047 = vsel %vm1046, %v856, %v1045
      %vm1048 = vcmp.eq.f32.partialorder %v856, 0.0
      %v1049 = vand.u32 %v856, 2147483648
      %v1050 = vsel %vm1048, %v1049, %v1047
      %v1051 = vrsqrt.pop %v857
      %v1052 = vmul.f32 %v857, %v1051
      %vm1053 = vcmp.eq.f32.partialorder %v857, inf
      %v1054 = vsel %vm1053, %v857, %v1052
      %vm1055 = vcmp.eq.f32.partialorder %v857, 0.0
      %v1056 = vand.u32 %v857, 2147483648
      %v1057 = vsel %vm1055, %v1056, %v1054
      %v1058 = vrsqrt.pop %v858
      %v1059 = vmul.f32 %v858, %v1058
      %vm1060 = vcmp.eq.f32.partialorder %v858, inf
      %v1061 = vsel %vm1060, %v858, %v1059
      %vm1062 = vcmp.eq.f32.partialorder %v858, 0.0
      %v1063 = vand.u32 %v858, 2147483648
      %v1064 = vsel %vm1062, %v1063, %v1061
      %v1065 = vrsqrt.pop %v859
      %v1066 = vmul.f32 %v859, %v1065
      %vm1067 = vcmp.eq.f32.partialorder %v859, inf
      %v1068 = vsel %vm1067, %v859, %v1066
      %vm1069 = vcmp.eq.f32.partialorder %v859, 0.0
      %v1070 = vand.u32 %v859, 2147483648
      %v1071 = vsel %vm1069, %v1070, %v1068
      %v1072 = vrsqrt.pop %v860
      %v1073 = vmul.f32 %v860, %v1072
      %vm1074 = vcmp.eq.f32.partialorder %v860, inf
      %v1075 = vsel %vm1074, %v860, %v1073
      %vm1076 = vcmp.eq.f32.partialorder %v860, 0.0
      %v1077 = vand.u32 %v860, 2147483648
      %v1078 = vsel %vm1076, %v1077, %v1075
      %v1079 = vrsqrt.pop %v861
      %v1080 = vmul.f32 %v861, %v1079
      %vm1081 = vcmp.eq.f32.partialorder %v861, inf
      %v1082 = vsel %vm1081, %v861, %v1080
      %vm1083 = vcmp.eq.f32.partialorder %v861, 0.0
      %v1084 = vand.u32 %v861, 2147483648
      %v1085 = vsel %vm1083, %v1084, %v1082
      %v1086 = vmul.f32 %v868, -56.165283
      %v1087 = vmul.f32 %v875, -56.165283
      %v1088 = vmul.f32 %v882, -56.165283
      %v1089 = vmul.f32 %v889, -56.165283
      %v1090 = vmul.f32 %v896, -56.165283
      %v1091 = vmul.f32 %v903, -56.165283
      %v1092 = vmul.f32 %v910, -56.165283
      %v1093 = vmul.f32 %v917, -56.165283
      %v1094 = vmul.f32 %v924, -56.165283
      %v1095 = vmul.f32 %v931, -56.165283
      %v1096 = vmul.f32 %v938, -56.165283
      %v1097 = vmul.f32 %v945, -56.165283
      %v1098 = vmul.f32 %v952, -56.165283
      %v1099 = vmul.f32 %v959, -56.165283
      %v1100 = vmul.f32 %v966, -56.165283
      %v1101 = vmul.f32 %v973, -56.165283
      %v1102 = vmul.f32 %v980, -56.165283
      %v1103 = vmul.f32 %v987, -56.165283
      %v1104 = vmul.f32 %v994, -56.165283
      %v1105 = vmul.f32 %v1001, -56.165283
      %v1106 = vmul.f32 %v1008, -56.165283
      %v1107 = vmul.f32 %v1015, -56.165283
      %v1108 = vmul.f32 %v1022, -56.165283
      %v1109 = vmul.f32 %v1029, -56.165283
      %v1110 = vmul.f32 %v1036, -56.165283
      %v1111 = vmul.f32 %v1043, -56.165283
      %v1112 = vmul.f32 %v1050, -56.165283
      %v1113 = vmul.f32 %v1057, -56.165283
      %v1114 = vmul.f32 %v1064, -56.165283
      %v1115 = vmul.f32 %v1071, -56.165283
      %v1116 = vmul.f32 %v1078, -56.165283
      %v1117 = vmul.f32 %v1085, -56.165283
      %v1118 = vmul.f32 %v766, -30.683235
      %v1119 = vmul.f32 %v767, -30.683235
      %v1120 = vmul.f32 %v768, -30.683235
      %v1121 = vmul.f32 %v769, -30.683235
      %v1122 = vmul.f32 %v770, -30.683235
      %v1123 = vmul.f32 %v771, -30.683235
      %v1124 = vmul.f32 %v772, -30.683235
      %v1125 = vmul.f32 %v773, -30.683235
      %v1126 = vmul.f32 %v774, -30.683235
      %v1127 = vmul.f32 %v775, -30.683235
      %v1128 = vmul.f32 %v776, -30.683235
      %v1129 = vmul.f32 %v777, -30.683235
      %v1130 = vmul.f32 %v778, -30.683235
      %v1131 = vmul.f32 %v779, -30.683235
      %v1132 = vmul.f32 %v780, -30.683235
      %v1133 = vmul.f32 %v781, -30.683235
      %v1134 = vmul.f32 %v782, -30.683235
      %v1135 = vmul.f32 %v783, -30.683235
      %v1136 = vmul.f32 %v784, -30.683235
      %v1137 = vmul.f32 %v785, -30.683235
      %v1138 = vmul.f32 %v786, -30.683235
      %v1139 = vmul.f32 %v787, -30.683235
      %v1140 = vmul.f32 %v788, -30.683235
      %v1141 = vmul.f32 %v789, -30.683235
      %v1142 = vmul.f32 %v790, -30.683235
      %v1143 = vmul.f32 %v791, -30.683235
      %v1144 = vmul.f32 %v792, -30.683235
      %v1145 = vmul.f32 %v793, -30.683235
      %v1146 = vmul.f32 %v794, -30.683235
      %v1147 = vmul.f32 %v795, -30.683235
      %v1148 = vmul.f32 %v796, -30.683235
      %v1149 = vmul.f32 %v797, -30.683235
      %v1150 = vadd.f32 %v1086, %v1118
      %v1151 = vadd.f32 %v1087, %v1119
      %v1152 = vadd.f32 %v1088, %v1120
      %v1153 = vadd.f32 %v1089, %v1121
      %v1154 = vadd.f32 %v1090, %v1122
      %v1155 = vadd.f32 %v1091, %v1123
      %v1156 = vadd.f32 %v1092, %v1124
      %v1157 = vadd.f32 %v1093, %v1125
      %v1158 = vadd.f32 %v1094, %v1126
      %v1159 = vadd.f32 %v1095, %v1127
      %v1160 = vadd.f32 %v1096, %v1128
      %v1161 = vadd.f32 %v1097, %v1129
      %v1162 = vadd.f32 %v1098, %v1130
      %v1163 = vadd.f32 %v1099, %v1131
      %v1164 = vadd.f32 %v1100, %v1132
      %v1165 = vadd.f32 %v1101, %v1133
      %v1166 = vadd.f32 %v1102, %v1134
      %v1167 = vadd.f32 %v1103, %v1135
      %v1168 = vadd.f32 %v1104, %v1136
      %v1169 = vadd.f32 %v1105, %v1137
      %v1170 = vadd.f32 %v1106, %v1138
      %v1171 = vadd.f32 %v1107, %v1139
      %v1172 = vadd.f32 %v1108, %v1140
      %v1173 = vadd.f32 %v1109, %v1141
      %v1174 = vadd.f32 %v1110, %v1142
      %v1175 = vadd.f32 %v1111, %v1143
      %v1176 = vadd.f32 %v1112, %v1144
      %v1177 = vadd.f32 %v1113, %v1145
      %v1178 = vadd.f32 %v1114, %v1146
      %v1179 = vadd.f32 %v1115, %v1147
      %v1180 = vadd.f32 %v1116, %v1148
      %v1181 = vadd.f32 %v1117, %v1149
      %v1182 = vmul.f32 %v766, %v1150
      %v1183 = vmul.f32 %v767, %v1151
      %v1184 = vmul.f32 %v768, %v1152
      %v1185 = vmul.f32 %v769, %v1153
      %v1186 = vmul.f32 %v770, %v1154
      %v1187 = vmul.f32 %v771, %v1155
      %v1188 = vmul.f32 %v772, %v1156
      %v1189 = vmul.f32 %v773, %v1157
      %v1190 = vmul.f32 %v774, %v1158
      %v1191 = vmul.f32 %v775, %v1159
      %v1192 = vmul.f32 %v776, %v1160
      %v1193 = vmul.f32 %v777, %v1161
      %v1194 = vmul.f32 %v778, %v1162
      %v1195 = vmul.f32 %v779, %v1163
      %v1196 = vmul.f32 %v780, %v1164
      %v1197 = vmul.f32 %v781, %v1165
      %v1198 = vmul.f32 %v782, %v1166
      %v1199 = vmul.f32 %v783, %v1167
      %v1200 = vmul.f32 %v784, %v1168
      %v1201 = vmul.f32 %v785, %v1169
      %v1202 = vmul.f32 %v786, %v1170
      %v1203 = vmul.f32 %v787, %v1171
      %v1204 = vmul.f32 %v788, %v1172
      %v1205 = vmul.f32 %v789, %v1173
      %v1206 = vmul.f32 %v790, %v1174
      %v1207 = vmul.f32 %v791, %v1175
      %v1208 = vmul.f32 %v792, %v1176
      %v1209 = vmul.f32 %v793, %v1177
      %v1210 = vmul.f32 %v794, %v1178
      %v1211 = vmul.f32 %v795, %v1179
      %v1212 = vmul.f32 %v796, %v1180
      %v1213 = vmul.f32 %v797, %v1181
      %v1214 = vlaneseq
      %v1215 = vand.u32 %v1214, 127
      %v1216 = vld [vmem:[%s222] sm:$0xff]
      %v1217 = vld [vmem:[%s222 + $0x8] sm:$0xff]
      %v1218 = vld [vmem:[%s222 + $0x10] sm:$0xff]
      %v1219 = vld [vmem:[%s222 + $0x18] sm:$0xff]
      %v1220 = vld [vmem:[%s222 + $0x20] sm:$0xff]
      %v1221 = vld [vmem:[%s222 + $0x28] sm:$0xff]
      %v1222 = vld [vmem:[%s222 + $0x30] sm:$0xff]
      %v1223 = vld [vmem:[%s222 + $0x38] sm:$0xff]
      %v1224 = vld [vmem:[%s222 + $0x40] sm:$0xff]
      %v1225 = vld [vmem:[%s222 + $0x48] sm:$0xff]
      %v1226 = vld [vmem:[%s222 + $0x50] sm:$0xff]
      %v1227 = vld [vmem:[%s222 + $0x58] sm:$0xff]
      %v1228 = vld [vmem:[%s222 + $0x60] sm:$0xff]
      %v1229 = vld [vmem:[%s222 + $0x68] sm:$0xff]
      %v1230 = vld [vmem:[%s222 + $0x70] sm:$0xff]
      %v1231 = vld [vmem:[%s222 + $0x78] sm:$0xff]
      %v1232 = vld [vmem:[%s222 + $0x80] sm:$0xff]
      %v1233 = vld [vmem:[%s222 + $0x88] sm:$0xff]
      %v1234 = vld [vmem:[%s222 + $0x90] sm:$0xff]
      %v1235 = vld [vmem:[%s222 + $0x98] sm:$0xff]
      %v1236 = vld [vmem:[%s222 + $0xa0] sm:$0xff]
      %v1237 = vld [vmem:[%s222 + $0xa8] sm:$0xff]
      %v1238 = vld [vmem:[%s222 + $0xb0] sm:$0xff]
      %v1239 = vld [vmem:[%s222 + $0xb8] sm:$0xff]
      %v1240 = vld [vmem:[%s222 + $0xc0] sm:$0xff]
      %v1241 = vld [vmem:[%s222 + $0xc8] sm:$0xff]
      %v1242 = vld [vmem:[%s222 + $0xd0] sm:$0xff]
      %v1243 = vld [vmem:[%s222 + $0xd8] sm:$0xff]
      %v1244 = vld [vmem:[%s222 + $0xe0] sm:$0xff]
      %v1245 = vld [vmem:[%s222 + $0xe8] sm:$0xff]
      %v1246 = vld [vmem:[%s222 + $0xf0] sm:$0xff]
      %v1247 = vld [vmem:[%s222 + $0xf8] sm:$0xff]
      %s1248 = smul.u32 %s19, 128
      %v1249 = vstv %s1248
      %v1250 = vsub.s32 %v1216, %v1249
      %v1251 = vsub.s32 %v1217, %v1249
      %v1252 = vsub.s32 %v1218, %v1249
      %v1253 = vsub.s32 %v1219, %v1249
      %v1254 = vsub.s32 %v1220, %v1249
      %v1255 = vsub.s32 %v1221, %v1249
      %v1256 = vsub.s32 %v1222, %v1249
      %v1257 = vsub.s32 %v1223, %v1249
      %v1258 = vsub.s32 %v1224, %v1249
      %v1259 = vsub.s32 %v1225, %v1249
      %v1260 = vsub.s32 %v1226, %v1249
      %v1261 = vsub.s32 %v1227, %v1249
      %v1262 = vsub.s32 %v1228, %v1249
      %v1263 = vsub.s32 %v1229, %v1249
      %v1264 = vsub.s32 %v1230, %v1249
      %v1265 = vsub.s32 %v1231, %v1249
      %v1266 = vsub.s32 %v1232, %v1249
      %v1267 = vsub.s32 %v1233, %v1249
      %v1268 = vsub.s32 %v1234, %v1249
      %v1269 = vsub.s32 %v1235, %v1249
      %v1270 = vsub.s32 %v1236, %v1249
      %v1271 = vsub.s32 %v1237, %v1249
      %v1272 = vsub.s32 %v1238, %v1249
      %v1273 = vsub.s32 %v1239, %v1249
      %v1274 = vsub.s32 %v1240, %v1249
      %v1275 = vsub.s32 %v1241, %v1249
      %v1276 = vsub.s32 %v1242, %v1249
      %v1277 = vsub.s32 %v1243, %v1249
      %v1278 = vsub.s32 %v1244, %v1249
      %v1279 = vsub.s32 %v1245, %v1249
      %v1280 = vsub.s32 %v1246, %v1249
      %v1281 = vsub.s32 %v1247, %v1249
      %1282 = vset.pattern.permute.xlu0 0
      %1283 = vperm.xlu0 %1282, %v1250
      %v1284 = vpop.permute.xlu0 %1283
      %1285 = vset.pattern.permute.xlu0 0
      %1286 = vperm.xlu0 %1285, %v1251
      %v1287 = vpop.permute.xlu0 %1286
      %1288 = vset.pattern.permute.xlu0 0
      %1289 = vperm.xlu0 %1288, %v1252
      %v1290 = vpop.permute.xlu0 %1289
      %1291 = vset.pattern.permute.xlu0 0
      %1292 = vperm.xlu0 %1291, %v1253
      %v1293 = vpop.permute.xlu0 %1292
      %1294 = vset.pattern.permute.xlu0 0
      %1295 = vperm.xlu0 %1294, %v1254
      %v1296 = vpop.permute.xlu0 %1295
      %1297 = vset.pattern.permute.xlu0 0
      %1298 = vperm.xlu0 %1297, %v1255
      %v1299 = vpop.permute.xlu0 %1298
      %1300 = vset.pattern.permute.xlu0 0
      %1301 = vperm.xlu0 %1300, %v1256
      %v1302 = vpop.permute.xlu0 %1301
      %1303 = vset.pattern.permute.xlu0 0
      %1304 = vperm.xlu0 %1303, %v1257
      %v1305 = vpop.permute.xlu0 %1304
      %1306 = vset.pattern.permute.xlu0 0
      %1307 = vperm.xlu0 %1306, %v1258
      %v1308 = vpop.permute.xlu0 %1307
      %1309 = vset.pattern.permute.xlu0 0
      %1310 = vperm.xlu0 %1309, %v1259
      %v1311 = vpop.permute.xlu0 %1310
      %1312 = vset.pattern.permute.xlu0 0
      %1313 = vperm.xlu0 %1312, %v1260
      %v1314 = vpop.permute.xlu0 %1313
      %1315 = vset.pattern.permute.xlu0 0
      %1316 = vperm.xlu0 %1315, %v1261
      %v1317 = vpop.permute.xlu0 %1316
      %1318 = vset.pattern.permute.xlu0 0
      %1319 = vperm.xlu0 %1318, %v1262
      %v1320 = vpop.permute.xlu0 %1319
      %1321 = vset.pattern.permute.xlu0 0
      %1322 = vperm.xlu0 %1321, %v1263
      %v1323 = vpop.permute.xlu0 %1322
      %1324 = vset.pattern.permute.xlu0 0
      %1325 = vperm.xlu0 %1324, %v1264
      %v1326 = vpop.permute.xlu0 %1325
      %1327 = vset.pattern.permute.xlu0 0
      %1328 = vperm.xlu0 %1327, %v1265
      %v1329 = vpop.permute.xlu0 %1328
      %1330 = vset.pattern.permute.xlu0 0
      %1331 = vperm.xlu0 %1330, %v1266
      %v1332 = vpop.permute.xlu0 %1331
      %1333 = vset.pattern.permute.xlu0 0
      %1334 = vperm.xlu0 %1333, %v1267
      %v1335 = vpop.permute.xlu0 %1334
      %1336 = vset.pattern.permute.xlu0 0
      %1337 = vperm.xlu0 %1336, %v1268
      %v1338 = vpop.permute.xlu0 %1337
      %1339 = vset.pattern.permute.xlu0 0
      %1340 = vperm.xlu0 %1339, %v1269
      %v1341 = vpop.permute.xlu0 %1340
      %1342 = vset.pattern.permute.xlu0 0
      %1343 = vperm.xlu0 %1342, %v1270
      %v1344 = vpop.permute.xlu0 %1343
      %1345 = vset.pattern.permute.xlu0 0
      %1346 = vperm.xlu0 %1345, %v1271
      %v1347 = vpop.permute.xlu0 %1346
      %1348 = vset.pattern.permute.xlu0 0
      %1349 = vperm.xlu0 %1348, %v1272
      %v1350 = vpop.permute.xlu0 %1349
      %1351 = vset.pattern.permute.xlu0 0
      %1352 = vperm.xlu0 %1351, %v1273
      %v1353 = vpop.permute.xlu0 %1352
      %1354 = vset.pattern.permute.xlu0 0
      %1355 = vperm.xlu0 %1354, %v1274
      %v1356 = vpop.permute.xlu0 %1355
      %1357 = vset.pattern.permute.xlu0 0
      %1358 = vperm.xlu0 %1357, %v1275
      %v1359 = vpop.permute.xlu0 %1358
      %1360 = vset.pattern.permute.xlu0 0
      %1361 = vperm.xlu0 %1360, %v1276
      %v1362 = vpop.permute.xlu0 %1361
      %1363 = vset.pattern.permute.xlu0 0
      %1364 = vperm.xlu0 %1363, %v1277
      %v1365 = vpop.permute.xlu0 %1364
      %1366 = vset.pattern.permute.xlu0 0
      %1367 = vperm.xlu0 %1366, %v1278
      %v1368 = vpop.permute.xlu0 %1367
      %1369 = vset.pattern.permute.xlu0 0
      %1370 = vperm.xlu0 %1369, %v1279
      %v1371 = vpop.permute.xlu0 %1370
      %1372 = vset.pattern.permute.xlu0 0
      %1373 = vperm.xlu0 %1372, %v1280
      %v1374 = vpop.permute.xlu0 %1373
      %1375 = vset.pattern.permute.xlu0 0
      %1376 = vperm.xlu0 %1375, %v1281
      %v1377 = vpop.permute.xlu0 %1376
      %vm1378 = vcmp.eq.s32.totalorder %v1215, %v1284
      %vm1379 = vcmp.eq.s32.totalorder %v1215, %v1287
      %vm1380 = vcmp.eq.s32.totalorder %v1215, %v1290
      %vm1381 = vcmp.eq.s32.totalorder %v1215, %v1293
      %vm1382 = vcmp.eq.s32.totalorder %v1215, %v1296
      %vm1383 = vcmp.eq.s32.totalorder %v1215, %v1299
      %vm1384 = vcmp.eq.s32.totalorder %v1215, %v1302
      %vm1385 = vcmp.eq.s32.totalorder %v1215, %v1305
      %vm1386 = vcmp.eq.s32.totalorder %v1215, %v1308
      %vm1387 = vcmp.eq.s32.totalorder %v1215, %v1311
      %vm1388 = vcmp.eq.s32.totalorder %v1215, %v1314
      %vm1389 = vcmp.eq.s32.totalorder %v1215, %v1317
      %vm1390 = vcmp.eq.s32.totalorder %v1215, %v1320
      %vm1391 = vcmp.eq.s32.totalorder %v1215, %v1323
      %vm1392 = vcmp.eq.s32.totalorder %v1215, %v1326
      %vm1393 = vcmp.eq.s32.totalorder %v1215, %v1329
      %vm1394 = vcmp.eq.s32.totalorder %v1215, %v1332
      %vm1395 = vcmp.eq.s32.totalorder %v1215, %v1335
      %vm1396 = vcmp.eq.s32.totalorder %v1215, %v1338
      %vm1397 = vcmp.eq.s32.totalorder %v1215, %v1341
      %vm1398 = vcmp.eq.s32.totalorder %v1215, %v1344
      %vm1399 = vcmp.eq.s32.totalorder %v1215, %v1347
      %vm1400 = vcmp.eq.s32.totalorder %v1215, %v1350
      %vm1401 = vcmp.eq.s32.totalorder %v1215, %v1353
      %vm1402 = vcmp.eq.s32.totalorder %v1215, %v1356
      %vm1403 = vcmp.eq.s32.totalorder %v1215, %v1359
      %vm1404 = vcmp.eq.s32.totalorder %v1215, %v1362
      %vm1405 = vcmp.eq.s32.totalorder %v1215, %v1365
      %vm1406 = vcmp.eq.s32.totalorder %v1215, %v1368
      %vm1407 = vcmp.eq.s32.totalorder %v1215, %v1371
      %vm1408 = vcmp.eq.s32.totalorder %v1215, %v1374
      %vm1409 = vcmp.eq.s32.totalorder %v1215, %v1377
      %v1410 = vsel %vm1378, %v766, 0.0
      %v1411 = vsel %vm1379, %v767, 0.0
      %v1412 = vsel %vm1380, %v768, 0.0
      %v1413 = vsel %vm1381, %v769, 0.0
      %v1414 = vsel %vm1382, %v770, 0.0
      %v1415 = vsel %vm1383, %v771, 0.0
      %v1416 = vsel %vm1384, %v772, 0.0
      %v1417 = vsel %vm1385, %v773, 0.0
      %v1418 = vsel %vm1386, %v774, 0.0
      %v1419 = vsel %vm1387, %v775, 0.0
      %v1420 = vsel %vm1388, %v776, 0.0
      %v1421 = vsel %vm1389, %v777, 0.0
      %v1422 = vsel %vm1390, %v778, 0.0
      %v1423 = vsel %vm1391, %v779, 0.0
      %v1424 = vsel %vm1392, %v780, 0.0
      %v1425 = vsel %vm1393, %v781, 0.0
      %v1426 = vsel %vm1394, %v782, 0.0
      %v1427 = vsel %vm1395, %v783, 0.0
      %v1428 = vsel %vm1396, %v784, 0.0
      %v1429 = vsel %vm1397, %v785, 0.0
      %v1430 = vsel %vm1398, %v786, 0.0
      %v1431 = vsel %vm1399, %v787, 0.0
      %v1432 = vsel %vm1400, %v788, 0.0
      %v1433 = vsel %vm1401, %v789, 0.0
      %v1434 = vsel %vm1402, %v790, 0.0
      %v1435 = vsel %vm1403, %v791, 0.0
      %v1436 = vsel %vm1404, %v792, 0.0
      %v1437 = vsel %vm1405, %v793, 0.0
      %v1438 = vsel %vm1406, %v794, 0.0
      %v1439 = vsel %vm1407, %v795, 0.0
      %v1440 = vsel %vm1408, %v796, 0.0
      %v1441 = vsel %vm1409, %v797, 0.0
      %1442 = vadd.xlane.f32.xlu0 %v1410
      %v1443 = vpop.xlane.xlu0 %1442
      %1444 = vadd.xlane.f32.xlu0 %v1411
      %v1445 = vpop.xlane.xlu0 %1444
      %1446 = vadd.xlane.f32.xlu0 %v1412
      %v1447 = vpop.xlane.xlu0 %1446
      %1448 = vadd.xlane.f32.xlu0 %v1413
      %v1449 = vpop.xlane.xlu0 %1448
      %1450 = vadd.xlane.f32.xlu0 %v1414
      %v1451 = vpop.xlane.xlu0 %1450
      %1452 = vadd.xlane.f32.xlu0 %v1415
      %v1453 = vpop.xlane.xlu0 %1452
      %1454 = vadd.xlane.f32.xlu0 %v1416
      %v1455 = vpop.xlane.xlu0 %1454
      %1456 = vadd.xlane.f32.xlu0 %v1417
      %v1457 = vpop.xlane.xlu0 %1456
      %1458 = vadd.xlane.f32.xlu0 %v1418
      %v1459 = vpop.xlane.xlu0 %1458
      %1460 = vadd.xlane.f32.xlu0 %v1419
      %v1461 = vpop.xlane.xlu0 %1460
      %1462 = vadd.xlane.f32.xlu0 %v1420
      %v1463 = vpop.xlane.xlu0 %1462
      %1464 = vadd.xlane.f32.xlu0 %v1421
      %v1465 = vpop.xlane.xlu0 %1464
      %1466 = vadd.xlane.f32.xlu0 %v1422
      %v1467 = vpop.xlane.xlu0 %1466
      %1468 = vadd.xlane.f32.xlu0 %v1423
      %v1469 = vpop.xlane.xlu0 %1468
      %1470 = vadd.xlane.f32.xlu0 %v1424
      %v1471 = vpop.xlane.xlu0 %1470
      %1472 = vadd.xlane.f32.xlu0 %v1425
      %v1473 = vpop.xlane.xlu0 %1472
      %1474 = vadd.xlane.f32.xlu0 %v1426
      %v1475 = vpop.xlane.xlu0 %1474
      %1476 = vadd.xlane.f32.xlu0 %v1427
      %v1477 = vpop.xlane.xlu0 %1476
      %1478 = vadd.xlane.f32.xlu0 %v1428
      %v1479 = vpop.xlane.xlu0 %1478
      %1480 = vadd.xlane.f32.xlu0 %v1429
      %v1481 = vpop.xlane.xlu0 %1480
      %1482 = vadd.xlane.f32.xlu0 %v1430
      %v1483 = vpop.xlane.xlu0 %1482
      %1484 = vadd.xlane.f32.xlu0 %v1431
      %v1485 = vpop.xlane.xlu0 %1484
      %1486 = vadd.xlane.f32.xlu0 %v1432
      %v1487 = vpop.xlane.xlu0 %1486
      %1488 = vadd.xlane.f32.xlu0 %v1433
      %v1489 = vpop.xlane.xlu0 %1488
      %1490 = vadd.xlane.f32.xlu0 %v1434
      %v1491 = vpop.xlane.xlu0 %1490
      %1492 = vadd.xlane.f32.xlu0 %v1435
      %v1493 = vpop.xlane.xlu0 %1492
      %1494 = vadd.xlane.f32.xlu0 %v1436
      %v1495 = vpop.xlane.xlu0 %1494
      %1496 = vadd.xlane.f32.xlu0 %v1437
      %v1497 = vpop.xlane.xlu0 %1496
      %1498 = vadd.xlane.f32.xlu0 %v1438
      %v1499 = vpop.xlane.xlu0 %1498
      %1500 = vadd.xlane.f32.xlu0 %v1439
      %v1501 = vpop.xlane.xlu0 %1500
      %1502 = vadd.xlane.f32.xlu0 %v1440
      %v1503 = vpop.xlane.xlu0 %1502
      %1504 = vadd.xlane.f32.xlu0 %v1441
      %v1505 = vpop.xlane.xlu0 %1504
      %v1506 = vmul.f32 %v1443, %v1443
      %v1507 = vmul.f32 %v1445, %v1445
      %v1508 = vmul.f32 %v1447, %v1447
      %v1509 = vmul.f32 %v1449, %v1449
      %v1510 = vmul.f32 %v1451, %v1451
      %v1511 = vmul.f32 %v1453, %v1453
      %v1512 = vmul.f32 %v1455, %v1455
      %v1513 = vmul.f32 %v1457, %v1457
      %v1514 = vmul.f32 %v1459, %v1459
      %v1515 = vmul.f32 %v1461, %v1461
      %v1516 = vmul.f32 %v1463, %v1463
      %v1517 = vmul.f32 %v1465, %v1465
      %v1518 = vmul.f32 %v1467, %v1467
      %v1519 = vmul.f32 %v1469, %v1469
      %v1520 = vmul.f32 %v1471, %v1471
      %v1521 = vmul.f32 %v1473, %v1473
      %v1522 = vmul.f32 %v1475, %v1475
      %v1523 = vmul.f32 %v1477, %v1477
      %v1524 = vmul.f32 %v1479, %v1479
      %v1525 = vmul.f32 %v1481, %v1481
      %v1526 = vmul.f32 %v1483, %v1483
      %v1527 = vmul.f32 %v1485, %v1485
      %v1528 = vmul.f32 %v1487, %v1487
      %v1529 = vmul.f32 %v1489, %v1489
      %v1530 = vmul.f32 %v1491, %v1491
      %v1531 = vmul.f32 %v1493, %v1493
      %v1532 = vmul.f32 %v1495, %v1495
      %v1533 = vmul.f32 %v1497, %v1497
      %v1534 = vmul.f32 %v1499, %v1499
      %v1535 = vmul.f32 %v1501, %v1501
      %v1536 = vmul.f32 %v1503, %v1503
      %v1537 = vmul.f32 %v1505, %v1505
      %v1538 = vsub.f32 1.0, %v1506
      %v1539 = vsub.f32 1.0, %v1507
      %v1540 = vsub.f32 1.0, %v1508
      %v1541 = vsub.f32 1.0, %v1509
      %v1542 = vsub.f32 1.0, %v1510
      %v1543 = vsub.f32 1.0, %v1511
      %v1544 = vsub.f32 1.0, %v1512
      %v1545 = vsub.f32 1.0, %v1513
      %v1546 = vsub.f32 1.0, %v1514
      %v1547 = vsub.f32 1.0, %v1515
      %v1548 = vsub.f32 1.0, %v1516
      %v1549 = vsub.f32 1.0, %v1517
      %v1550 = vsub.f32 1.0, %v1518
      %v1551 = vsub.f32 1.0, %v1519
      %v1552 = vsub.f32 1.0, %v1520
      %v1553 = vsub.f32 1.0, %v1521
      %v1554 = vsub.f32 1.0, %v1522
      %v1555 = vsub.f32 1.0, %v1523
      %v1556 = vsub.f32 1.0, %v1524
      %v1557 = vsub.f32 1.0, %v1525
      %v1558 = vsub.f32 1.0, %v1526
      %v1559 = vsub.f32 1.0, %v1527
      %v1560 = vsub.f32 1.0, %v1528
      %v1561 = vsub.f32 1.0, %v1529
      %v1562 = vsub.f32 1.0, %v1530
      %v1563 = vsub.f32 1.0, %v1531
      %v1564 = vsub.f32 1.0, %v1532
      %v1565 = vsub.f32 1.0, %v1533
      %v1566 = vsub.f32 1.0, %v1534
      %v1567 = vsub.f32 1.0, %v1535
      %v1568 = vsub.f32 1.0, %v1536
      %v1569 = vsub.f32 1.0, %v1537
      %v1570 = vmax.f32 %v1538, 0.0
      %v1571 = vmax.f32 %v1539, 0.0
      %v1572 = vmax.f32 %v1540, 0.0
      %v1573 = vmax.f32 %v1541, 0.0
      %v1574 = vmax.f32 %v1542, 0.0
      %v1575 = vmax.f32 %v1543, 0.0
      %v1576 = vmax.f32 %v1544, 0.0
      %v1577 = vmax.f32 %v1545, 0.0
      %v1578 = vmax.f32 %v1546, 0.0
      %v1579 = vmax.f32 %v1547, 0.0
      %v1580 = vmax.f32 %v1548, 0.0
      %v1581 = vmax.f32 %v1549, 0.0
      %v1582 = vmax.f32 %v1550, 0.0
      %v1583 = vmax.f32 %v1551, 0.0
      %v1584 = vmax.f32 %v1552, 0.0
      %v1585 = vmax.f32 %v1553, 0.0
      %v1586 = vmax.f32 %v1554, 0.0
      %v1587 = vmax.f32 %v1555, 0.0
      %v1588 = vmax.f32 %v1556, 0.0
      %v1589 = vmax.f32 %v1557, 0.0
      %v1590 = vmax.f32 %v1558, 0.0
      %v1591 = vmax.f32 %v1559, 0.0
      %v1592 = vmax.f32 %v1560, 0.0
      %v1593 = vmax.f32 %v1561, 0.0
      %v1594 = vmax.f32 %v1562, 0.0
      %v1595 = vmax.f32 %v1563, 0.0
      %v1596 = vmax.f32 %v1564, 0.0
      %v1597 = vmax.f32 %v1565, 0.0
      %v1598 = vmax.f32 %v1566, 0.0
      %v1599 = vmax.f32 %v1567, 0.0
      %v1600 = vmax.f32 %v1568, 0.0
      %v1601 = vmax.f32 %v1569, 0.0
      %v1602 = vrsqrt.pop %v1570
      %v1603 = vmul.f32 %v1570, %v1602
      %vm1604 = vcmp.eq.f32.partialorder %v1570, inf
      %v1605 = vsel %vm1604, %v1570, %v1603
      %vm1606 = vcmp.eq.f32.partialorder %v1570, 0.0
      %v1607 = vand.u32 %v1570, 2147483648
      %v1608 = vsel %vm1606, %v1607, %v1605
      %v1609 = vrsqrt.pop %v1571
      %v1610 = vmul.f32 %v1571, %v1609
      %vm1611 = vcmp.eq.f32.partialorder %v1571, inf
      %v1612 = vsel %vm1611, %v1571, %v1610
      %vm1613 = vcmp.eq.f32.partialorder %v1571, 0.0
      %v1614 = vand.u32 %v1571, 2147483648
      %v1615 = vsel %vm1613, %v1614, %v1612
      %v1616 = vrsqrt.pop %v1572
      %v1617 = vmul.f32 %v1572, %v1616
      %vm1618 = vcmp.eq.f32.partialorder %v1572, inf
      %v1619 = vsel %vm1618, %v1572, %v1617
      %vm1620 = vcmp.eq.f32.partialorder %v1572, 0.0
      %v1621 = vand.u32 %v1572, 2147483648
      %v1622 = vsel %vm1620, %v1621, %v1619
      %v1623 = vrsqrt.pop %v1573
      %v1624 = vmul.f32 %v1573, %v1623
      %vm1625 = vcmp.eq.f32.partialorder %v1573, inf
      %v1626 = vsel %vm1625, %v1573, %v1624
      %vm1627 = vcmp.eq.f32.partialorder %v1573, 0.0
      %v1628 = vand.u32 %v1573, 2147483648
      %v1629 = vsel %vm1627, %v1628, %v1626
      %v1630 = vrsqrt.pop %v1574
      %v1631 = vmul.f32 %v1574, %v1630
      %vm1632 = vcmp.eq.f32.partialorder %v1574, inf
      %v1633 = vsel %vm1632, %v1574, %v1631
      %vm1634 = vcmp.eq.f32.partialorder %v1574, 0.0
      %v1635 = vand.u32 %v1574, 2147483648
      %v1636 = vsel %vm1634, %v1635, %v1633
      %v1637 = vrsqrt.pop %v1575
      %v1638 = vmul.f32 %v1575, %v1637
      %vm1639 = vcmp.eq.f32.partialorder %v1575, inf
      %v1640 = vsel %vm1639, %v1575, %v1638
      %vm1641 = vcmp.eq.f32.partialorder %v1575, 0.0
      %v1642 = vand.u32 %v1575, 2147483648
      %v1643 = vsel %vm1641, %v1642, %v1640
      %v1644 = vrsqrt.pop %v1576
      %v1645 = vmul.f32 %v1576, %v1644
      %vm1646 = vcmp.eq.f32.partialorder %v1576, inf
      %v1647 = vsel %vm1646, %v1576, %v1645
      %vm1648 = vcmp.eq.f32.partialorder %v1576, 0.0
      %v1649 = vand.u32 %v1576, 2147483648
      %v1650 = vsel %vm1648, %v1649, %v1647
      %v1651 = vrsqrt.pop %v1577
      %v1652 = vmul.f32 %v1577, %v1651
      %vm1653 = vcmp.eq.f32.partialorder %v1577, inf
      %v1654 = vsel %vm1653, %v1577, %v1652
      %vm1655 = vcmp.eq.f32.partialorder %v1577, 0.0
      %v1656 = vand.u32 %v1577, 2147483648
      %v1657 = vsel %vm1655, %v1656, %v1654
      %v1658 = vrsqrt.pop %v1578
      %v1659 = vmul.f32 %v1578, %v1658
      %vm1660 = vcmp.eq.f32.partialorder %v1578, inf
      %v1661 = vsel %vm1660, %v1578, %v1659
      %vm1662 = vcmp.eq.f32.partialorder %v1578, 0.0
      %v1663 = vand.u32 %v1578, 2147483648
      %v1664 = vsel %vm1662, %v1663, %v1661
      %v1665 = vrsqrt.pop %v1579
      %v1666 = vmul.f32 %v1579, %v1665
      %vm1667 = vcmp.eq.f32.partialorder %v1579, inf
      %v1668 = vsel %vm1667, %v1579, %v1666
      %vm1669 = vcmp.eq.f32.partialorder %v1579, 0.0
      %v1670 = vand.u32 %v1579, 2147483648
      %v1671 = vsel %vm1669, %v1670, %v1668
      %v1672 = vrsqrt.pop %v1580
      %v1673 = vmul.f32 %v1580, %v1672
      %vm1674 = vcmp.eq.f32.partialorder %v1580, inf
      %v1675 = vsel %vm1674, %v1580, %v1673
      %vm1676 = vcmp.eq.f32.partialorder %v1580, 0.0
      %v1677 = vand.u32 %v1580, 2147483648
      %v1678 = vsel %vm1676, %v1677, %v1675
      %v1679 = vrsqrt.pop %v1581
      %v1680 = vmul.f32 %v1581, %v1679
      %vm1681 = vcmp.eq.f32.partialorder %v1581, inf
      %v1682 = vsel %vm1681, %v1581, %v1680
      %vm1683 = vcmp.eq.f32.partialorder %v1581, 0.0
      %v1684 = vand.u32 %v1581, 2147483648
      %v1685 = vsel %vm1683, %v1684, %v1682
      %v1686 = vrsqrt.pop %v1582
      %v1687 = vmul.f32 %v1582, %v1686
      %vm1688 = vcmp.eq.f32.partialorder %v1582, inf
      %v1689 = vsel %vm1688, %v1582, %v1687
      %vm1690 = vcmp.eq.f32.partialorder %v1582, 0.0
      %v1691 = vand.u32 %v1582, 2147483648
      %v1692 = vsel %vm1690, %v1691, %v1689
      %v1693 = vrsqrt.pop %v1583
      %v1694 = vmul.f32 %v1583, %v1693
      %vm1695 = vcmp.eq.f32.partialorder %v1583, inf
      %v1696 = vsel %vm1695, %v1583, %v1694
      %vm1697 = vcmp.eq.f32.partialorder %v1583, 0.0
      %v1698 = vand.u32 %v1583, 2147483648
      %v1699 = vsel %vm1697, %v1698, %v1696
      %v1700 = vrsqrt.pop %v1584
      %v1701 = vmul.f32 %v1584, %v1700
      %vm1702 = vcmp.eq.f32.partialorder %v1584, inf
      %v1703 = vsel %vm1702, %v1584, %v1701
      %vm1704 = vcmp.eq.f32.partialorder %v1584, 0.0
      %v1705 = vand.u32 %v1584, 2147483648
      %v1706 = vsel %vm1704, %v1705, %v1703
      %v1707 = vrsqrt.pop %v1585
      %v1708 = vmul.f32 %v1585, %v1707
      %vm1709 = vcmp.eq.f32.partialorder %v1585, inf
      %v1710 = vsel %vm1709, %v1585, %v1708
      %vm1711 = vcmp.eq.f32.partialorder %v1585, 0.0
      %v1712 = vand.u32 %v1585, 2147483648
      %v1713 = vsel %vm1711, %v1712, %v1710
      %v1714 = vrsqrt.pop %v1586
      %v1715 = vmul.f32 %v1586, %v1714
      %vm1716 = vcmp.eq.f32.partialorder %v1586, inf
      %v1717 = vsel %vm1716, %v1586, %v1715
      %vm1718 = vcmp.eq.f32.partialorder %v1586, 0.0
      %v1719 = vand.u32 %v1586, 2147483648
      %v1720 = vsel %vm1718, %v1719, %v1717
      %v1721 = vrsqrt.pop %v1587
      %v1722 = vmul.f32 %v1587, %v1721
      %vm1723 = vcmp.eq.f32.partialorder %v1587, inf
      %v1724 = vsel %vm1723, %v1587, %v1722
      %vm1725 = vcmp.eq.f32.partialorder %v1587, 0.0
      %v1726 = vand.u32 %v1587, 2147483648
      %v1727 = vsel %vm1725, %v1726, %v1724
      %v1728 = vrsqrt.pop %v1588
      %v1729 = vmul.f32 %v1588, %v1728
      %vm1730 = vcmp.eq.f32.partialorder %v1588, inf
      %v1731 = vsel %vm1730, %v1588, %v1729
      %vm1732 = vcmp.eq.f32.partialorder %v1588, 0.0
      %v1733 = vand.u32 %v1588, 2147483648
      %v1734 = vsel %vm1732, %v1733, %v1731
      %v1735 = vrsqrt.pop %v1589
      %v1736 = vmul.f32 %v1589, %v1735
      %vm1737 = vcmp.eq.f32.partialorder %v1589, inf
      %v1738 = vsel %vm1737, %v1589, %v1736
      %vm1739 = vcmp.eq.f32.partialorder %v1589, 0.0
      %v1740 = vand.u32 %v1589, 2147483648
      %v1741 = vsel %vm1739, %v1740, %v1738
      %v1742 = vrsqrt.pop %v1590
      %v1743 = vmul.f32 %v1590, %v1742
      %vm1744 = vcmp.eq.f32.partialorder %v1590, inf
      %v1745 = vsel %vm1744, %v1590, %v1743
      %vm1746 = vcmp.eq.f32.partialorder %v1590, 0.0
      %v1747 = vand.u32 %v1590, 2147483648
      %v1748 = vsel %vm1746, %v1747, %v1745
      %v1749 = vrsqrt.pop %v1591
      %v1750 = vmul.f32 %v1591, %v1749
      %vm1751 = vcmp.eq.f32.partialorder %v1591, inf
      %v1752 = vsel %vm1751, %v1591, %v1750
      %vm1753 = vcmp.eq.f32.partialorder %v1591, 0.0
      %v1754 = vand.u32 %v1591, 2147483648
      %v1755 = vsel %vm1753, %v1754, %v1752
      %v1756 = vrsqrt.pop %v1592
      %v1757 = vmul.f32 %v1592, %v1756
      %vm1758 = vcmp.eq.f32.partialorder %v1592, inf
      %v1759 = vsel %vm1758, %v1592, %v1757
      %vm1760 = vcmp.eq.f32.partialorder %v1592, 0.0
      %v1761 = vand.u32 %v1592, 2147483648
      %v1762 = vsel %vm1760, %v1761, %v1759
      %v1763 = vrsqrt.pop %v1593
      %v1764 = vmul.f32 %v1593, %v1763
      %vm1765 = vcmp.eq.f32.partialorder %v1593, inf
      %v1766 = vsel %vm1765, %v1593, %v1764
      %vm1767 = vcmp.eq.f32.partialorder %v1593, 0.0
      %v1768 = vand.u32 %v1593, 2147483648
      %v1769 = vsel %vm1767, %v1768, %v1766
      %v1770 = vrsqrt.pop %v1594
      %v1771 = vmul.f32 %v1594, %v1770
      %vm1772 = vcmp.eq.f32.partialorder %v1594, inf
      %v1773 = vsel %vm1772, %v1594, %v1771
      %vm1774 = vcmp.eq.f32.partialorder %v1594, 0.0
      %v1775 = vand.u32 %v1594, 2147483648
      %v1776 = vsel %vm1774, %v1775, %v1773
      %v1777 = vrsqrt.pop %v1595
      %v1778 = vmul.f32 %v1595, %v1777
      %vm1779 = vcmp.eq.f32.partialorder %v1595, inf
      %v1780 = vsel %vm1779, %v1595, %v1778
      %vm1781 = vcmp.eq.f32.partialorder %v1595, 0.0
      %v1782 = vand.u32 %v1595, 2147483648
      %v1783 = vsel %vm1781, %v1782, %v1780
      %v1784 = vrsqrt.pop %v1596
      %v1785 = vmul.f32 %v1596, %v1784
      %vm1786 = vcmp.eq.f32.partialorder %v1596, inf
      %v1787 = vsel %vm1786, %v1596, %v1785
      %vm1788 = vcmp.eq.f32.partialorder %v1596, 0.0
      %v1789 = vand.u32 %v1596, 2147483648
      %v1790 = vsel %vm1788, %v1789, %v1787
      %v1791 = vrsqrt.pop %v1597
      %v1792 = vmul.f32 %v1597, %v1791
      %vm1793 = vcmp.eq.f32.partialorder %v1597, inf
      %v1794 = vsel %vm1793, %v1597, %v1792
      %vm1795 = vcmp.eq.f32.partialorder %v1597, 0.0
      %v1796 = vand.u32 %v1597, 2147483648
      %v1797 = vsel %vm1795, %v1796, %v1794
      %v1798 = vrsqrt.pop %v1598
      %v1799 = vmul.f32 %v1598, %v1798
      %vm1800 = vcmp.eq.f32.partialorder %v1598, inf
      %v1801 = vsel %vm1800, %v1598, %v1799
      %vm1802 = vcmp.eq.f32.partialorder %v1598, 0.0
      %v1803 = vand.u32 %v1598, 2147483648
      %v1804 = vsel %vm1802, %v1803, %v1801
      %v1805 = vrsqrt.pop %v1599
      %v1806 = vmul.f32 %v1599, %v1805
      %vm1807 = vcmp.eq.f32.partialorder %v1599, inf
      %v1808 = vsel %vm1807, %v1599, %v1806
      %vm1809 = vcmp.eq.f32.partialorder %v1599, 0.0
      %v1810 = vand.u32 %v1599, 2147483648
      %v1811 = vsel %vm1809, %v1810, %v1808
      %v1812 = vrsqrt.pop %v1600
      %v1813 = vmul.f32 %v1600, %v1812
      %vm1814 = vcmp.eq.f32.partialorder %v1600, inf
      %v1815 = vsel %vm1814, %v1600, %v1813
      %vm1816 = vcmp.eq.f32.partialorder %v1600, 0.0
      %v1817 = vand.u32 %v1600, 2147483648
      %v1818 = vsel %vm1816, %v1817, %v1815
      %v1819 = vrsqrt.pop %v1601
      %v1820 = vmul.f32 %v1601, %v1819
      %vm1821 = vcmp.eq.f32.partialorder %v1601, inf
      %v1822 = vsel %vm1821, %v1601, %v1820
      %vm1823 = vcmp.eq.f32.partialorder %v1601, 0.0
      %v1824 = vand.u32 %v1601, 2147483648
      %v1825 = vsel %vm1823, %v1824, %v1822
      %v1826 = vmul.f32 %v1443, 56.165283
      %v1827 = vmul.f32 %v1445, 56.165283
      %v1828 = vmul.f32 %v1447, 56.165283
      %v1829 = vmul.f32 %v1449, 56.165283
      %v1830 = vmul.f32 %v1451, 56.165283
      %v1831 = vmul.f32 %v1453, 56.165283
      %v1832 = vmul.f32 %v1455, 56.165283
      %v1833 = vmul.f32 %v1457, 56.165283
      %v1834 = vmul.f32 %v1459, 56.165283
      %v1835 = vmul.f32 %v1461, 56.165283
      %v1836 = vmul.f32 %v1463, 56.165283
      %v1837 = vmul.f32 %v1465, 56.165283
      %v1838 = vmul.f32 %v1467, 56.165283
      %v1839 = vmul.f32 %v1469, 56.165283
      %v1840 = vmul.f32 %v1471, 56.165283
      %v1841 = vmul.f32 %v1473, 56.165283
      %v1842 = vmul.f32 %v1475, 56.165283
      %v1843 = vmul.f32 %v1477, 56.165283
      %v1844 = vmul.f32 %v1479, 56.165283
      %v1845 = vmul.f32 %v1481, 56.165283
      %v1846 = vmul.f32 %v1483, 56.165283
      %v1847 = vmul.f32 %v1485, 56.165283
      %v1848 = vmul.f32 %v1487, 56.165283
      %v1849 = vmul.f32 %v1489, 56.165283
      %v1850 = vmul.f32 %v1491, 56.165283
      %v1851 = vmul.f32 %v1493, 56.165283
      %v1852 = vmul.f32 %v1495, 56.165283
      %v1853 = vmul.f32 %v1497, 56.165283
      %v1854 = vmul.f32 %v1499, 56.165283
      %v1855 = vmul.f32 %v1501, 56.165283
      %v1856 = vmul.f32 %v1503, 56.165283
      %v1857 = vmul.f32 %v1505, 56.165283
      %v1858 = vmul.f32 %v1608, 30.683235
      %v1859 = vmul.f32 %v1615, 30.683235
      %v1860 = vmul.f32 %v1622, 30.683235
      %v1861 = vmul.f32 %v1629, 30.683235
      %v1862 = vmul.f32 %v1636, 30.683235
      %v1863 = vmul.f32 %v1643, 30.683235
      %v1864 = vmul.f32 %v1650, 30.683235
      %v1865 = vmul.f32 %v1657, 30.683235
      %v1866 = vmul.f32 %v1664, 30.683235
      %v1867 = vmul.f32 %v1671, 30.683235
      %v1868 = vmul.f32 %v1678, 30.683235
      %v1869 = vmul.f32 %v1685, 30.683235
      %v1870 = vmul.f32 %v1692, 30.683235
      %v1871 = vmul.f32 %v1699, 30.683235
      %v1872 = vmul.f32 %v1706, 30.683235
      %v1873 = vmul.f32 %v1713, 30.683235
      %v1874 = vmul.f32 %v1720, 30.683235
      %v1875 = vmul.f32 %v1727, 30.683235
      %v1876 = vmul.f32 %v1734, 30.683235
      %v1877 = vmul.f32 %v1741, 30.683235
      %v1878 = vmul.f32 %v1748, 30.683235
      %v1879 = vmul.f32 %v1755, 30.683235
      %v1880 = vmul.f32 %v1762, 30.683235
      %v1881 = vmul.f32 %v1769, 30.683235
      %v1882 = vmul.f32 %v1776, 30.683235
      %v1883 = vmul.f32 %v1783, 30.683235
      %v1884 = vmul.f32 %v1790, 30.683235
      %v1885 = vmul.f32 %v1797, 30.683235
      %v1886 = vmul.f32 %v1804, 30.683235
      %v1887 = vmul.f32 %v1811, 30.683235
      %v1888 = vmul.f32 %v1818, 30.683235
      %v1889 = vmul.f32 %v1825, 30.683235
      %v1890 = vsub.f32 %v1826, %v1858
      %v1891 = vsub.f32 %v1827, %v1859
      %v1892 = vsub.f32 %v1828, %v1860
      %v1893 = vsub.f32 %v1829, %v1861
      %v1894 = vsub.f32 %v1830, %v1862
      %v1895 = vsub.f32 %v1831, %v1863
      %v1896 = vsub.f32 %v1832, %v1864
      %v1897 = vsub.f32 %v1833, %v1865
      %v1898 = vsub.f32 %v1834, %v1866
      %v1899 = vsub.f32 %v1835, %v1867
      %v1900 = vsub.f32 %v1836, %v1868
      %v1901 = vsub.f32 %v1837, %v1869
      %v1902 = vsub.f32 %v1838, %v1870
      %v1903 = vsub.f32 %v1839, %v1871
      %v1904 = vsub.f32 %v1840, %v1872
      %v1905 = vsub.f32 %v1841, %v1873
      %v1906 = vsub.f32 %v1842, %v1874
      %v1907 = vsub.f32 %v1843, %v1875
      %v1908 = vsub.f32 %v1844, %v1876
      %v1909 = vsub.f32 %v1845, %v1877
      %v1910 = vsub.f32 %v1846, %v1878
      %v1911 = vsub.f32 %v1847, %v1879
      %v1912 = vsub.f32 %v1848, %v1880
      %v1913 = vsub.f32 %v1849, %v1881
      %v1914 = vsub.f32 %v1850, %v1882
      %v1915 = vsub.f32 %v1851, %v1883
      %v1916 = vsub.f32 %v1852, %v1884
      %v1917 = vsub.f32 %v1853, %v1885
      %v1918 = vsub.f32 %v1854, %v1886
      %v1919 = vsub.f32 %v1855, %v1887
      %v1920 = vsub.f32 %v1856, %v1888
      %v1921 = vsub.f32 %v1857, %v1889
      %v1922 = vmul.f32 %v1608, -56.165283
      %v1923 = vmul.f32 %v1615, -56.165283
      %v1924 = vmul.f32 %v1622, -56.165283
      %v1925 = vmul.f32 %v1629, -56.165283
      %v1926 = vmul.f32 %v1636, -56.165283
      %v1927 = vmul.f32 %v1643, -56.165283
      %v1928 = vmul.f32 %v1650, -56.165283
      %v1929 = vmul.f32 %v1657, -56.165283
      %v1930 = vmul.f32 %v1664, -56.165283
      %v1931 = vmul.f32 %v1671, -56.165283
      %v1932 = vmul.f32 %v1678, -56.165283
      %v1933 = vmul.f32 %v1685, -56.165283
      %v1934 = vmul.f32 %v1692, -56.165283
      %v1935 = vmul.f32 %v1699, -56.165283
      %v1936 = vmul.f32 %v1706, -56.165283
      %v1937 = vmul.f32 %v1713, -56.165283
      %v1938 = vmul.f32 %v1720, -56.165283
      %v1939 = vmul.f32 %v1727, -56.165283
      %v1940 = vmul.f32 %v1734, -56.165283
      %v1941 = vmul.f32 %v1741, -56.165283
      %v1942 = vmul.f32 %v1748, -56.165283
      %v1943 = vmul.f32 %v1755, -56.165283
      %v1944 = vmul.f32 %v1762, -56.165283
      %v1945 = vmul.f32 %v1769, -56.165283
      %v1946 = vmul.f32 %v1776, -56.165283
      %v1947 = vmul.f32 %v1783, -56.165283
      %v1948 = vmul.f32 %v1790, -56.165283
      %v1949 = vmul.f32 %v1797, -56.165283
      %v1950 = vmul.f32 %v1804, -56.165283
      %v1951 = vmul.f32 %v1811, -56.165283
      %v1952 = vmul.f32 %v1818, -56.165283
      %v1953 = vmul.f32 %v1825, -56.165283
      %v1954 = vmul.f32 %v1443, -30.683235
      %v1955 = vmul.f32 %v1445, -30.683235
      %v1956 = vmul.f32 %v1447, -30.683235
      %v1957 = vmul.f32 %v1449, -30.683235
      %v1958 = vmul.f32 %v1451, -30.683235
      %v1959 = vmul.f32 %v1453, -30.683235
      %v1960 = vmul.f32 %v1455, -30.683235
      %v1961 = vmul.f32 %v1457, -30.683235
      %v1962 = vmul.f32 %v1459, -30.683235
      %v1963 = vmul.f32 %v1461, -30.683235
      %v1964 = vmul.f32 %v1463, -30.683235
      %v1965 = vmul.f32 %v1465, -30.683235
      %v1966 = vmul.f32 %v1467, -30.683235
      %v1967 = vmul.f32 %v1469, -30.683235
      %v1968 = vmul.f32 %v1471, -30.683235
      %v1969 = vmul.f32 %v1473, -30.683235
      %v1970 = vmul.f32 %v1475, -30.683235
      %v1971 = vmul.f32 %v1477, -30.683235
      %v1972 = vmul.f32 %v1479, -30.683235
      %v1973 = vmul.f32 %v1481, -30.683235
      %v1974 = vmul.f32 %v1483, -30.683235
      %v1975 = vmul.f32 %v1485, -30.683235
      %v1976 = vmul.f32 %v1487, -30.683235
      %v1977 = vmul.f32 %v1489, -30.683235
      %v1978 = vmul.f32 %v1491, -30.683235
      %v1979 = vmul.f32 %v1493, -30.683235
      %v1980 = vmul.f32 %v1495, -30.683235
      %v1981 = vmul.f32 %v1497, -30.683235
      %v1982 = vmul.f32 %v1499, -30.683235
      %v1983 = vmul.f32 %v1501, -30.683235
      %v1984 = vmul.f32 %v1503, -30.683235
      %v1985 = vmul.f32 %v1505, -30.683235
      %v1986 = vadd.f32 %v1922, %v1954
      %v1987 = vadd.f32 %v1923, %v1955
      %v1988 = vadd.f32 %v1924, %v1956
      %v1989 = vadd.f32 %v1925, %v1957
      %v1990 = vadd.f32 %v1926, %v1958
      %v1991 = vadd.f32 %v1927, %v1959
      %v1992 = vadd.f32 %v1928, %v1960
      %v1993 = vadd.f32 %v1929, %v1961
      %v1994 = vadd.f32 %v1930, %v1962
      %v1995 = vadd.f32 %v1931, %v1963
      %v1996 = vadd.f32 %v1932, %v1964
      %v1997 = vadd.f32 %v1933, %v1965
      %v1998 = vadd.f32 %v1934, %v1966
      %v1999 = vadd.f32 %v1935, %v1967
      %v2000 = vadd.f32 %v1936, %v1968
      %v2001 = vadd.f32 %v1937, %v1969
      %v2002 = vadd.f32 %v1938, %v1970
      %v2003 = vadd.f32 %v1939, %v1971
      %v2004 = vadd.f32 %v1940, %v1972
      %v2005 = vadd.f32 %v1941, %v1973
      %v2006 = vadd.f32 %v1942, %v1974
      %v2007 = vadd.f32 %v1943, %v1975
      %v2008 = vadd.f32 %v1944, %v1976
      %v2009 = vadd.f32 %v1945, %v1977
      %v2010 = vadd.f32 %v1946, %v1978
      %v2011 = vadd.f32 %v1947, %v1979
      %v2012 = vadd.f32 %v1948, %v1980
      %v2013 = vadd.f32 %v1949, %v1981
      %v2014 = vadd.f32 %v1950, %v1982
      %v2015 = vadd.f32 %v1951, %v1983
      %v2016 = vadd.f32 %v1952, %v1984
      %v2017 = vadd.f32 %v1953, %v1985
      %v2018 = vmul.f32 %v1443, %v1986
      %v2019 = vmul.f32 %v1445, %v1987
      %v2020 = vmul.f32 %v1447, %v1988
      %v2021 = vmul.f32 %v1449, %v1989
      %v2022 = vmul.f32 %v1451, %v1990
      %v2023 = vmul.f32 %v1453, %v1991
      %v2024 = vmul.f32 %v1455, %v1992
      %v2025 = vmul.f32 %v1457, %v1993
      %v2026 = vmul.f32 %v1459, %v1994
      %v2027 = vmul.f32 %v1461, %v1995
      %v2028 = vmul.f32 %v1463, %v1996
      %v2029 = vmul.f32 %v1465, %v1997
      %v2030 = vmul.f32 %v1467, %v1998
      %v2031 = vmul.f32 %v1469, %v1999
      %v2032 = vmul.f32 %v1471, %v2000
      %v2033 = vmul.f32 %v1473, %v2001
      %v2034 = vmul.f32 %v1475, %v2002
      %v2035 = vmul.f32 %v1477, %v2003
      %v2036 = vmul.f32 %v1479, %v2004
      %v2037 = vmul.f32 %v1481, %v2005
      %v2038 = vmul.f32 %v1483, %v2006
      %v2039 = vmul.f32 %v1485, %v2007
      %v2040 = vmul.f32 %v1487, %v2008
      %v2041 = vmul.f32 %v1489, %v2009
      %v2042 = vmul.f32 %v1491, %v2010
      %v2043 = vmul.f32 %v1493, %v2011
      %v2044 = vmul.f32 %v1495, %v2012
      %v2045 = vmul.f32 %v1497, %v2013
      %v2046 = vmul.f32 %v1499, %v2014
      %v2047 = vmul.f32 %v1501, %v2015
      %v2048 = vmul.f32 %v1503, %v2016
      %v2049 = vmul.f32 %v1505, %v2017
      %v2050 = vadd.f32 %v1890, %v2018
      %v2051 = vadd.f32 %v1891, %v2019
      %v2052 = vadd.f32 %v1892, %v2020
      %v2053 = vadd.f32 %v1893, %v2021
      %v2054 = vadd.f32 %v1894, %v2022
      %v2055 = vadd.f32 %v1895, %v2023
      %v2056 = vadd.f32 %v1896, %v2024
      %v2057 = vadd.f32 %v1897, %v2025
      %v2058 = vadd.f32 %v1898, %v2026
      %v2059 = vadd.f32 %v1899, %v2027
      %v2060 = vadd.f32 %v1900, %v2028
      %v2061 = vadd.f32 %v1901, %v2029
      %v2062 = vadd.f32 %v1902, %v2030
      %v2063 = vadd.f32 %v1903, %v2031
      %v2064 = vadd.f32 %v1904, %v2032
      %v2065 = vadd.f32 %v1905, %v2033
      %v2066 = vadd.f32 %v1906, %v2034
      %v2067 = vadd.f32 %v1907, %v2035
      %v2068 = vadd.f32 %v1908, %v2036
      %v2069 = vadd.f32 %v1909, %v2037
      %v2070 = vadd.f32 %v1910, %v2038
      %v2071 = vadd.f32 %v1911, %v2039
      %v2072 = vadd.f32 %v1912, %v2040
      %v2073 = vadd.f32 %v1913, %v2041
      %v2074 = vadd.f32 %v1914, %v2042
      %v2075 = vadd.f32 %v1915, %v2043
      %v2076 = vadd.f32 %v1916, %v2044
      %v2077 = vadd.f32 %v1917, %v2045
      %v2078 = vadd.f32 %v1918, %v2046
      %v2079 = vadd.f32 %v1919, %v2047
      %v2080 = vadd.f32 %v1920, %v2048
      %v2081 = vadd.f32 %v1921, %v2049
      %v2082 = vsel %vm1378, %v2050, %v1182
      %v2083 = vsel %vm1379, %v2051, %v1183
      %v2084 = vsel %vm1380, %v2052, %v1184
      %v2085 = vsel %vm1381, %v2053, %v1185
      %v2086 = vsel %vm1382, %v2054, %v1186
      %v2087 = vsel %vm1383, %v2055, %v1187
      %v2088 = vsel %vm1384, %v2056, %v1188
      %v2089 = vsel %vm1385, %v2057, %v1189
      %v2090 = vsel %vm1386, %v2058, %v1190
      %v2091 = vsel %vm1387, %v2059, %v1191
      %v2092 = vsel %vm1388, %v2060, %v1192
      %v2093 = vsel %vm1389, %v2061, %v1193
      %v2094 = vsel %vm1390, %v2062, %v1194
      %v2095 = vsel %vm1391, %v2063, %v1195
      %v2096 = vsel %vm1392, %v2064, %v1196
      %v2097 = vsel %vm1393, %v2065, %v1197
      %v2098 = vsel %vm1394, %v2066, %v1198
      %v2099 = vsel %vm1395, %v2067, %v1199
      %v2100 = vsel %vm1396, %v2068, %v1200
      %v2101 = vsel %vm1397, %v2069, %v1201
      %v2102 = vsel %vm1398, %v2070, %v1202
      %v2103 = vsel %vm1399, %v2071, %v1203
      %v2104 = vsel %vm1400, %v2072, %v1204
      %v2105 = vsel %vm1401, %v2073, %v1205
      %v2106 = vsel %vm1402, %v2074, %v1206
      %v2107 = vsel %vm1403, %v2075, %v1207
      %v2108 = vsel %vm1404, %v2076, %v1208
      %v2109 = vsel %vm1405, %v2077, %v1209
      %v2110 = vsel %vm1406, %v2078, %v1210
      %v2111 = vsel %vm1407, %v2079, %v1211
      %v2112 = vsel %vm1408, %v2080, %v1212
      %v2113 = vsel %vm1409, %v2081, %v1213
      %vm2114 = vcmp.ge.s32.totalorder %v1250, 0
      %vm2115 = vcmp.ge.s32.totalorder %v1251, 0
      %vm2116 = vcmp.ge.s32.totalorder %v1252, 0
      %vm2117 = vcmp.ge.s32.totalorder %v1253, 0
      %vm2118 = vcmp.ge.s32.totalorder %v1254, 0
      %vm2119 = vcmp.ge.s32.totalorder %v1255, 0
      %vm2120 = vcmp.ge.s32.totalorder %v1256, 0
      %vm2121 = vcmp.ge.s32.totalorder %v1257, 0
      %vm2122 = vcmp.ge.s32.totalorder %v1258, 0
      %vm2123 = vcmp.ge.s32.totalorder %v1259, 0
      %vm2124 = vcmp.ge.s32.totalorder %v1260, 0
      %vm2125 = vcmp.ge.s32.totalorder %v1261, 0
      %vm2126 = vcmp.ge.s32.totalorder %v1262, 0
      %vm2127 = vcmp.ge.s32.totalorder %v1263, 0
      %vm2128 = vcmp.ge.s32.totalorder %v1264, 0
      %vm2129 = vcmp.ge.s32.totalorder %v1265, 0
      %vm2130 = vcmp.ge.s32.totalorder %v1266, 0
      %vm2131 = vcmp.ge.s32.totalorder %v1267, 0
      %vm2132 = vcmp.ge.s32.totalorder %v1268, 0
      %vm2133 = vcmp.ge.s32.totalorder %v1269, 0
      %vm2134 = vcmp.ge.s32.totalorder %v1270, 0
      %vm2135 = vcmp.ge.s32.totalorder %v1271, 0
      %vm2136 = vcmp.ge.s32.totalorder %v1272, 0
      %vm2137 = vcmp.ge.s32.totalorder %v1273, 0
      %vm2138 = vcmp.ge.s32.totalorder %v1274, 0
      %vm2139 = vcmp.ge.s32.totalorder %v1275, 0
      %vm2140 = vcmp.ge.s32.totalorder %v1276, 0
      %vm2141 = vcmp.ge.s32.totalorder %v1277, 0
      %vm2142 = vcmp.ge.s32.totalorder %v1278, 0
      %vm2143 = vcmp.ge.s32.totalorder %v1279, 0
      %vm2144 = vcmp.ge.s32.totalorder %v1280, 0
      %vm2145 = vcmp.ge.s32.totalorder %v1281, 0
      %vm2146 = vcmp.lt.s32.totalorder %v1250, 128
      %vm2147 = vcmp.lt.s32.totalorder %v1251, 128
      %vm2148 = vcmp.lt.s32.totalorder %v1252, 128
      %vm2149 = vcmp.lt.s32.totalorder %v1253, 128
      %vm2150 = vcmp.lt.s32.totalorder %v1254, 128
      %vm2151 = vcmp.lt.s32.totalorder %v1255, 128
      %vm2152 = vcmp.lt.s32.totalorder %v1256, 128
      %vm2153 = vcmp.lt.s32.totalorder %v1257, 128
      %vm2154 = vcmp.lt.s32.totalorder %v1258, 128
      %vm2155 = vcmp.lt.s32.totalorder %v1259, 128
      %vm2156 = vcmp.lt.s32.totalorder %v1260, 128
      %vm2157 = vcmp.lt.s32.totalorder %v1261, 128
      %vm2158 = vcmp.lt.s32.totalorder %v1262, 128
      %vm2159 = vcmp.lt.s32.totalorder %v1263, 128
      %vm2160 = vcmp.lt.s32.totalorder %v1264, 128
      %vm2161 = vcmp.lt.s32.totalorder %v1265, 128
      %vm2162 = vcmp.lt.s32.totalorder %v1266, 128
      %vm2163 = vcmp.lt.s32.totalorder %v1267, 128
      %vm2164 = vcmp.lt.s32.totalorder %v1268, 128
      %vm2165 = vcmp.lt.s32.totalorder %v1269, 128
      %vm2166 = vcmp.lt.s32.totalorder %v1270, 128
      %vm2167 = vcmp.lt.s32.totalorder %v1271, 128
      %vm2168 = vcmp.lt.s32.totalorder %v1272, 128
      %vm2169 = vcmp.lt.s32.totalorder %v1273, 128
      %vm2170 = vcmp.lt.s32.totalorder %v1274, 128
      %vm2171 = vcmp.lt.s32.totalorder %v1275, 128
      %vm2172 = vcmp.lt.s32.totalorder %v1276, 128
      %vm2173 = vcmp.lt.s32.totalorder %v1277, 128
      %vm2174 = vcmp.lt.s32.totalorder %v1278, 128
      %vm2175 = vcmp.lt.s32.totalorder %v1279, 128
      %vm2176 = vcmp.lt.s32.totalorder %v1280, 128
      %vm2177 = vcmp.lt.s32.totalorder %v1281, 128
      %vm2178 = vmand %vm2114, %vm2146
      %vm2179 = vmand %vm2115, %vm2147
      %vm2180 = vmand %vm2116, %vm2148
      %vm2181 = vmand %vm2117, %vm2149
      %vm2182 = vmand %vm2118, %vm2150
      %vm2183 = vmand %vm2119, %vm2151
      %vm2184 = vmand %vm2120, %vm2152
      %vm2185 = vmand %vm2121, %vm2153
      %vm2186 = vmand %vm2122, %vm2154
      %vm2187 = vmand %vm2123, %vm2155
      %vm2188 = vmand %vm2124, %vm2156
      %vm2189 = vmand %vm2125, %vm2157
      %vm2190 = vmand %vm2126, %vm2158
      %vm2191 = vmand %vm2127, %vm2159
      %vm2192 = vmand %vm2128, %vm2160
      %vm2193 = vmand %vm2129, %vm2161
      %vm2194 = vmand %vm2130, %vm2162
      %vm2195 = vmand %vm2131, %vm2163
      %vm2196 = vmand %vm2132, %vm2164
      %vm2197 = vmand %vm2133, %vm2165
      %vm2198 = vmand %vm2134, %vm2166
      %vm2199 = vmand %vm2135, %vm2167
      %vm2200 = vmand %vm2136, %vm2168
      %vm2201 = vmand %vm2137, %vm2169
      %vm2202 = vmand %vm2138, %vm2170
      %vm2203 = vmand %vm2139, %vm2171
      %vm2204 = vmand %vm2140, %vm2172
      %vm2205 = vmand %vm2141, %vm2173
      %vm2206 = vmand %vm2142, %vm2174
      %vm2207 = vmand %vm2143, %vm2175
      %vm2208 = vmand %vm2144, %vm2176
      %vm2209 = vmand %vm2145, %vm2177
      %v2210 = vld [vmem:[#allocation4] sm:$0xff]
      %v2211 = vld [vmem:[#allocation4 + $0x8] sm:$0xff]
      %v2212 = vld [vmem:[#allocation4 + $0x10] sm:$0xff]
      %v2213 = vld [vmem:[#allocation4 + $0x18] sm:$0xff]
      %v2214 = vld [vmem:[#allocation4 + $0x20] sm:$0xff]
      %v2215 = vld [vmem:[#allocation4 + $0x28] sm:$0xff]
      %v2216 = vld [vmem:[#allocation4 + $0x30] sm:$0xff]
      %v2217 = vld [vmem:[#allocation4 + $0x38] sm:$0xff]
      %v2218 = vld [vmem:[#allocation4 + $0x40] sm:$0xff]
      %v2219 = vld [vmem:[#allocation4 + $0x48] sm:$0xff]
      %v2220 = vld [vmem:[#allocation4 + $0x50] sm:$0xff]
      %v2221 = vld [vmem:[#allocation4 + $0x58] sm:$0xff]
      %v2222 = vld [vmem:[#allocation4 + $0x60] sm:$0xff]
      %v2223 = vld [vmem:[#allocation4 + $0x68] sm:$0xff]
      %v2224 = vld [vmem:[#allocation4 + $0x70] sm:$0xff]
      %v2225 = vld [vmem:[#allocation4 + $0x78] sm:$0xff]
      %v2226 = vld [vmem:[#allocation4 + $0x80] sm:$0xff]
      %v2227 = vld [vmem:[#allocation4 + $0x88] sm:$0xff]
      %v2228 = vld [vmem:[#allocation4 + $0x90] sm:$0xff]
      %v2229 = vld [vmem:[#allocation4 + $0x98] sm:$0xff]
      %v2230 = vld [vmem:[#allocation4 + $0xa0] sm:$0xff]
      %v2231 = vld [vmem:[#allocation4 + $0xa8] sm:$0xff]
      %v2232 = vld [vmem:[#allocation4 + $0xb0] sm:$0xff]
      %v2233 = vld [vmem:[#allocation4 + $0xb8] sm:$0xff]
      %v2234 = vld [vmem:[#allocation4 + $0xc0] sm:$0xff]
      %v2235 = vld [vmem:[#allocation4 + $0xc8] sm:$0xff]
      %v2236 = vld [vmem:[#allocation4 + $0xd0] sm:$0xff]
      %v2237 = vld [vmem:[#allocation4 + $0xd8] sm:$0xff]
      %v2238 = vld [vmem:[#allocation4 + $0xe0] sm:$0xff]
      %v2239 = vld [vmem:[#allocation4 + $0xe8] sm:$0xff]
      %v2240 = vld [vmem:[#allocation4 + $0xf0] sm:$0xff]
      %v2241 = vld [vmem:[#allocation4 + $0xf8] sm:$0xff]
      %v2242 = vsel %vm2178, %v2050, 0.0
      %v2243 = vsel %vm2179, %v2051, 0.0
      %v2244 = vsel %vm2180, %v2052, 0.0
      %v2245 = vsel %vm2181, %v2053, 0.0
      %v2246 = vsel %vm2182, %v2054, 0.0
      %v2247 = vsel %vm2183, %v2055, 0.0
      %v2248 = vsel %vm2184, %v2056, 0.0
      %v2249 = vsel %vm2185, %v2057, 0.0
      %v2250 = vsel %vm2186, %v2058, 0.0
      %v2251 = vsel %vm2187, %v2059, 0.0
      %v2252 = vsel %vm2188, %v2060, 0.0
      %v2253 = vsel %vm2189, %v2061, 0.0
      %v2254 = vsel %vm2190, %v2062, 0.0
      %v2255 = vsel %vm2191, %v2063, 0.0
      %v2256 = vsel %vm2192, %v2064, 0.0
      %v2257 = vsel %vm2193, %v2065, 0.0
      %v2258 = vsel %vm2194, %v2066, 0.0
      %v2259 = vsel %vm2195, %v2067, 0.0
      %v2260 = vsel %vm2196, %v2068, 0.0
      %v2261 = vsel %vm2197, %v2069, 0.0
      %v2262 = vsel %vm2198, %v2070, 0.0
      %v2263 = vsel %vm2199, %v2071, 0.0
      %v2264 = vsel %vm2200, %v2072, 0.0
      %v2265 = vsel %vm2201, %v2073, 0.0
      %v2266 = vsel %vm2202, %v2074, 0.0
      %v2267 = vsel %vm2203, %v2075, 0.0
      %v2268 = vsel %vm2204, %v2076, 0.0
      %v2269 = vsel %vm2205, %v2077, 0.0
      %v2270 = vsel %vm2206, %v2078, 0.0
      %v2271 = vsel %vm2207, %v2079, 0.0
      %v2272 = vsel %vm2208, %v2080, 0.0
      %v2273 = vsel %vm2209, %v2081, 0.0
      %v2274 = vadd.f32 %v2210, %v2242
      %v2275 = vadd.f32 %v2211, %v2243
      %v2276 = vadd.f32 %v2212, %v2244
      %v2277 = vadd.f32 %v2213, %v2245
      %v2278 = vadd.f32 %v2214, %v2246
      %v2279 = vadd.f32 %v2215, %v2247
      %v2280 = vadd.f32 %v2216, %v2248
      %v2281 = vadd.f32 %v2217, %v2249
      %v2282 = vadd.f32 %v2218, %v2250
      %v2283 = vadd.f32 %v2219, %v2251
      %v2284 = vadd.f32 %v2220, %v2252
      %v2285 = vadd.f32 %v2221, %v2253
      %v2286 = vadd.f32 %v2222, %v2254
      %v2287 = vadd.f32 %v2223, %v2255
      %v2288 = vadd.f32 %v2224, %v2256
      %v2289 = vadd.f32 %v2225, %v2257
      %v2290 = vadd.f32 %v2226, %v2258
      %v2291 = vadd.f32 %v2227, %v2259
      %v2292 = vadd.f32 %v2228, %v2260
      %v2293 = vadd.f32 %v2229, %v2261
      %v2294 = vadd.f32 %v2230, %v2262
      %v2295 = vadd.f32 %v2231, %v2263
      %v2296 = vadd.f32 %v2232, %v2264
      %v2297 = vadd.f32 %v2233, %v2265
      %v2298 = vadd.f32 %v2234, %v2266
      %v2299 = vadd.f32 %v2235, %v2267
      %v2300 = vadd.f32 %v2236, %v2268
      %v2301 = vadd.f32 %v2237, %v2269
      %v2302 = vadd.f32 %v2238, %v2270
      %v2303 = vadd.f32 %v2239, %v2271
      %v2304 = vadd.f32 %v2240, %v2272
      %v2305 = vadd.f32 %v2241, %v2273
      %vm2306 = vcmask 7168
      %2307 = vst.msk [vmem:[#allocation4] sm:$0xff] %vm2306, %v2274
      %2308 = vst.msk [vmem:[#allocation4 + $0x8] sm:$0xff] %vm2306, %v2275
      %2309 = vst.msk [vmem:[#allocation4 + $0x10] sm:$0xff] %vm2306, %v2276
      %2310 = vst.msk [vmem:[#allocation4 + $0x18] sm:$0xff] %vm2306, %v2277
      %2311 = vst.msk [vmem:[#allocation4 + $0x20] sm:$0xff] %vm2306, %v2278
      %2312 = vst.msk [vmem:[#allocation4 + $0x28] sm:$0xff] %vm2306, %v2279
      %2313 = vst.msk [vmem:[#allocation4 + $0x30] sm:$0xff] %vm2306, %v2280
      %2314 = vst.msk [vmem:[#allocation4 + $0x38] sm:$0xff] %vm2306, %v2281
      %2315 = vst.msk [vmem:[#allocation4 + $0x40] sm:$0xff] %vm2306, %v2282
      %2316 = vst.msk [vmem:[#allocation4 + $0x48] sm:$0xff] %vm2306, %v2283
      %2317 = vst.msk [vmem:[#allocation4 + $0x50] sm:$0xff] %vm2306, %v2284
      %2318 = vst.msk [vmem:[#allocation4 + $0x58] sm:$0xff] %vm2306, %v2285
      %2319 = vst.msk [vmem:[#allocation4 + $0x60] sm:$0xff] %vm2306, %v2286
      %2320 = vst.msk [vmem:[#allocation4 + $0x68] sm:$0xff] %vm2306, %v2287
      %2321 = vst.msk [vmem:[#allocation4 + $0x70] sm:$0xff] %vm2306, %v2288
      %2322 = vst.msk [vmem:[#allocation4 + $0x78] sm:$0xff] %vm2306, %v2289
      %2323 = vst.msk [vmem:[#allocation4 + $0x80] sm:$0xff] %vm2306, %v2290
      %2324 = vst.msk [vmem:[#allocation4 + $0x88] sm:$0xff] %vm2306, %v2291
      %2325 = vst.msk [vmem:[#allocation4 + $0x90] sm:$0xff] %vm2306, %v2292
      %2326 = vst.msk [vmem:[#allocation4 + $0x98] sm:$0xff] %vm2306, %v2293
      %2327 = vst.msk [vmem:[#allocation4 + $0xa0] sm:$0xff] %vm2306, %v2294
      %2328 = vst.msk [vmem:[#allocation4 + $0xa8] sm:$0xff] %vm2306, %v2295
      %2329 = vst.msk [vmem:[#allocation4 + $0xb0] sm:$0xff] %vm2306, %v2296
      %2330 = vst.msk [vmem:[#allocation4 + $0xb8] sm:$0xff] %vm2306, %v2297
      %2331 = vst.msk [vmem:[#allocation4 + $0xc0] sm:$0xff] %vm2306, %v2298
      %2332 = vst.msk [vmem:[#allocation4 + $0xc8] sm:$0xff] %vm2306, %v2299
      %2333 = vst.msk [vmem:[#allocation4 + $0xd0] sm:$0xff] %vm2306, %v2300
      %2334 = vst.msk [vmem:[#allocation4 + $0xd8] sm:$0xff] %vm2306, %v2301
      %2335 = vst.msk [vmem:[#allocation4 + $0xe0] sm:$0xff] %vm2306, %v2302
      %2336 = vst.msk [vmem:[#allocation4 + $0xe8] sm:$0xff] %vm2306, %v2303
      %2337 = vst.msk [vmem:[#allocation4 + $0xf0] sm:$0xff] %vm2306, %v2304
      %2338 = vst.msk [vmem:[#allocation4 + $0xf8] sm:$0xff] %vm2306, %v2305
      %s2339 = ssub.s32 5, %s1248
      %v2340 = vstv %s2339
      %vm2341 = vcmp.lt.s32.totalorder %v1215, %v2340
      %v2342 = vsel %vm2341, %v2082, -1e+30
      %v2343 = vsel %vm2341, %v2083, -1e+30
      %v2344 = vsel %vm2341, %v2084, -1e+30
      %v2345 = vsel %vm2341, %v2085, -1e+30
      %v2346 = vsel %vm2341, %v2086, -1e+30
      %v2347 = vsel %vm2341, %v2087, -1e+30
      %v2348 = vsel %vm2341, %v2088, -1e+30
      %v2349 = vsel %vm2341, %v2089, -1e+30
      %v2350 = vsel %vm2341, %v2090, -1e+30
      %v2351 = vsel %vm2341, %v2091, -1e+30
      %v2352 = vsel %vm2341, %v2092, -1e+30
      %v2353 = vsel %vm2341, %v2093, -1e+30
      %v2354 = vsel %vm2341, %v2094, -1e+30
      %v2355 = vsel %vm2341, %v2095, -1e+30
      %v2356 = vsel %vm2341, %v2096, -1e+30
      %v2357 = vsel %vm2341, %v2097, -1e+30
      %v2358 = vsel %vm2341, %v2098, -1e+30
      %v2359 = vsel %vm2341, %v2099, -1e+30
      %v2360 = vsel %vm2341, %v2100, -1e+30
      %v2361 = vsel %vm2341, %v2101, -1e+30
      %v2362 = vsel %vm2341, %v2102, -1e+30
      %v2363 = vsel %vm2341, %v2103, -1e+30
      %v2364 = vsel %vm2341, %v2104, -1e+30
      %v2365 = vsel %vm2341, %v2105, -1e+30
      %v2366 = vsel %vm2341, %v2106, -1e+30
      %v2367 = vsel %vm2341, %v2107, -1e+30
      %v2368 = vsel %vm2341, %v2108, -1e+30
      %v2369 = vsel %vm2341, %v2109, -1e+30
      %v2370 = vsel %vm2341, %v2110, -1e+30
      %v2371 = vsel %vm2341, %v2111, -1e+30
      %v2372 = vsel %vm2341, %v2112, -1e+30
      %v2373 = vsel %vm2341, %v2113, -1e+30
      %2374 = vmax.xlane.f32.xlu0 %v2342
      %v2375 = vpop.xlane.xlu0 %2374
      %2376 = vmax.xlane.f32.xlu0 %v2343
      %v2377 = vpop.xlane.xlu0 %2376
      %2378 = vmax.xlane.f32.xlu0 %v2344
      %v2379 = vpop.xlane.xlu0 %2378
      %2380 = vmax.xlane.f32.xlu0 %v2345
      %v2381 = vpop.xlane.xlu0 %2380
      %2382 = vmax.xlane.f32.xlu0 %v2346
      %v2383 = vpop.xlane.xlu0 %2382
      %2384 = vmax.xlane.f32.xlu0 %v2347
      %v2385 = vpop.xlane.xlu0 %2384
      %2386 = vmax.xlane.f32.xlu0 %v2348
      %v2387 = vpop.xlane.xlu0 %2386
      %2388 = vmax.xlane.f32.xlu0 %v2349
      %v2389 = vpop.xlane.xlu0 %2388
      %2390 = vmax.xlane.f32.xlu0 %v2350
      %v2391 = vpop.xlane.xlu0 %2390
      %2392 = vmax.xlane.f32.xlu0 %v2351
      %v2393 = vpop.xlane.xlu0 %2392
      %2394 = vmax.xlane.f32.xlu0 %v2352
      %v2395 = vpop.xlane.xlu0 %2394
      %2396 = vmax.xlane.f32.xlu0 %v2353
      %v2397 = vpop.xlane.xlu0 %2396
      %2398 = vmax.xlane.f32.xlu0 %v2354
      %v2399 = vpop.xlane.xlu0 %2398
      %2400 = vmax.xlane.f32.xlu0 %v2355
      %v2401 = vpop.xlane.xlu0 %2400
      %2402 = vmax.xlane.f32.xlu0 %v2356
      %v2403 = vpop.xlane.xlu0 %2402
      %2404 = vmax.xlane.f32.xlu0 %v2357
      %v2405 = vpop.xlane.xlu0 %2404
      %2406 = vmax.xlane.f32.xlu0 %v2358
      %v2407 = vpop.xlane.xlu0 %2406
      %2408 = vmax.xlane.f32.xlu0 %v2359
      %v2409 = vpop.xlane.xlu0 %2408
      %2410 = vmax.xlane.f32.xlu0 %v2360
      %v2411 = vpop.xlane.xlu0 %2410
      %2412 = vmax.xlane.f32.xlu0 %v2361
      %v2413 = vpop.xlane.xlu0 %2412
      %2414 = vmax.xlane.f32.xlu0 %v2362
      %v2415 = vpop.xlane.xlu0 %2414
      %2416 = vmax.xlane.f32.xlu0 %v2363
      %v2417 = vpop.xlane.xlu0 %2416
      %2418 = vmax.xlane.f32.xlu0 %v2364
      %v2419 = vpop.xlane.xlu0 %2418
      %2420 = vmax.xlane.f32.xlu0 %v2365
      %v2421 = vpop.xlane.xlu0 %2420
      %2422 = vmax.xlane.f32.xlu0 %v2366
      %v2423 = vpop.xlane.xlu0 %2422
      %2424 = vmax.xlane.f32.xlu0 %v2367
      %v2425 = vpop.xlane.xlu0 %2424
      %2426 = vmax.xlane.f32.xlu0 %v2368
      %v2427 = vpop.xlane.xlu0 %2426
      %2428 = vmax.xlane.f32.xlu0 %v2369
      %v2429 = vpop.xlane.xlu0 %2428
      %2430 = vmax.xlane.f32.xlu0 %v2370
      %v2431 = vpop.xlane.xlu0 %2430
      %2432 = vmax.xlane.f32.xlu0 %v2371
      %v2433 = vpop.xlane.xlu0 %2432
      %2434 = vmax.xlane.f32.xlu0 %v2372
      %v2435 = vpop.xlane.xlu0 %2434
      %2436 = vmax.xlane.f32.xlu0 %v2373
      %v2437 = vpop.xlane.xlu0 %2436
      %v2438 = vld [vmem:[#allocation2] sm:$0xff]
      %v2439 = vld [vmem:[#allocation2 + $0x8] sm:$0xff]
      %v2440 = vld [vmem:[#allocation2 + $0x10] sm:$0xff]
      %v2441 = vld [vmem:[#allocation2 + $0x18] sm:$0xff]
      %v2442 = vld [vmem:[#allocation2 + $0x20] sm:$0xff]
      %v2443 = vld [vmem:[#allocation2 + $0x28] sm:$0xff]
      %v2444 = vld [vmem:[#allocation2 + $0x30] sm:$0xff]
      %v2445 = vld [vmem:[#allocation2 + $0x38] sm:$0xff]
      %v2446 = vld [vmem:[#allocation2 + $0x40] sm:$0xff]
      %v2447 = vld [vmem:[#allocation2 + $0x48] sm:$0xff]
      %v2448 = vld [vmem:[#allocation2 + $0x50] sm:$0xff]
      %v2449 = vld [vmem:[#allocation2 + $0x58] sm:$0xff]
      %v2450 = vld [vmem:[#allocation2 + $0x60] sm:$0xff]
      %v2451 = vld [vmem:[#allocation2 + $0x68] sm:$0xff]
      %v2452 = vld [vmem:[#allocation2 + $0x70] sm:$0xff]
      %v2453 = vld [vmem:[#allocation2 + $0x78] sm:$0xff]
      %v2454 = vld [vmem:[#allocation2 + $0x80] sm:$0xff]
      %v2455 = vld [vmem:[#allocation2 + $0x88] sm:$0xff]
      %v2456 = vld [vmem:[#allocation2 + $0x90] sm:$0xff]
      %v2457 = vld [vmem:[#allocation2 + $0x98] sm:$0xff]
      %v2458 = vld [vmem:[#allocation2 + $0xa0] sm:$0xff]
      %v2459 = vld [vmem:[#allocation2 + $0xa8] sm:$0xff]
      %v2460 = vld [vmem:[#allocation2 + $0xb0] sm:$0xff]
      %v2461 = vld [vmem:[#allocation2 + $0xb8] sm:$0xff]
      %v2462 = vld [vmem:[#allocation2 + $0xc0] sm:$0xff]
      %v2463 = vld [vmem:[#allocation2 + $0xc8] sm:$0xff]
      %v2464 = vld [vmem:[#allocation2 + $0xd0] sm:$0xff]
      %v2465 = vld [vmem:[#allocation2 + $0xd8] sm:$0xff]
      %v2466 = vld [vmem:[#allocation2 + $0xe0] sm:$0xff]
      %v2467 = vld [vmem:[#allocation2 + $0xe8] sm:$0xff]
      %v2468 = vld [vmem:[#allocation2 + $0xf0] sm:$0xff]
      %v2469 = vld [vmem:[#allocation2 + $0xf8] sm:$0xff]
      %v2470 = vmax.f32 %v2438, %v2375
      %v2471 = vmax.f32 %v2439, %v2377
      %v2472 = vmax.f32 %v2440, %v2379
      %v2473 = vmax.f32 %v2441, %v2381
      %v2474 = vmax.f32 %v2442, %v2383
      %v2475 = vmax.f32 %v2443, %v2385
      %v2476 = vmax.f32 %v2444, %v2387
      %v2477 = vmax.f32 %v2445, %v2389
      %v2478 = vmax.f32 %v2446, %v2391
      %v2479 = vmax.f32 %v2447, %v2393
      %v2480 = vmax.f32 %v2448, %v2395
      %v2481 = vmax.f32 %v2449, %v2397
      %v2482 = vmax.f32 %v2450, %v2399
      %v2483 = vmax.f32 %v2451, %v2401
      %v2484 = vmax.f32 %v2452, %v2403
      %v2485 = vmax.f32 %v2453, %v2405
      %v2486 = vmax.f32 %v2454, %v2407
      %v2487 = vmax.f32 %v2455, %v2409
      %v2488 = vmax.f32 %v2456, %v2411
      %v2489 = vmax.f32 %v2457, %v2413
      %v2490 = vmax.f32 %v2458, %v2415
      %v2491 = vmax.f32 %v2459, %v2417
      %v2492 = vmax.f32 %v2460, %v2419
      %v2493 = vmax.f32 %v2461, %v2421
      %v2494 = vmax.f32 %v2462, %v2423
      %v2495 = vmax.f32 %v2463, %v2425
      %v2496 = vmax.f32 %v2464, %v2427
      %v2497 = vmax.f32 %v2465, %v2429
      %v2498 = vmax.f32 %v2466, %v2431
      %v2499 = vmax.f32 %v2467, %v2433
      %v2500 = vmax.f32 %v2468, %v2435
      %v2501 = vmax.f32 %v2469, %v2437
      %v2502 = vsub.f32 %v2438, %v2470
      %v2503 = vsub.f32 %v2439, %v2471
      %v2504 = vsub.f32 %v2440, %v2472
      %v2505 = vsub.f32 %v2441, %v2473
      %v2506 = vsub.f32 %v2442, %v2474
      %v2507 = vsub.f32 %v2443, %v2475
      %v2508 = vsub.f32 %v2444, %v2476
      %v2509 = vsub.f32 %v2445, %v2477
      %v2510 = vsub.f32 %v2446, %v2478
      %v2511 = vsub.f32 %v2447, %v2479
      %v2512 = vsub.f32 %v2448, %v2480
      %v2513 = vsub.f32 %v2449, %v2481
      %v2514 = vsub.f32 %v2450, %v2482
      %v2515 = vsub.f32 %v2451, %v2483
      %v2516 = vsub.f32 %v2452, %v2484
      %v2517 = vsub.f32 %v2453, %v2485
      %v2518 = vsub.f32 %v2454, %v2486
      %v2519 = vsub.f32 %v2455, %v2487
      %v2520 = vsub.f32 %v2456, %v2488
      %v2521 = vsub.f32 %v2457, %v2489
      %v2522 = vsub.f32 %v2458, %v2490
      %v2523 = vsub.f32 %v2459, %v2491
      %v2524 = vsub.f32 %v2460, %v2492
      %v2525 = vsub.f32 %v2461, %v2493
      %v2526 = vsub.f32 %v2462, %v2494
      %v2527 = vsub.f32 %v2463, %v2495
      %v2528 = vsub.f32 %v2464, %v2496
      %v2529 = vsub.f32 %v2465, %v2497
      %v2530 = vsub.f32 %v2466, %v2498
      %v2531 = vsub.f32 %v2467, %v2499
      %v2532 = vsub.f32 %v2468, %v2500
      %v2533 = vsub.f32 %v2469, %v2501
      %v2534 = vmul.f32 %v2502, 1.442695
      %v2535 = vpow.pop %v2534
      %v2536 = vmul.f32 %v2503, 1.442695
      %v2537 = vpow.pop %v2536
      %v2538 = vmul.f32 %v2504, 1.442695
      %v2539 = vpow.pop %v2538
      %v2540 = vmul.f32 %v2505, 1.442695
      %v2541 = vpow.pop %v2540
      %v2542 = vmul.f32 %v2506, 1.442695
      %v2543 = vpow.pop %v2542
      %v2544 = vmul.f32 %v2507, 1.442695
      %v2545 = vpow.pop %v2544
      %v2546 = vmul.f32 %v2508, 1.442695
      %v2547 = vpow.pop %v2546
      %v2548 = vmul.f32 %v2509, 1.442695
      %v2549 = vpow.pop %v2548
      %v2550 = vmul.f32 %v2510, 1.442695
      %v2551 = vpow.pop %v2550
      %v2552 = vmul.f32 %v2511, 1.442695
      %v2553 = vpow.pop %v2552
      %v2554 = vmul.f32 %v2512, 1.442695
      %v2555 = vpow.pop %v2554
      %v2556 = vmul.f32 %v2513, 1.442695
      %v2557 = vpow.pop %v2556
      %v2558 = vmul.f32 %v2514, 1.442695
      %v2559 = vpow.pop %v2558
      %v2560 = vmul.f32 %v2515, 1.442695
      %v2561 = vpow.pop %v2560
      %v2562 = vmul.f32 %v2516, 1.442695
      %v2563 = vpow.pop %v2562
      %v2564 = vmul.f32 %v2517, 1.442695
      %v2565 = vpow.pop %v2564
      %v2566 = vmul.f32 %v2518, 1.442695
      %v2567 = vpow.pop %v2566
      %v2568 = vmul.f32 %v2519, 1.442695
      %v2569 = vpow.pop %v2568
      %v2570 = vmul.f32 %v2520, 1.442695
      %v2571 = vpow.pop %v2570
      %v2572 = vmul.f32 %v2521, 1.442695
      %v2573 = vpow.pop %v2572
      %v2574 = vmul.f32 %v2522, 1.442695
      %v2575 = vpow.pop %v2574
      %v2576 = vmul.f32 %v2523, 1.442695
      %v2577 = vpow.pop %v2576
      %v2578 = vmul.f32 %v2524, 1.442695
      %v2579 = vpow.pop %v2578
      %v2580 = vmul.f32 %v2525, 1.442695
      %v2581 = vpow.pop %v2580
      %v2582 = vmul.f32 %v2526, 1.442695
      %v2583 = vpow.pop %v2582
      %v2584 = vmul.f32 %v2527, 1.442695
      %v2585 = vpow.pop %v2584
      %v2586 = vmul.f32 %v2528, 1.442695
      %v2587 = vpow.pop %v2586
      %v2588 = vmul.f32 %v2529, 1.442695
      %v2589 = vpow.pop %v2588
      %v2590 = vmul.f32 %v2530, 1.442695
      %v2591 = vpow.pop %v2590
      %v2592 = vmul.f32 %v2531, 1.442695
      %v2593 = vpow.pop %v2592
      %v2594 = vmul.f32 %v2532, 1.442695
      %v2595 = vpow.pop %v2594
      %v2596 = vmul.f32 %v2533, 1.442695
      %v2597 = vpow.pop %v2596
      %v2598 = vld [vmem:[#allocation3] sm:$0xff]
      %v2599 = vld [vmem:[#allocation3 + $0x8] sm:$0xff]
      %v2600 = vld [vmem:[#allocation3 + $0x10] sm:$0xff]
      %v2601 = vld [vmem:[#allocation3 + $0x18] sm:$0xff]
      %v2602 = vld [vmem:[#allocation3 + $0x20] sm:$0xff]
      %v2603 = vld [vmem:[#allocation3 + $0x28] sm:$0xff]
      %v2604 = vld [vmem:[#allocation3 + $0x30] sm:$0xff]
      %v2605 = vld [vmem:[#allocation3 + $0x38] sm:$0xff]
      %v2606 = vld [vmem:[#allocation3 + $0x40] sm:$0xff]
      %v2607 = vld [vmem:[#allocation3 + $0x48] sm:$0xff]
      %v2608 = vld [vmem:[#allocation3 + $0x50] sm:$0xff]
      %v2609 = vld [vmem:[#allocation3 + $0x58] sm:$0xff]
      %v2610 = vld [vmem:[#allocation3 + $0x60] sm:$0xff]
      %v2611 = vld [vmem:[#allocation3 + $0x68] sm:$0xff]
      %v2612 = vld [vmem:[#allocation3 + $0x70] sm:$0xff]
      %v2613 = vld [vmem:[#allocation3 + $0x78] sm:$0xff]
      %v2614 = vld [vmem:[#allocation3 + $0x80] sm:$0xff]
      %v2615 = vld [vmem:[#allocation3 + $0x88] sm:$0xff]
      %v2616 = vld [vmem:[#allocation3 + $0x90] sm:$0xff]
      %v2617 = vld [vmem:[#allocation3 + $0x98] sm:$0xff]
      %v2618 = vld [vmem:[#allocation3 + $0xa0] sm:$0xff]
      %v2619 = vld [vmem:[#allocation3 + $0xa8] sm:$0xff]
      %v2620 = vld [vmem:[#allocation3 + $0xb0] sm:$0xff]
      %v2621 = vld [vmem:[#allocation3 + $0xb8] sm:$0xff]
      %v2622 = vld [vmem:[#allocation3 + $0xc0] sm:$0xff]
      %v2623 = vld [vmem:[#allocation3 + $0xc8] sm:$0xff]
      %v2624 = vld [vmem:[#allocation3 + $0xd0] sm:$0xff]
      %v2625 = vld [vmem:[#allocation3 + $0xd8] sm:$0xff]
      %v2626 = vld [vmem:[#allocation3 + $0xe0] sm:$0xff]
      %v2627 = vld [vmem:[#allocation3 + $0xe8] sm:$0xff]
      %v2628 = vld [vmem:[#allocation3 + $0xf0] sm:$0xff]
      %v2629 = vld [vmem:[#allocation3 + $0xf8] sm:$0xff]
      %v2630 = vmul.f32 %v2535, %v2598
      %v2631 = vmul.f32 %v2537, %v2599
      %v2632 = vmul.f32 %v2539, %v2600
      %v2633 = vmul.f32 %v2541, %v2601
      %v2634 = vmul.f32 %v2543, %v2602
      %v2635 = vmul.f32 %v2545, %v2603
      %v2636 = vmul.f32 %v2547, %v2604
      %v2637 = vmul.f32 %v2549, %v2605
      %v2638 = vmul.f32 %v2551, %v2606
      %v2639 = vmul.f32 %v2553, %v2607
      %v2640 = vmul.f32 %v2555, %v2608
      %v2641 = vmul.f32 %v2557, %v2609
      %v2642 = vmul.f32 %v2559, %v2610
      %v2643 = vmul.f32 %v2561, %v2611
      %v2644 = vmul.f32 %v2563, %v2612
      %v2645 = vmul.f32 %v2565, %v2613
      %v2646 = vmul.f32 %v2567, %v2614
      %v2647 = vmul.f32 %v2569, %v2615
      %v2648 = vmul.f32 %v2571, %v2616
      %v2649 = vmul.f32 %v2573, %v2617
      %v2650 = vmul.f32 %v2575, %v2618
      %v2651 = vmul.f32 %v2577, %v2619
      %v2652 = vmul.f32 %v2579, %v2620
      %v2653 = vmul.f32 %v2581, %v2621
      %v2654 = vmul.f32 %v2583, %v2622
      %v2655 = vmul.f32 %v2585, %v2623
      %v2656 = vmul.f32 %v2587, %v2624
      %v2657 = vmul.f32 %v2589, %v2625
      %v2658 = vmul.f32 %v2591, %v2626
      %v2659 = vmul.f32 %v2593, %v2627
      %v2660 = vmul.f32 %v2595, %v2628
      %v2661 = vmul.f32 %v2597, %v2629
      %2663 = vset.pattern.permute.xlu0 0
      %2664 = vperm.xlu0 %2663, %v2470
      %v2665 = vpop.permute.xlu0 %2664
      %2668 = vset.pattern.permute.xlu0 0
      %2669 = vperm.xlu0 %2668, %v2471
      %v2670 = vpop.permute.xlu0 %2669
      %2673 = vset.pattern.permute.xlu0 0
      %2674 = vperm.xlu0 %2673, %v2472
      %v2675 = vpop.permute.xlu0 %2674
      %2678 = vset.pattern.permute.xlu0 0
      %2679 = vperm.xlu0 %2678, %v2473
      %v2680 = vpop.permute.xlu0 %2679
      %2683 = vset.pattern.permute.xlu0 0
      %2684 = vperm.xlu0 %2683, %v2474
      %v2685 = vpop.permute.xlu0 %2684
      %2688 = vset.pattern.permute.xlu0 0
      %2689 = vperm.xlu0 %2688, %v2475
      %v2690 = vpop.permute.xlu0 %2689
      %2693 = vset.pattern.permute.xlu0 0
      %2694 = vperm.xlu0 %2693, %v2476
      %v2695 = vpop.permute.xlu0 %2694
      %2698 = vset.pattern.permute.xlu0 0
      %2699 = vperm.xlu0 %2698, %v2477
      %v2700 = vpop.permute.xlu0 %2699
      %2703 = vset.pattern.permute.xlu0 0
      %2704 = vperm.xlu0 %2703, %v2478
      %v2705 = vpop.permute.xlu0 %2704
      %2708 = vset.pattern.permute.xlu0 0
      %2709 = vperm.xlu0 %2708, %v2479
      %v2710 = vpop.permute.xlu0 %2709
      %2713 = vset.pattern.permute.xlu0 0
      %2714 = vperm.xlu0 %2713, %v2480
      %v2715 = vpop.permute.xlu0 %2714
      %2718 = vset.pattern.permute.xlu0 0
      %2719 = vperm.xlu0 %2718, %v2481
      %v2720 = vpop.permute.xlu0 %2719
      %2723 = vset.pattern.permute.xlu0 0
      %2724 = vperm.xlu0 %2723, %v2482
      %v2725 = vpop.permute.xlu0 %2724
      %2728 = vset.pattern.permute.xlu0 0
      %2729 = vperm.xlu0 %2728, %v2483
      %v2730 = vpop.permute.xlu0 %2729
      %2733 = vset.pattern.permute.xlu0 0
      %2734 = vperm.xlu0 %2733, %v2484
      %v2735 = vpop.permute.xlu0 %2734
      %2738 = vset.pattern.permute.xlu0 0
      %2739 = vperm.xlu0 %2738, %v2485
      %v2740 = vpop.permute.xlu0 %2739
      %2743 = vset.pattern.permute.xlu0 0
      %2744 = vperm.xlu0 %2743, %v2486
      %v2745 = vpop.permute.xlu0 %2744
      %2748 = vset.pattern.permute.xlu0 0
      %2749 = vperm.xlu0 %2748, %v2487
      %v2750 = vpop.permute.xlu0 %2749
      %2753 = vset.pattern.permute.xlu0 0
      %2754 = vperm.xlu0 %2753, %v2488
      %v2755 = vpop.permute.xlu0 %2754
      %2758 = vset.pattern.permute.xlu0 0
      %2759 = vperm.xlu0 %2758, %v2489
      %v2760 = vpop.permute.xlu0 %2759
      %2763 = vset.pattern.permute.xlu0 0
      %2764 = vperm.xlu0 %2763, %v2490
      %v2765 = vpop.permute.xlu0 %2764
      %2768 = vset.pattern.permute.xlu0 0
      %2769 = vperm.xlu0 %2768, %v2491
      %v2770 = vpop.permute.xlu0 %2769
      %2773 = vset.pattern.permute.xlu0 0
      %2774 = vperm.xlu0 %2773, %v2492
      %v2775 = vpop.permute.xlu0 %2774
      %2778 = vset.pattern.permute.xlu0 0
      %2779 = vperm.xlu0 %2778, %v2493
      %v2780 = vpop.permute.xlu0 %2779
      %2783 = vset.pattern.permute.xlu0 0
      %2784 = vperm.xlu0 %2783, %v2494
      %v2785 = vpop.permute.xlu0 %2784
      %2788 = vset.pattern.permute.xlu0 0
      %2789 = vperm.xlu0 %2788, %v2495
      %v2790 = vpop.permute.xlu0 %2789
      %2793 = vset.pattern.permute.xlu0 0
      %2794 = vperm.xlu0 %2793, %v2496
      %v2795 = vpop.permute.xlu0 %2794
      %2798 = vset.pattern.permute.xlu0 0
      %2799 = vperm.xlu0 %2798, %v2497
      %v2800 = vpop.permute.xlu0 %2799
      %2803 = vset.pattern.permute.xlu0 0
      %2804 = vperm.xlu0 %2803, %v2498
      %v2805 = vpop.permute.xlu0 %2804
      %2808 = vset.pattern.permute.xlu0 0
      %2809 = vperm.xlu0 %2808, %v2499
      %v2810 = vpop.permute.xlu0 %2809
      %2813 = vset.pattern.permute.xlu0 0
      %2814 = vperm.xlu0 %2813, %v2500
      %v2815 = vpop.permute.xlu0 %2814
      %2818 = vset.pattern.permute.xlu0 0
      %2819 = vperm.xlu0 %2818, %v2501
      %v2820 = vpop.permute.xlu0 %2819
      %v2822 = vsub.f32 %v2342, %v2665
      %v2823 = vsub.f32 %v2343, %v2670
      %v2824 = vsub.f32 %v2344, %v2675
      %v2825 = vsub.f32 %v2345, %v2680
      %v2826 = vsub.f32 %v2346, %v2685
      %v2827 = vsub.f32 %v2347, %v2690
      %v2828 = vsub.f32 %v2348, %v2695
      %v2829 = vsub.f32 %v2349, %v2700
      %v2830 = vsub.f32 %v2350, %v2705
      %v2831 = vsub.f32 %v2351, %v2710
      %v2832 = vsub.f32 %v2352, %v2715
      %v2833 = vsub.f32 %v2353, %v2720
      %v2834 = vsub.f32 %v2354, %v2725
      %v2835 = vsub.f32 %v2355, %v2730
      %v2836 = vsub.f32 %v2356, %v2735
      %v2837 = vsub.f32 %v2357, %v2740
      %v2838 = vsub.f32 %v2358, %v2745
      %v2839 = vsub.f32 %v2359, %v2750
      %v2840 = vsub.f32 %v2360, %v2755
      %v2841 = vsub.f32 %v2361, %v2760
      %v2842 = vsub.f32 %v2362, %v2765
      %v2843 = vsub.f32 %v2363, %v2770
      %v2844 = vsub.f32 %v2364, %v2775
      %v2845 = vsub.f32 %v2365, %v2780
      %v2846 = vsub.f32 %v2366, %v2785
      %v2847 = vsub.f32 %v2367, %v2790
      %v2848 = vsub.f32 %v2368, %v2795
      %v2849 = vsub.f32 %v2369, %v2800
      %v2850 = vsub.f32 %v2370, %v2805
      %v2851 = vsub.f32 %v2371, %v2810
      %v2852 = vsub.f32 %v2372, %v2815
      %v2853 = vsub.f32 %v2373, %v2820
      %v2854 = vmul.f32 %v2822, 1.442695
      %v2855 = vpow.pop %v2854
      %v2856 = vmul.f32 %v2823, 1.442695
      %v2857 = vpow.pop %v2856
      %v2858 = vmul.f32 %v2824, 1.442695
      %v2859 = vpow.pop %v2858
      %v2860 = vmul.f32 %v2825, 1.442695
      %v2861 = vpow.pop %v2860
      %v2862 = vmul.f32 %v2826, 1.442695
      %v2863 = vpow.pop %v2862
      %v2864 = vmul.f32 %v2827, 1.442695
      %v2865 = vpow.pop %v2864
      %v2866 = vmul.f32 %v2828, 1.442695
      %v2867 = vpow.pop %v2866
      %v2868 = vmul.f32 %v2829, 1.442695
      %v2869 = vpow.pop %v2868
      %v2870 = vmul.f32 %v2830, 1.442695
      %v2871 = vpow.pop %v2870
      %v2872 = vmul.f32 %v2831, 1.442695
      %v2873 = vpow.pop %v2872
      %v2874 = vmul.f32 %v2832, 1.442695
      %v2875 = vpow.pop %v2874
      %v2876 = vmul.f32 %v2833, 1.442695
      %v2877 = vpow.pop %v2876
      %v2878 = vmul.f32 %v2834, 1.442695
      %v2879 = vpow.pop %v2878
      %v2880 = vmul.f32 %v2835, 1.442695
      %v2881 = vpow.pop %v2880
      %v2882 = vmul.f32 %v2836, 1.442695
      %v2883 = vpow.pop %v2882
      %v2884 = vmul.f32 %v2837, 1.442695
      %v2885 = vpow.pop %v2884
      %v2886 = vmul.f32 %v2838, 1.442695
      %v2887 = vpow.pop %v2886
      %v2888 = vmul.f32 %v2839, 1.442695
      %v2889 = vpow.pop %v2888
      %v2890 = vmul.f32 %v2840, 1.442695
      %v2891 = vpow.pop %v2890
      %v2892 = vmul.f32 %v2841, 1.442695
      %v2893 = vpow.pop %v2892
      %v2894 = vmul.f32 %v2842, 1.442695
      %v2895 = vpow.pop %v2894
      %v2896 = vmul.f32 %v2843, 1.442695
      %v2897 = vpow.pop %v2896
      %v2898 = vmul.f32 %v2844, 1.442695
      %v2899 = vpow.pop %v2898
      %v2900 = vmul.f32 %v2845, 1.442695
      %v2901 = vpow.pop %v2900
      %v2902 = vmul.f32 %v2846, 1.442695
      %v2903 = vpow.pop %v2902
      %v2904 = vmul.f32 %v2847, 1.442695
      %v2905 = vpow.pop %v2904
      %v2906 = vmul.f32 %v2848, 1.442695
      %v2907 = vpow.pop %v2906
      %v2908 = vmul.f32 %v2849, 1.442695
      %v2909 = vpow.pop %v2908
      %v2910 = vmul.f32 %v2850, 1.442695
      %v2911 = vpow.pop %v2910
      %v2912 = vmul.f32 %v2851, 1.442695
      %v2913 = vpow.pop %v2912
      %v2914 = vmul.f32 %v2852, 1.442695
      %v2915 = vpow.pop %v2914
      %v2916 = vmul.f32 %v2853, 1.442695
      %v2917 = vpow.pop %v2916
      %2918 = vadd.xlane.f32.xlu0 %v2855
      %v2919 = vpop.xlane.xlu0 %2918
      %2920 = vadd.xlane.f32.xlu0 %v2857
      %v2921 = vpop.xlane.xlu0 %2920
      %2922 = vadd.xlane.f32.xlu0 %v2859
      %v2923 = vpop.xlane.xlu0 %2922
      %2924 = vadd.xlane.f32.xlu0 %v2861
      %v2925 = vpop.xlane.xlu0 %2924
      %2926 = vadd.xlane.f32.xlu0 %v2863
      %v2927 = vpop.xlane.xlu0 %2926
      %2928 = vadd.xlane.f32.xlu0 %v2865
      %v2929 = vpop.xlane.xlu0 %2928
      %2930 = vadd.xlane.f32.xlu0 %v2867
      %v2931 = vpop.xlane.xlu0 %2930
      %2932 = vadd.xlane.f32.xlu0 %v2869
      %v2933 = vpop.xlane.xlu0 %2932
      %2934 = vadd.xlane.f32.xlu0 %v2871
      %v2935 = vpop.xlane.xlu0 %2934
      %2936 = vadd.xlane.f32.xlu0 %v2873
      %v2937 = vpop.xlane.xlu0 %2936
      %2938 = vadd.xlane.f32.xlu0 %v2875
      %v2939 = vpop.xlane.xlu0 %2938
      %2940 = vadd.xlane.f32.xlu0 %v2877
      %v2941 = vpop.xlane.xlu0 %2940
      %2942 = vadd.xlane.f32.xlu0 %v2879
      %v2943 = vpop.xlane.xlu0 %2942
      %2944 = vadd.xlane.f32.xlu0 %v2881
      %v2945 = vpop.xlane.xlu0 %2944
      %2946 = vadd.xlane.f32.xlu0 %v2883
      %v2947 = vpop.xlane.xlu0 %2946
      %2948 = vadd.xlane.f32.xlu0 %v2885
      %v2949 = vpop.xlane.xlu0 %2948
      %2950 = vadd.xlane.f32.xlu0 %v2887
      %v2951 = vpop.xlane.xlu0 %2950
      %2952 = vadd.xlane.f32.xlu0 %v2889
      %v2953 = vpop.xlane.xlu0 %2952
      %2954 = vadd.xlane.f32.xlu0 %v2891
      %v2955 = vpop.xlane.xlu0 %2954
      %2956 = vadd.xlane.f32.xlu0 %v2893
      %v2957 = vpop.xlane.xlu0 %2956
      %2958 = vadd.xlane.f32.xlu0 %v2895
      %v2959 = vpop.xlane.xlu0 %2958
      %2960 = vadd.xlane.f32.xlu0 %v2897
      %v2961 = vpop.xlane.xlu0 %2960
      %2962 = vadd.xlane.f32.xlu0 %v2899
      %v2963 = vpop.xlane.xlu0 %2962
      %2964 = vadd.xlane.f32.xlu0 %v2901
      %v2965 = vpop.xlane.xlu0 %2964
      %2966 = vadd.xlane.f32.xlu0 %v2903
      %v2967 = vpop.xlane.xlu0 %2966
      %2968 = vadd.xlane.f32.xlu0 %v2905
      %v2969 = vpop.xlane.xlu0 %2968
      %2970 = vadd.xlane.f32.xlu0 %v2907
      %v2971 = vpop.xlane.xlu0 %2970
      %2972 = vadd.xlane.f32.xlu0 %v2909
      %v2973 = vpop.xlane.xlu0 %2972
      %2974 = vadd.xlane.f32.xlu0 %v2911
      %v2975 = vpop.xlane.xlu0 %2974
      %2976 = vadd.xlane.f32.xlu0 %v2913
      %v2977 = vpop.xlane.xlu0 %2976
      %2978 = vadd.xlane.f32.xlu0 %v2915
      %v2979 = vpop.xlane.xlu0 %2978
      %2980 = vadd.xlane.f32.xlu0 %v2917
      %v2981 = vpop.xlane.xlu0 %2980
      %v2982 = vadd.f32 %v2630, %v2919
      %v2983 = vadd.f32 %v2631, %v2921
      %v2984 = vadd.f32 %v2632, %v2923
      %v2985 = vadd.f32 %v2633, %v2925
      %v2986 = vadd.f32 %v2634, %v2927
      %v2987 = vadd.f32 %v2635, %v2929
      %v2988 = vadd.f32 %v2636, %v2931
      %v2989 = vadd.f32 %v2637, %v2933
      %v2990 = vadd.f32 %v2638, %v2935
      %v2991 = vadd.f32 %v2639, %v2937
      %v2992 = vadd.f32 %v2640, %v2939
      %v2993 = vadd.f32 %v2641, %v2941
      %v2994 = vadd.f32 %v2642, %v2943
      %v2995 = vadd.f32 %v2643, %v2945
      %v2996 = vadd.f32 %v2644, %v2947
      %v2997 = vadd.f32 %v2645, %v2949
      %v2998 = vadd.f32 %v2646, %v2951
      %v2999 = vadd.f32 %v2647, %v2953
      %v3000 = vadd.f32 %v2648, %v2955
      %v3001 = vadd.f32 %v2649, %v2957
      %v3002 = vadd.f32 %v2650, %v2959
      %v3003 = vadd.f32 %v2651, %v2961
      %v3004 = vadd.f32 %v2652, %v2963
      %v3005 = vadd.f32 %v2653, %v2965
      %v3006 = vadd.f32 %v2654, %v2967
      %v3007 = vadd.f32 %v2655, %v2969
      %v3008 = vadd.f32 %v2656, %v2971
      %v3009 = vadd.f32 %v2657, %v2973
      %v3010 = vadd.f32 %v2658, %v2975
      %v3011 = vadd.f32 %v2659, %v2977
      %v3012 = vadd.f32 %v2660, %v2979
      %v3013 = vadd.f32 %v2661, %v2981
      %3014 = vst.msk [vmem:[#allocation3] sm:$0xff] %vm2306, %v2982
      %3015 = vst.msk [vmem:[#allocation3 + $0x8] sm:$0xff] %vm2306, %v2983
      %3016 = vst.msk [vmem:[#allocation3 + $0x10] sm:$0xff] %vm2306, %v2984
      %3017 = vst.msk [vmem:[#allocation3 + $0x18] sm:$0xff] %vm2306, %v2985
      %3018 = vst.msk [vmem:[#allocation3 + $0x20] sm:$0xff] %vm2306, %v2986
      %3019 = vst.msk [vmem:[#allocation3 + $0x28] sm:$0xff] %vm2306, %v2987
      %3020 = vst.msk [vmem:[#allocation3 + $0x30] sm:$0xff] %vm2306, %v2988
      %3021 = vst.msk [vmem:[#allocation3 + $0x38] sm:$0xff] %vm2306, %v2989
      %3022 = vst.msk [vmem:[#allocation3 + $0x40] sm:$0xff] %vm2306, %v2990
      %3023 = vst.msk [vmem:[#allocation3 + $0x48] sm:$0xff] %vm2306, %v2991
      %3024 = vst.msk [vmem:[#allocation3 + $0x50] sm:$0xff] %vm2306, %v2992
      %3025 = vst.msk [vmem:[#allocation3 + $0x58] sm:$0xff] %vm2306, %v2993
      %3026 = vst.msk [vmem:[#allocation3 + $0x60] sm:$0xff] %vm2306, %v2994
      %3027 = vst.msk [vmem:[#allocation3 + $0x68] sm:$0xff] %vm2306, %v2995
      %3028 = vst.msk [vmem:[#allocation3 + $0x70] sm:$0xff] %vm2306, %v2996
      %3029 = vst.msk [vmem:[#allocation3 + $0x78] sm:$0xff] %vm2306, %v2997
      %3030 = vst.msk [vmem:[#allocation3 + $0x80] sm:$0xff] %vm2306, %v2998
      %3031 = vst.msk [vmem:[#allocation3 + $0x88] sm:$0xff] %vm2306, %v2999
      %3032 = vst.msk [vmem:[#allocation3 + $0x90] sm:$0xff] %vm2306, %v3000
      %3033 = vst.msk [vmem:[#allocation3 + $0x98] sm:$0xff] %vm2306, %v3001
      %3034 = vst.msk [vmem:[#allocation3 + $0xa0] sm:$0xff] %vm2306, %v3002
      %3035 = vst.msk [vmem:[#allocation3 + $0xa8] sm:$0xff] %vm2306, %v3003
      %3036 = vst.msk [vmem:[#allocation3 + $0xb0] sm:$0xff] %vm2306, %v3004
      %3037 = vst.msk [vmem:[#allocation3 + $0xb8] sm:$0xff] %vm2306, %v3005
      %3038 = vst.msk [vmem:[#allocation3 + $0xc0] sm:$0xff] %vm2306, %v3006
      %3039 = vst.msk [vmem:[#allocation3 + $0xc8] sm:$0xff] %vm2306, %v3007
      %3040 = vst.msk [vmem:[#allocation3 + $0xd0] sm:$0xff] %vm2306, %v3008
      %3041 = vst.msk [vmem:[#allocation3 + $0xd8] sm:$0xff] %vm2306, %v3009
      %3042 = vst.msk [vmem:[#allocation3 + $0xe0] sm:$0xff] %vm2306, %v3010
      %3043 = vst.msk [vmem:[#allocation3 + $0xe8] sm:$0xff] %vm2306, %v3011
      %3044 = vst.msk [vmem:[#allocation3 + $0xf0] sm:$0xff] %vm2306, %v3012
      %3045 = vst.msk [vmem:[#allocation3 + $0xf8] sm:$0xff] %vm2306, %v3013
      %3046 = vst.msk [vmem:[#allocation2] sm:$0xff] %vm2306, %v2470
      %3047 = vst.msk [vmem:[#allocation2 + $0x8] sm:$0xff] %vm2306, %v2471
      %3048 = vst.msk [vmem:[#allocation2 + $0x10] sm:$0xff] %vm2306, %v2472
      %3049 = vst.msk [vmem:[#allocation2 + $0x18] sm:$0xff] %vm2306, %v2473
      %3050 = vst.msk [vmem:[#allocation2 + $0x20] sm:$0xff] %vm2306, %v2474
      %3051 = vst.msk [vmem:[#allocation2 + $0x28] sm:$0xff] %vm2306, %v2475
      %3052 = vst.msk [vmem:[#allocation2 + $0x30] sm:$0xff] %vm2306, %v2476
      %3053 = vst.msk [vmem:[#allocation2 + $0x38] sm:$0xff] %vm2306, %v2477
      %3054 = vst.msk [vmem:[#allocation2 + $0x40] sm:$0xff] %vm2306, %v2478
      %3055 = vst.msk [vmem:[#allocation2 + $0x48] sm:$0xff] %vm2306, %v2479
      %3056 = vst.msk [vmem:[#allocation2 + $0x50] sm:$0xff] %vm2306, %v2480
      %3057 = vst.msk [vmem:[#allocation2 + $0x58] sm:$0xff] %vm2306, %v2481
      %3058 = vst.msk [vmem:[#allocation2 + $0x60] sm:$0xff] %vm2306, %v2482
      %3059 = vst.msk [vmem:[#allocation2 + $0x68] sm:$0xff] %vm2306, %v2483
      %3060 = vst.msk [vmem:[#allocation2 + $0x70] sm:$0xff] %vm2306, %v2484
      %3061 = vst.msk [vmem:[#allocation2 + $0x78] sm:$0xff] %vm2306, %v2485
      %3062 = vst.msk [vmem:[#allocation2 + $0x80] sm:$0xff] %vm2306, %v2486
      %3063 = vst.msk [vmem:[#allocation2 + $0x88] sm:$0xff] %vm2306, %v2487
      %3064 = vst.msk [vmem:[#allocation2 + $0x90] sm:$0xff] %vm2306, %v2488
      %3065 = vst.msk [vmem:[#allocation2 + $0x98] sm:$0xff] %vm2306, %v2489
      %3066 = vst.msk [vmem:[#allocation2 + $0xa0] sm:$0xff] %vm2306, %v2490
      %3067 = vst.msk [vmem:[#allocation2 + $0xa8] sm:$0xff] %vm2306, %v2491
      %3068 = vst.msk [vmem:[#allocation2 + $0xb0] sm:$0xff] %vm2306, %v2492
      %3069 = vst.msk [vmem:[#allocation2 + $0xb8] sm:$0xff] %vm2306, %v2493
      %3070 = vst.msk [vmem:[#allocation2 + $0xc0] sm:$0xff] %vm2306, %v2494
      %3071 = vst.msk [vmem:[#allocation2 + $0xc8] sm:$0xff] %vm2306, %v2495
      %3072 = vst.msk [vmem:[#allocation2 + $0xd0] sm:$0xff] %vm2306, %v2496
      %3073 = vst.msk [vmem:[#allocation2 + $0xd8] sm:$0xff] %vm2306, %v2497
      %3074 = vst.msk [vmem:[#allocation2 + $0xe0] sm:$0xff] %vm2306, %v2498
      %3075 = vst.msk [vmem:[#allocation2 + $0xe8] sm:$0xff] %vm2306, %v2499
      %3076 = vst.msk [vmem:[#allocation2 + $0xf0] sm:$0xff] %vm2306, %v2500
      %3077 = vst.msk [vmem:[#allocation2 + $0xf8] sm:$0xff] %vm2306, %v2501
      // Predicated region
      $region37: #{tpu_custom_call.1} parent=31 // pred_check
        %p3078 = pneg %p231
      $region38: #{tpu_custom_call.1} parent=31 // pred_check_branch
        %3080 = sbr.rel (%p3078) target = $region40
      $region39: #{tpu_custom_call.1} parent=31 // pred_region
        %v3081 = vld [vmem:[#allocation2] sm:$0xff]
        %v3082 = vld [vmem:[#allocation2 + $0x8] sm:$0xff]
        %v3083 = vld [vmem:[#allocation2 + $0x10] sm:$0xff]
        %v3084 = vld [vmem:[#allocation2 + $0x18] sm:$0xff]
        %v3085 = vld [vmem:[#allocation2 + $0x20] sm:$0xff]
        %v3086 = vld [vmem:[#allocation2 + $0x28] sm:$0xff]
        %v3087 = vld [vmem:[#allocation2 + $0x30] sm:$0xff]
        %v3088 = vld [vmem:[#allocation2 + $0x38] sm:$0xff]
        %v3089 = vld [vmem:[#allocation2 + $0x40] sm:$0xff]
        %v3090 = vld [vmem:[#allocation2 + $0x48] sm:$0xff]
        %v3091 = vld [vmem:[#allocation2 + $0x50] sm:$0xff]
        %v3092 = vld [vmem:[#allocation2 + $0x58] sm:$0xff]
        %v3093 = vld [vmem:[#allocation2 + $0x60] sm:$0xff]
        %v3094 = vld [vmem:[#allocation2 + $0x68] sm:$0xff]
        %v3095 = vld [vmem:[#allocation2 + $0x70] sm:$0xff]
        %v3096 = vld [vmem:[#allocation2 + $0x78] sm:$0xff]
        %v3097 = vld [vmem:[#allocation2 + $0x80] sm:$0xff]
        %v3098 = vld [vmem:[#allocation2 + $0x88] sm:$0xff]
        %v3099 = vld [vmem:[#allocation2 + $0x90] sm:$0xff]
        %v3100 = vld [vmem:[#allocation2 + $0x98] sm:$0xff]
        %v3101 = vld [vmem:[#allocation2 + $0xa0] sm:$0xff]
        %v3102 = vld [vmem:[#allocation2 + $0xa8] sm:$0xff]
        %v3103 = vld [vmem:[#allocation2 + $0xb0] sm:$0xff]
        %v3104 = vld [vmem:[#allocation2 + $0xb8] sm:$0xff]
        %v3105 = vld [vmem:[#allocation2 + $0xc0] sm:$0xff]
        %v3106 = vld [vmem:[#allocation2 + $0xc8] sm:$0xff]
        %v3107 = vld [vmem:[#allocation2 + $0xd0] sm:$0xff]
        %v3108 = vld [vmem:[#allocation2 + $0xd8] sm:$0xff]
        %v3109 = vld [vmem:[#allocation2 + $0xe0] sm:$0xff]
        %v3110 = vld [vmem:[#allocation2 + $0xe8] sm:$0xff]
        %v3111 = vld [vmem:[#allocation2 + $0xf0] sm:$0xff]
        %v3112 = vld [vmem:[#allocation2 + $0xf8] sm:$0xff]
        %v3113 = vld [vmem:[#allocation3] sm:$0xff]
        %v3114 = vld [vmem:[#allocation3 + $0x8] sm:$0xff]
        %v3115 = vld [vmem:[#allocation3 + $0x10] sm:$0xff]
        %v3116 = vld [vmem:[#allocation3 + $0x18] sm:$0xff]
        %v3117 = vld [vmem:[#allocation3 + $0x20] sm:$0xff]
        %v3118 = vld [vmem:[#allocation3 + $0x28] sm:$0xff]
        %v3119 = vld [vmem:[#allocation3 + $0x30] sm:$0xff]
        %v3120 = vld [vmem:[#allocation3 + $0x38] sm:$0xff]
        %v3121 = vld [vmem:[#allocation3 + $0x40] sm:$0xff]
        %v3122 = vld [vmem:[#allocation3 + $0x48] sm:$0xff]
        %v3123 = vld [vmem:[#allocation3 + $0x50] sm:$0xff]
        %v3124 = vld [vmem:[#allocation3 + $0x58] sm:$0xff]
        %v3125 = vld [vmem:[#allocation3 + $0x60] sm:$0xff]
        %v3126 = vld [vmem:[#allocation3 + $0x68] sm:$0xff]
        %v3127 = vld [vmem:[#allocation3 + $0x70] sm:$0xff]
        %v3128 = vld [vmem:[#allocation3 + $0x78] sm:$0xff]
        %v3129 = vld [vmem:[#allocation3 + $0x80] sm:$0xff]
        %v3130 = vld [vmem:[#allocation3 + $0x88] sm:$0xff]
        %v3131 = vld [vmem:[#allocation3 + $0x90] sm:$0xff]
        %v3132 = vld [vmem:[#allocation3 + $0x98] sm:$0xff]
        %v3133 = vld [vmem:[#allocation3 + $0xa0] sm:$0xff]
        %v3134 = vld [vmem:[#allocation3 + $0xa8] sm:$0xff]
        %v3135 = vld [vmem:[#allocation3 + $0xb0] sm:$0xff]
        %v3136 = vld [vmem:[#allocation3 + $0xb8] sm:$0xff]
        %v3137 = vld [vmem:[#allocation3 + $0xc0] sm:$0xff]
        %v3138 = vld [vmem:[#allocation3 + $0xc8] sm:$0xff]
        %v3139 = vld [vmem:[#allocation3 + $0xd0] sm:$0xff]
        %v3140 = vld [vmem:[#allocation3 + $0xd8] sm:$0xff]
        %v3141 = vld [vmem:[#allocation3 + $0xe0] sm:$0xff]
        %v3142 = vld [vmem:[#allocation3 + $0xe8] sm:$0xff]
        %v3143 = vld [vmem:[#allocation3 + $0xf0] sm:$0xff]
        %v3144 = vld [vmem:[#allocation3 + $0xf8] sm:$0xff]
        %v3145 = vlog2.pop %v3113
        %v3146 = vmul.f32 %v3145, 0.6931472
        %v3147 = vlog2.pop %v3114
        %v3148 = vmul.f32 %v3147, 0.6931472
        %v3149 = vlog2.pop %v3115
        %v3150 = vmul.f32 %v3149, 0.6931472
        %v3151 = vlog2.pop %v3116
        %v3152 = vmul.f32 %v3151, 0.6931472
        %v3153 = vlog2.pop %v3117
        %v3154 = vmul.f32 %v3153, 0.6931472
        %v3155 = vlog2.pop %v3118
        %v3156 = vmul.f32 %v3155, 0.6931472
        %v3157 = vlog2.pop %v3119
        %v3158 = vmul.f32 %v3157, 0.6931472
        %v3159 = vlog2.pop %v3120
        %v3160 = vmul.f32 %v3159, 0.6931472
        %v3161 = vlog2.pop %v3121
        %v3162 = vmul.f32 %v3161, 0.6931472
        %v3163 = vlog2.pop %v3122
        %v3164 = vmul.f32 %v3163, 0.6931472
        %v3165 = vlog2.pop %v3123
        %v3166 = vmul.f32 %v3165, 0.6931472
        %v3167 = vlog2.pop %v3124
        %v3168 = vmul.f32 %v3167, 0.6931472
        %v3169 = vlog2.pop %v3125
        %v3170 = vmul.f32 %v3169, 0.6931472
        %v3171 = vlog2.pop %v3126
        %v3172 = vmul.f32 %v3171, 0.6931472
        %v3173 = vlog2.pop %v3127
        %v3174 = vmul.f32 %v3173, 0.6931472
        %v3175 = vlog2.pop %v3128
        %v3176 = vmul.f32 %v3175, 0.6931472
        %v3177 = vlog2.pop %v3129
        %v3178 = vmul.f32 %v3177, 0.6931472
        %v3179 = vlog2.pop %v3130
        %v3180 = vmul.f32 %v3179, 0.6931472
        %v3181 = vlog2.pop %v3131
        %v3182 = vmul.f32 %v3181, 0.6931472
        %v3183 = vlog2.pop %v3132
        %v3184 = vmul.f32 %v3183, 0.6931472
        %v3185 = vlog2.pop %v3133
        %v3186 = vmul.f32 %v3185, 0.6931472
        %v3187 = vlog2.pop %v3134
        %v3188 = vmul.f32 %v3187, 0.6931472
        %v3189 = vlog2.pop %v3135
        %v3190 = vmul.f32 %v3189, 0.6931472
        %v3191 = vlog2.pop %v3136
        %v3192 = vmul.f32 %v3191, 0.6931472
        %v3193 = vlog2.pop %v3137
        %v3194 = vmul.f32 %v3193, 0.6931472
        %v3195 = vlog2.pop %v3138
        %v3196 = vmul.f32 %v3195, 0.6931472
        %v3197 = vlog2.pop %v3139
        %v3198 = vmul.f32 %v3197, 0.6931472
        %v3199 = vlog2.pop %v3140
        %v3200 = vmul.f32 %v3199, 0.6931472
        %v3201 = vlog2.pop %v3141
        %v3202 = vmul.f32 %v3201, 0.6931472
        %v3203 = vlog2.pop %v3142
        %v3204 = vmul.f32 %v3203, 0.6931472
        %v3205 = vlog2.pop %v3143
        %v3206 = vmul.f32 %v3205, 0.6931472
        %v3207 = vlog2.pop %v3144
        %v3208 = vmul.f32 %v3207, 0.6931472
        %v3209 = vadd.f32 %v3081, %v3146
        %v3210 = vadd.f32 %v3082, %v3148
        %v3211 = vadd.f32 %v3083, %v3150
        %v3212 = vadd.f32 %v3084, %v3152
        %v3213 = vadd.f32 %v3085, %v3154
        %v3214 = vadd.f32 %v3086, %v3156
        %v3215 = vadd.f32 %v3087, %v3158
        %v3216 = vadd.f32 %v3088, %v3160
        %v3217 = vadd.f32 %v3089, %v3162
        %v3218 = vadd.f32 %v3090, %v3164
        %v3219 = vadd.f32 %v3091, %v3166
        %v3220 = vadd.f32 %v3092, %v3168
        %v3221 = vadd.f32 %v3093, %v3170
        %v3222 = vadd.f32 %v3094, %v3172
        %v3223 = vadd.f32 %v3095, %v3174
        %v3224 = vadd.f32 %v3096, %v3176
        %v3225 = vadd.f32 %v3097, %v3178
        %v3226 = vadd.f32 %v3098, %v3180
        %v3227 = vadd.f32 %v3099, %v3182
        %v3228 = vadd.f32 %v3100, %v3184
        %v3229 = vadd.f32 %v3101, %v3186
        %v3230 = vadd.f32 %v3102, %v3188
        %v3231 = vadd.f32 %v3103, %v3190
        %v3232 = vadd.f32 %v3104, %v3192
        %v3233 = vadd.f32 %v3105, %v3194
        %v3234 = vadd.f32 %v3106, %v3196
        %v3235 = vadd.f32 %v3107, %v3198
        %v3236 = vadd.f32 %v3108, %v3200
        %v3237 = vadd.f32 %v3109, %v3202
        %v3238 = vadd.f32 %v3110, %v3204
        %v3239 = vadd.f32 %v3111, %v3206
        %v3240 = vadd.f32 %v3112, %v3208
        %v3241 = vld [vmem:[#allocation4] sm:$0xff]
        %v3242 = vld [vmem:[#allocation4 + $0x8] sm:$0xff]
        %v3243 = vld [vmem:[#allocation4 + $0x10] sm:$0xff]
        %v3244 = vld [vmem:[#allocation4 + $0x18] sm:$0xff]
        %v3245 = vld [vmem:[#allocation4 + $0x20] sm:$0xff]
        %v3246 = vld [vmem:[#allocation4 + $0x28] sm:$0xff]
        %v3247 = vld [vmem:[#allocation4 + $0x30] sm:$0xff]
        %v3248 = vld [vmem:[#allocation4 + $0x38] sm:$0xff]
        %v3249 = vld [vmem:[#allocation4 + $0x40] sm:$0xff]
        %v3250 = vld [vmem:[#allocation4 + $0x48] sm:$0xff]
        %v3251 = vld [vmem:[#allocation4 + $0x50] sm:$0xff]
        %v3252 = vld [vmem:[#allocation4 + $0x58] sm:$0xff]
        %v3253 = vld [vmem:[#allocation4 + $0x60] sm:$0xff]
        %v3254 = vld [vmem:[#allocation4 + $0x68] sm:$0xff]
        %v3255 = vld [vmem:[#allocation4 + $0x70] sm:$0xff]
        %v3256 = vld [vmem:[#allocation4 + $0x78] sm:$0xff]
        %v3257 = vld [vmem:[#allocation4 + $0x80] sm:$0xff]
        %v3258 = vld [vmem:[#allocation4 + $0x88] sm:$0xff]
        %v3259 = vld [vmem:[#allocation4 + $0x90] sm:$0xff]
        %v3260 = vld [vmem:[#allocation4 + $0x98] sm:$0xff]
        %v3261 = vld [vmem:[#allocation4 + $0xa0] sm:$0xff]
        %v3262 = vld [vmem:[#allocation4 + $0xa8] sm:$0xff]
        %v3263 = vld [vmem:[#allocation4 + $0xb0] sm:$0xff]
        %v3264 = vld [vmem:[#allocation4 + $0xb8] sm:$0xff]
        %v3265 = vld [vmem:[#allocation4 + $0xc0] sm:$0xff]
        %v3266 = vld [vmem:[#allocation4 + $0xc8] sm:$0xff]
        %v3267 = vld [vmem:[#allocation4 + $0xd0] sm:$0xff]
        %v3268 = vld [vmem:[#allocation4 + $0xd8] sm:$0xff]
        %v3269 = vld [vmem:[#allocation4 + $0xe0] sm:$0xff]
        %v3270 = vld [vmem:[#allocation4 + $0xe8] sm:$0xff]
        %v3271 = vld [vmem:[#allocation4 + $0xf0] sm:$0xff]
        %v3272 = vld [vmem:[#allocation4 + $0xf8] sm:$0xff]
        %v3273 = vsub.f32 %v3209, %v3241
        %v3274 = vsub.f32 %v3210, %v3242
        %v3275 = vsub.f32 %v3211, %v3243
        %v3276 = vsub.f32 %v3212, %v3244
        %v3277 = vsub.f32 %v3213, %v3245
        %v3278 = vsub.f32 %v3214, %v3246
        %v3279 = vsub.f32 %v3215, %v3247
        %v3280 = vsub.f32 %v3216, %v3248
        %v3281 = vsub.f32 %v3217, %v3249
        %v3282 = vsub.f32 %v3218, %v3250
        %v3283 = vsub.f32 %v3219, %v3251
        %v3284 = vsub.f32 %v3220, %v3252
        %v3285 = vsub.f32 %v3221, %v3253
        %v3286 = vsub.f32 %v3222, %v3254
        %v3287 = vsub.f32 %v3223, %v3255
        %v3288 = vsub.f32 %v3224, %v3256
        %v3289 = vsub.f32 %v3225, %v3257
        %v3290 = vsub.f32 %v3226, %v3258
        %v3291 = vsub.f32 %v3227, %v3259
        %v3292 = vsub.f32 %v3228, %v3260
        %v3293 = vsub.f32 %v3229, %v3261
        %v3294 = vsub.f32 %v3230, %v3262
        %v3295 = vsub.f32 %v3231, %v3263
        %v3296 = vsub.f32 %v3232, %v3264
        %v3297 = vsub.f32 %v3233, %v3265
        %v3298 = vsub.f32 %v3234, %v3266
        %v3299 = vsub.f32 %v3235, %v3267
        %v3300 = vsub.f32 %v3236, %v3268
        %v3301 = vsub.f32 %v3237, %v3269
        %v3302 = vsub.f32 %v3238, %v3270
        %v3303 = vsub.f32 %v3239, %v3271
        %v3304 = vsub.f32 %v3240, %v3272
        %3305 = vst.msk [vmem:[%s228] sm:$0xff] %vm2306, %v3273
        %3306 = vst.msk [vmem:[%s228 + $0x8] sm:$0xff] %vm2306, %v3274
        %3307 = vst.msk [vmem:[%s228 + $0x10] sm:$0xff] %vm2306, %v3275
        %3308 = vst.msk [vmem:[%s228 + $0x18] sm:$0xff] %vm2306, %v3276
        %3309 = vst.msk [vmem:[%s228 + $0x20] sm:$0xff] %vm2306, %v3277
        %3310 = vst.msk [vmem:[%s228 + $0x28] sm:$0xff] %vm2306, %v3278
        %3311 = vst.msk [vmem:[%s228 + $0x30] sm:$0xff] %vm2306, %v3279
        %3312 = vst.msk [vmem:[%s228 + $0x38] sm:$0xff] %vm2306, %v3280
        %3313 = vst.msk [vmem:[%s228 + $0x40] sm:$0xff] %vm2306, %v3281
        %3314 = vst.msk [vmem:[%s228 + $0x48] sm:$0xff] %vm2306, %v3282
        %3315 = vst.msk [vmem:[%s228 + $0x50] sm:$0xff] %vm2306, %v3283
        %3316 = vst.msk [vmem:[%s228 + $0x58] sm:$0xff] %vm2306, %v3284
        %3317 = vst.msk [vmem:[%s228 + $0x60] sm:$0xff] %vm2306, %v3285
        %3318 = vst.msk [vmem:[%s228 + $0x68] sm:$0xff] %vm2306, %v3286
        %3319 = vst.msk [vmem:[%s228 + $0x70] sm:$0xff] %vm2306, %v3287
        %3320 = vst.msk [vmem:[%s228 + $0x78] sm:$0xff] %vm2306, %v3288
        %3321 = vst.msk [vmem:[%s228 + $0x80] sm:$0xff] %vm2306, %v3289
        %3322 = vst.msk [vmem:[%s228 + $0x88] sm:$0xff] %vm2306, %v3290
        %3323 = vst.msk [vmem:[%s228 + $0x90] sm:$0xff] %vm2306, %v3291
        %3324 = vst.msk [vmem:[%s228 + $0x98] sm:$0xff] %vm2306, %v3292
        %3325 = vst.msk [vmem:[%s228 + $0xa0] sm:$0xff] %vm2306, %v3293
        %3326 = vst.msk [vmem:[%s228 + $0xa8] sm:$0xff] %vm2306, %v3294
        %3327 = vst.msk [vmem:[%s228 + $0xb0] sm:$0xff] %vm2306, %v3295
        %3328 = vst.msk [vmem:[%s228 + $0xb8] sm:$0xff] %vm2306, %v3296
        %3329 = vst.msk [vmem:[%s228 + $0xc0] sm:$0xff] %vm2306, %v3297
        %3330 = vst.msk [vmem:[%s228 + $0xc8] sm:$0xff] %vm2306, %v3298
        %3331 = vst.msk [vmem:[%s228 + $0xd0] sm:$0xff] %vm2306, %v3299
        %3332 = vst.msk [vmem:[%s228 + $0xd8] sm:$0xff] %vm2306, %v3300
        %3333 = vst.msk [vmem:[%s228 + $0xe0] sm:$0xff] %vm2306, %v3301
        %3334 = vst.msk [vmem:[%s228 + $0xe8] sm:$0xff] %vm2306, %v3302
        %3335 = vst.msk [vmem:[%s228 + $0xf0] sm:$0xff] %vm2306, %v3303
        %3336 = vst.msk [vmem:[%s228 + $0xf8] sm:$0xff] %vm2306, %v3304
      $region40: #{tpu_custom_call.1} parent=31 // pred_fallthru
        _
      %s3337 = smul.u32 32, %s18
      %p3338 = scmp.lt.s32.totalorder %s3337, 127
      %s3339 = scalar_select %p3338, %s3337, 127
      %s3340 = smul.addr %s3339, 8
      %s3341 = scalar_lea.vmem %s3, %s3340
      // Predicated region
      $region41: #{tpu_custom_call.1} parent=31 // pred_check
        %p3342 = pneg %p122
      $region42: #{tpu_custom_call.1} parent=31 // pred_check_branch
        %3344 = sbr.rel (%p3342) target = $region44
      $region43: #{tpu_custom_call.1} parent=31 // pred_region
        %s3345 = smul.u32 32, %s18
      $region44: #{tpu_custom_call.1} parent=31 // pred_fallthru
        _
    $region32: #{tpu_custom_call.1} parent=5 // pred_fallthru
      _
    %p3346 = scmp.le.s32.totalorder 2, %s9
    // Predicated region
    $region45: #{tpu_custom_call.1} parent=5 // pred_check
      %p3347 = pneg %p3346
    $region46: #{tpu_custom_call.1} parent=5 // pred_check_branch
      %3349 = sbr.rel (%p3347) target = $region48
    $region47: #{tpu_custom_call.1} parent=5 // pred_region
      %s3350 = ssub.s32 %s9, 2
      // Predicated region
      $region49: #{tpu_custom_call.1} parent=47 // pred_check
        %p3351 = pneg %p128
      $region50: #{tpu_custom_call.1} parent=47 // pred_check_branch
        %3353 = sbr.rel (%p3351) target = $region52
      $region51: #{tpu_custom_call.1} parent=47 // pred_region
        %s3354 = smul.u32 32, %s20
        %p3355 = scmp.lt.s32.totalorder %s3354, 127
        %s3356 = scalar_select %p3355, %s3354, 127
        %s3357 = smul.addr %s3356, 8
        %s3358 = scalar_lea.vmem %s3, %s3357
      $region52: #{tpu_custom_call.1} parent=47 // pred_fallthru
        _
    $region48: #{tpu_custom_call.1} parent=5 // pred_fallthru
      _
  $region6: #{tpu_custom_call.1} parent=0 // loop_footer
    %s13 = sadd.s32 1, %s9
  $region7: #{tpu_custom_call.1} parent=0 // loop_footer_branch
    %8 = sbr.rel target = $region3
  $region8: #{tpu_custom_call.1} parent=0 // loop_exit
    _

</llo_original>
